<compile_context>
chip_gen: v7x
topology: tpu7x:2x2x1
jax: 0.10.0
libtpu: 0.0.40
codegen_flags: <defaults>
</compile_context>

<pallas_src>
import math

import jax
import jax.numpy as jnp
import numpy as np
from jax.experimental import pallas as pl
from jax.experimental.pallas import tpu as pltpu


# ----------------------------------------------------------------------------
# Fused whole-forward kernel.  Per grid step (one batch element), channels-last.
# ----------------------------------------------------------------------------
def _attn_fused_kernel(f_ref, v_ref,
                       w_e_ref, b_e_ref,
                       w_db_ref, b_db_ref,          # fused AE_d + bit_wise_attn
                       w_ch_ref, b_ch_ref,
                       w_a1_ref, b_a1_ref, w_a2_ref, b_a2_ref,
                       w_a3_ref, b_a3_ref,
                       o_atn_ref, o_filt_ref, o_new_ref):
    f32, bf16 = jnp.float32, jnp.bfloat16

    def leaky(x):                         # LeakyReLU(0.2), f32 on the VPU
        return jnp.where(x > 0, x, 0.2 * x)

    def im2col3(x):                       # (T, C) f32 -> (T, 3C) bf16
        t, c = x.shape
        z = jnp.zeros((1, c), x.dtype)
        prev = jnp.concatenate([z, x[:t - 1, :]], axis=0)   # row t holds x[t-1]
        nxt = jnp.concatenate([x[1:, :], z], axis=0)        # row t holds x[t+1]
        # lane-axis concat (Cin multiples of 128) -> one MXU contraction dim
        return jnp.concatenate([prev, x, nxt], axis=-1).astype(bf16)

    def conv3(cols_bf16, w_ref, b_ref):   # one bf16 matmul per 3-tap conv
        y = jnp.dot(cols_bf16, w_ref[...], preferred_element_type=f32)
        return y + b_ref[...]

    f = f_ref[...]                        # (T, C)  ffeat, channels-last, f32
    v = v_ref[...]                        # (T, C)  vfeat, channels-last, f32
    C = o_new_ref.shape[1]                # static split point (multiple of 128)

    # ---- AE encoder; decoder + bit-wise attention share im2col AND matmul --
    fusion = leaky(conv3(im2col3(f), w_e_ref, b_e_ref))        # (T, C/2)
    db = leaky(conv3(im2col3(fusion), w_db_ref, b_db_ref))     # (T, C+E)
    new_feat = db[:, :C]                                       # (T, C)
    bwa = db[:, C:]                                            # (T, E)

    # ---- channel path: AdaptiveAvgPool1d(1) + centre-tap conv + leaky ------
    chfeat = jnp.mean(v, axis=0, keepdims=True)                # (1, C)
    ca = leaky(jnp.dot(chfeat.astype(bf16), w_ch_ref[...],
                       preferred_element_type=f32) + b_ch_ref[...])   # (1, E)

    # ---- L2-normalise over channels, cosine attention, filter --------------
    # Note: no epsilon, matching the PyTorch reference (all-zero row -> NaN).
    ca_n = ca * jax.lax.rsqrt(jnp.sum(ca * ca, axis=-1, keepdims=True))
    bwa_n = bwa * jax.lax.rsqrt(jnp.sum(bwa * bwa, axis=-1, keepdims=True))
    temp = jnp.sum(ca_n * bwa_n, axis=-1, keepdims=True)       # (T, 1)
    filt = jax.nn.sigmoid(bwa * temp) * v                      # (T, E)

    # ---- attention head: conv3 -> conv3 -> 1x1 conv + sigmoid --------------
    a1 = leaky(conv3(im2col3(filt), w_a1_ref, b_a1_ref))       # (T, H)
    a2 = leaky(conv3(im2col3(a1), w_a2_ref, b_a2_ref))         # (T, H)
    # lane-dense final output: contract H of (1,H) with H of (T,H) -> (1, T)
    scores = jax.lax.dot_general(
        w_a3_ref[...], a2,
        dimension_numbers=(((1,), (1,)), ((), ())),
        preferred_element_type=f32) + b_a3_ref[...]            # (1, T)

    o_atn_ref[...] = jax.nn.sigmoid(scores).astype(o_atn_ref.dtype)
    o_filt_ref[...] = filt.astype(o_filt_ref.dtype)
    o_new_ref[...] = new_feat.astype(o_new_ref.dtype)


# ----------------------------------------------------------------------------
# Parameters (deterministic init, PyTorch-like uniform(-1/sqrt(fan_in), ...)).
# Weight layout: (K, Cin, Cout)  == torch_weight.transpose(2, 1, 0)
# ----------------------------------------------------------------------------
def init_params(key, n_feature, embed_dim, attn_hidden):
    def conv_param(k, ksize, cin, cout):
        kw, kb = jax.random.split(k)
        bound = 1.0 / math.sqrt(cin * ksize)
        w = jax.random.uniform(kw, (ksize, cin, cout), jnp.float32, -bound, bound)
        b = jax.random.uniform(kb, (1, cout), jnp.float32, -bound, bound)
        return w, b

    keys = jax.random.split(key, 7)
    return {
        "ae_e":     conv_param(keys[0], 3, n_feature, embed_dim // 2),
        "ae_d":     conv_param(keys[1], 3, embed_dim // 2, n_feature),
        "bit_wise": conv_param(keys[2], 3, n_feature // 2, embed_dim),
        "channel":  conv_param(keys[3], 3, n_feature, embed_dim),
        "attn1":    conv_param(keys[4], 3, embed_dim, attn_hidden),
        "attn2":    conv_param(keys[5], 3, attn_hidden, attn_hidden),
        "attn3":    conv_param(keys[6], 1, attn_hidden, 1),
    }


# ----------------------------------------------------------------------------
# Forward (Pallas path).  vfeat, ffeat: (B, n_feature, T)  [NCT, like torch].
# ----------------------------------------------------------------------------
def attn_forward(params, vfeat, ffeat):
    B, C, T = vfeat.shape
    E = params["channel"][0].shape[2]
    H = params["attn1"][0].shape[2]
    C2 = C // 2
    bf16 = jnp.bfloat16

    # Channels-last activations for the kernel (cheap at these sizes; at
    # production scale this layout change would be absorbed into the kernel).
    v_tc = jnp.transpose(vfeat, (0, 2, 1))
    f_tc = jnp.transpose(ffeat, (0, 2, 1))

    # im2col-flattened, bf16 weights: (K, Cin, Cout) -> (K*Cin, Cout)
    flat = lambda w: w.reshape(-1, w.shape[-1]).astype(bf16)
    w_e, b_e = flat(params["ae_e"][0]), params["ae_e"][1]
    # AE_d and bit_wise_attn share their input -> fuse into one matmul by
    # concatenating weights/biases along Cout (split point C is 128-aligned).
    w_db = jnp.concatenate([flat(params["ae_d"][0]),
                            flat(params["bit_wise"][0])], axis=-1)   # (3*C2, C+E)
    b_db = jnp.concatenate([params["ae_d"][1],
                            params["bit_wise"][1]], axis=-1)         # (1, C+E)
    # length-1 pooled signal + pad=1 -> only the centre tap sees data (exact)
    w_ch, b_ch = params["channel"][0][1].astype(bf16), params["channel"][1]
    w_a1, b_a1 = flat(params["attn1"][0]), params["attn1"][1]
    w_a2, b_a2 = flat(params["attn2"][0]), params["attn2"][1]
    w_a3 = jnp.transpose(params["attn3"][0][0])     # (1, H), f32 (tiny NT dot)
    b_a3 = params["attn3"][1]                       # (1, 1)

    resident = lambda shape: pl.BlockSpec(shape, lambda b: (0, 0))
    per_batch = lambda shape: pl.BlockSpec((None,) + shape, lambda b: (b, 0, 0))

    x_atn, filt_tc, new_tc = pl.pallas_call(
        _attn_fused_kernel,
        out_shape=(
            jax.ShapeDtypeStruct((B, 1, T), vfeat.dtype),    # x_atn (NCT)
            jax.ShapeDtypeStruct((B, T, E), vfeat.dtype),    # filter_feat (TC)
            jax.ShapeDtypeStruct((B, T, C), vfeat.dtype),    # new_feat (TC)
        ),
        grid=(B,),
        in_specs=[
            per_batch((T, C)),                               # ffeat
            per_batch((T, C)),                               # vfeat
            resident((3 * C, C2)), resident((1, C2)),        # AE_e
            resident((3 * C2, C + E)), resident((1, C + E)),  # AE_d + bit_wise
            resident((C, E)), resident((1, E)),              # channel_conv (centre tap)
            resident((3 * E, H)), resident((1, H)),          # attention conv1
            resident((3 * H, H)), resident((1, H)),          # attention conv2
            resident((1, H)), resident((1, 1)),              # attention 1x1 conv
        ],
        out_specs=[
            per_batch((1, T)),
            per_batch((T, E)),
            per_batch((T, C)),
        ],
        compiler_params=pltpu.CompilerParams(
            dimension_semantics=("parallel",),
            vmem_limit_bytes=64 * 1024 * 1024,
        ),
    )(f_tc, v_tc, w_e, b_e, w_db, b_db, w_ch, b_ch,
      w_a1, b_a1, w_a2, b_a2, w_a3, b_a3)

    to_nct = lambda t: jnp.transpose(t, (0, 2, 1))
    return x_atn, to_nct(filt_tc), to_nct(new_tc), vfeat


# ----------------------------------------------------------------------------
# Pure-JAX reference (NCT layout, mirrors the PyTorch code) for a sanity check.
# ----------------------------------------------------------------------------
def _conv1d_ref(x_nct, w_kio, b, act):
    w_oik = jnp.transpose(w_kio, (2, 1, 0))
    K = w_kio.shape[0]
    pad = (K - 1) // 2
    y = jax.lax.conv_general_dilated(
        x_nct, w_oik, (1,), [(pad, pad)],
        dimension_numbers=("NCH", "OIH", "NCH"))
    y = y + b.reshape(1, -1, 1)
    if act == "leaky":
        y = jnp.where(y > 0, y, 0.2 * y)
    elif act == "sigmoid":
        y = jax.nn.sigmoid(y)
    return y


def attn_forward_ref(params, vfeat, ffeat):
    fusion = _conv1d_ref(ffeat, *params["ae_e"], "leaky")
    new_feat = _conv1d_ref(fusion, *params["ae_d"], "leaky")
    channelfeat = jnp.mean(vfeat, axis=2, keepdims=True)
    channel_attn = _conv1d_ref(channelfeat, *params["channel"], "leaky")
    ca_n = channel_attn / jnp.sqrt(jnp.sum(channel_attn ** 2, axis=1, keepdims=True))
    bwa = _conv1d_ref(fusion, *params["bit_wise"], "leaky")
    bwa_n = bwa / jnp.sqrt(jnp.sum(bwa ** 2, axis=1, keepdims=True))
    temp = jnp.einsum("bdn,bdt->bnt", ca_n, bwa_n)
    filt = jax.nn.sigmoid(bwa * temp) * vfeat
    a1 = _conv1d_ref(filt, *params["attn1"], "leaky")
    a2 = _conv1d_ref(a1, *params["attn2"], "leaky")
    x_atn = _conv1d_ref(a2, *params["attn3"], "sigmoid")
    return x_atn, filt, new_feat, vfeat


if __name__ == "__main__":
    # Small shapes consistent with the module (forward requires n_feature == embed_dim).
    B, n_feature, T = 2, 256, 16
    embed_dim = n_feature        # stands in for the hard-coded 1024
    attn_hidden = 128            # stands in for the hard-coded 512

    key = jax.random.PRNGKey(0)
    kp, kv, kf = jax.random.split(key, 3)
    params = init_params(kp, n_feature, embed_dim, attn_hidden)
    vfeat = jax.random.normal(kv, (B, n_feature, T), jnp.float32)
    ffeat = jax.random.normal(kf, (B, n_feature, T), jnp.float32)

    outs = jax.block_until_ready(attn_forward(params, vfeat, ffeat))
    refs = jax.block_until_ready(attn_forward_ref(params, vfeat, ffeat))
    # bf16 MXU operands vs. f32 reference -> expect ~1e-2-level deviations.
    for o, r in zip(outs, refs):
        np.testing.assert_allclose(np.asarray(o), np.asarray(r), rtol=5e-2, atol=5e-2)
    print("KERNEL_OK")
</pallas_src>

<mosaic_0001>
module attributes {stable_mosaic.version = 11 : i64} {
  func.func @_attn_fused_kernel(%arg0: i32, %arg1: memref<1x16x256xf32, #tpu.memory_space<vmem>>, %arg2: memref<1x16x256xf32, #tpu.memory_space<vmem>>, %arg3: memref<768x128xbf16, #tpu.memory_space<vmem>>, %arg4: memref<1x128xf32, #tpu.memory_space<vmem>>, %arg5: memref<384x512xbf16, #tpu.memory_space<vmem>>, %arg6: memref<1x512xf32, #tpu.memory_space<vmem>>, %arg7: memref<256x256xbf16, #tpu.memory_space<vmem>>, %arg8: memref<1x256xf32, #tpu.memory_space<vmem>>, %arg9: memref<768x128xbf16, #tpu.memory_space<vmem>>, %arg10: memref<1x128xf32, #tpu.memory_space<vmem>>, %arg11: memref<384x128xbf16, #tpu.memory_space<vmem>>, %arg12: memref<1x128xf32, #tpu.memory_space<vmem>>, %arg13: memref<1x128xf32, #tpu.memory_space<vmem>>, %arg14: memref<1x1xf32, #tpu.memory_space<vmem>>, %arg15: memref<1x1x16xf32, #tpu.memory_space<vmem>>, %arg16: memref<1x16x256xf32, #tpu.memory_space<vmem>>, %arg17: memref<1x16x256xf32, #tpu.memory_space<vmem>>) attributes {dimension_semantics = [#tpu.dimension_semantics<parallel>], iteration_bounds = array<i64: 2>, scalar_prefetch = 0 : i64, scratch_operands = 0 : i64, tpu.core_type = #tpu.core_type<tc>, window_params = [{transform_indices = @transform_0, window_bounds = array<i64: 1, 16, 256>}, {transform_indices = @transform_1, window_bounds = array<i64: 1, 16, 256>}, {pipeline_mode = #tpu.pipeline_mode<synchronous>, transform_indices = @transform_2, window_bounds = array<i64: 768, 128>}, {pipeline_mode = #tpu.pipeline_mode<synchronous>, transform_indices = @transform_3, window_bounds = array<i64: 1, 128>}, {pipeline_mode = #tpu.pipeline_mode<synchronous>, transform_indices = @transform_4, window_bounds = array<i64: 384, 512>}, {pipeline_mode = #tpu.pipeline_mode<synchronous>, transform_indices = @transform_5, window_bounds = array<i64: 1, 512>}, {pipeline_mode = #tpu.pipeline_mode<synchronous>, transform_indices = @transform_6, window_bounds = array<i64: 256, 256>}, {pipeline_mode = #tpu.pipeline_mode<synchronous>, transform_indices = @transform_7, window_bounds = array<i64: 1, 256>}, {pipeline_mode = #tpu.pipeline_mode<synchronous>, transform_indices = @transform_8, window_bounds = array<i64: 768, 128>}, {pipeline_mode = #tpu.pipeline_mode<synchronous>, transform_indices = @transform_9, window_bounds = array<i64: 1, 128>}, {pipeline_mode = #tpu.pipeline_mode<synchronous>, transform_indices = @transform_10, window_bounds = array<i64: 384, 128>}, {pipeline_mode = #tpu.pipeline_mode<synchronous>, transform_indices = @transform_11, window_bounds = array<i64: 1, 128>}, {pipeline_mode = #tpu.pipeline_mode<synchronous>, transform_indices = @transform_12, window_bounds = array<i64: 1, 128>}, {pipeline_mode = #tpu.pipeline_mode<synchronous>, transform_indices = @transform_13, window_bounds = array<i64: 1, 1>}, {transform_indices = @transform_14, window_bounds = array<i64: 1, 1, 16>}, {transform_indices = @transform_15, window_bounds = array<i64: 1, 16, 256>}, {transform_indices = @transform_16, window_bounds = array<i64: 1, 16, 256>}]} {
    %c0 = arith.constant 0 : index
    %c0_0 = arith.constant 0 : index
    %c0_1 = arith.constant 0 : index
    %0 = vector.load %arg1[%c0, %c0_0, %c0_1] : memref<1x16x256xf32, #tpu.memory_space<vmem>>, vector<1x16x256xf32>
    %1 = vector.shape_cast %0 : vector<1x16x256xf32> to vector<16x256xf32>
    %c0_2 = arith.constant 0 : index
    %c0_3 = arith.constant 0 : index
    %c0_4 = arith.constant 0 : index
    %2 = vector.load %arg2[%c0_2, %c0_3, %c0_4] : memref<1x16x256xf32, #tpu.memory_space<vmem>>, vector<1x16x256xf32>
    %3 = vector.shape_cast %2 : vector<1x16x256xf32> to vector<16x256xf32>
    %cst = arith.constant 0.000000e+00 : f32
    %4 = vector.broadcast %cst : f32 to vector<1x256xf32>
    %5 = vector.extract_strided_slice %1 {offsets = [0, 0], sizes = [15, 256], strides = [1, 1]} : vector<16x256xf32> to vector<15x256xf32>
    %6 = tpu.concatenate %4, %5 in 0 : vector<1x256xf32>, vector<15x256xf32> -> vector<16x256xf32>
    %7 = vector.extract_strided_slice %1 {offsets = [1, 0], sizes = [15, 256], strides = [1, 1]} : vector<16x256xf32> to vector<15x256xf32>
    %8 = tpu.concatenate %7, %4 in 0 : vector<15x256xf32>, vector<1x256xf32> -> vector<16x256xf32>
    %9 = tpu.concatenate %6, %1, %8 in 1 : vector<16x256xf32>, vector<16x256xf32>, vector<16x256xf32> -> vector<16x768xf32>
    %10 = arith.truncf %9 : vector<16x768xf32> to vector<16x768xbf16>
    %c0_5 = arith.constant 0 : index
    %c0_6 = arith.constant 0 : index
    %11 = vector.load %arg3[%c0_5, %c0_6] : memref<768x128xbf16, #tpu.memory_space<vmem>>, vector<768x128xbf16>
    %cst_7 = arith.constant dense<0.000000e+00> : vector<16x128xf32>
    %12 = tpu.matmul %10, %11, %cst_7 {dimension_numbers = #tpu.dot_dimension_numbers<[1], [0], [0], [1], [0, 0, 1, 1], [], []>} : vector<16x768xbf16>, vector<768x128xbf16>, vector<16x128xf32> -> vector<16x128xf32>
    %c0_8 = arith.constant 0 : index
    %c0_9 = arith.constant 0 : index
    %13 = vector.load %arg4[%c0_8, %c0_9] : memref<1x128xf32, #tpu.memory_space<vmem>>, vector<1x128xf32>
    %14 = vector.broadcast %13 : vector<1x128xf32> to vector<16x128xf32>
    %15 = arith.addf %12, %14 : vector<16x128xf32>
    %cst_10 = arith.constant 0.000000e+00 : f32
    %16 = vector.broadcast %cst_10 : f32 to vector<16x128xf32>
    %17 = arith.cmpf ogt, %15, %16 : vector<16x128xf32>
    %cst_11 = arith.constant 2.000000e-01 : f32
    %18 = vector.broadcast %cst_11 : f32 to vector<16x128xf32>
    %19 = arith.mulf %18, %15 : vector<16x128xf32>
    %20 = arith.select %17, %15, %19 : vector<16x128xi1>, vector<16x128xf32>
    %cst_12 = arith.constant 0.000000e+00 : f32
    %21 = vector.broadcast %cst_12 : f32 to vector<1x128xf32>
    %22 = vector.extract_strided_slice %20 {offsets = [0, 0], sizes = [15, 128], strides = [1, 1]} : vector<16x128xf32> to vector<15x128xf32>
    %23 = tpu.concatenate %21, %22 in 0 : vector<1x128xf32>, vector<15x128xf32> -> vector<16x128xf32>
    %24 = vector.extract_strided_slice %20 {offsets = [1, 0], sizes = [15, 128], strides = [1, 1]} : vector<16x128xf32> to vector<15x128xf32>
    %25 = tpu.concatenate %24, %21 in 0 : vector<15x128xf32>, vector<1x128xf32> -> vector<16x128xf32>
    %26 = tpu.concatenate %23, %20, %25 in 1 : vector<16x128xf32>, vector<16x128xf32>, vector<16x128xf32> -> vector<16x384xf32>
    %27 = arith.truncf %26 : vector<16x384xf32> to vector<16x384xbf16>
    %c0_13 = arith.constant 0 : index
    %c0_14 = arith.constant 0 : index
    %28 = vector.load %arg5[%c0_13, %c0_14] : memref<384x512xbf16, #tpu.memory_space<vmem>>, vector<384x512xbf16>
    %cst_15 = arith.constant dense<0.000000e+00> : vector<16x512xf32>
    %29 = tpu.matmul %27, %28, %cst_15 {dimension_numbers = #tpu.dot_dimension_numbers<[1], [0], [0], [1], [0, 0, 1, 1], [], []>} : vector<16x384xbf16>, vector<384x512xbf16>, vector<16x512xf32> -> vector<16x512xf32>
    %c0_16 = arith.constant 0 : index
    %c0_17 = arith.constant 0 : index
    %30 = vector.load %arg6[%c0_16, %c0_17] : memref<1x512xf32, #tpu.memory_space<vmem>>, vector<1x512xf32>
    %31 = vector.broadcast %30 : vector<1x512xf32> to vector<16x512xf32>
    %32 = arith.addf %29, %31 : vector<16x512xf32>
    %cst_18 = arith.constant 0.000000e+00 : f32
    %33 = vector.broadcast %cst_18 : f32 to vector<16x512xf32>
    %34 = arith.cmpf ogt, %32, %33 : vector<16x512xf32>
    %cst_19 = arith.constant 2.000000e-01 : f32
    %35 = vector.broadcast %cst_19 : f32 to vector<16x512xf32>
    %36 = arith.mulf %35, %32 : vector<16x512xf32>
    %37 = arith.select %34, %32, %36 : vector<16x512xi1>, vector<16x512xf32>
    %38 = vector.extract_strided_slice %37 {offsets = [0, 0], sizes = [16, 256], strides = [1, 1]} : vector<16x512xf32> to vector<16x256xf32>
    %39 = vector.extract_strided_slice %37 {offsets = [0, 256], sizes = [16, 256], strides = [1, 1]} : vector<16x512xf32> to vector<16x256xf32>
    %cst_20 = arith.constant dense<0.000000e+00> : vector<256xf32>
    %40 = vector.multi_reduction <add>, %3, %cst_20 [0] : vector<16x256xf32> to vector<256xf32>
    %41 = vector.shape_cast %40 : vector<256xf32> to vector<1x256xf32>
    %cst_21 = arith.constant 1.600000e+01 : f32
    %42 = vector.broadcast %cst_21 : f32 to vector<1x256xf32>
    %43 = arith.divf %41, %42 : vector<1x256xf32>
    %44 = arith.truncf %43 : vector<1x256xf32> to vector<1x256xbf16>
    %c0_22 = arith.constant 0 : index
    %c0_23 = arith.constant 0 : index
    %45 = vector.load %arg7[%c0_22, %c0_23] : memref<256x256xbf16, #tpu.memory_space<vmem>>, vector<256x256xbf16>
    %cst_24 = arith.constant dense<0.000000e+00> : vector<1x256xf32>
    %46 = tpu.matmul %44, %45, %cst_24 {dimension_numbers = #tpu.dot_dimension_numbers<[1], [0], [0], [1], [0, 0, 1, 1], [], []>} : vector<1x256xbf16>, vector<256x256xbf16>, vector<1x256xf32> -> vector<1x256xf32>
    %c0_25 = arith.constant 0 : index
    %c0_26 = arith.constant 0 : index
    %47 = vector.load %arg8[%c0_25, %c0_26] : memref<1x256xf32, #tpu.memory_space<vmem>>, vector<1x256xf32>
    %48 = arith.addf %46, %47 : vector<1x256xf32>
    %cst_27 = arith.constant 0.000000e+00 : f32
    %49 = vector.broadcast %cst_27 : f32 to vector<1x256xf32>
    %50 = arith.cmpf ogt, %48, %49 : vector<1x256xf32>
    %cst_28 = arith.constant 2.000000e-01 : f32
    %51 = vector.broadcast %cst_28 : f32 to vector<1x256xf32>
    %52 = arith.mulf %51, %48 : vector<1x256xf32>
    %53 = arith.select %50, %48, %52 : vector<1x256xi1>, vector<1x256xf32>
    %54 = arith.mulf %53, %53 : vector<1x256xf32>
    %cst_29 = arith.constant dense<0.000000e+00> : vector<1xf32>
    %55 = vector.multi_reduction <add>, %54, %cst_29 [1] : vector<1x256xf32> to vector<1xf32>
    %56 = vector.shape_cast %55 : vector<1xf32> to vector<1x1xf32>
    %57 = math.rsqrt %56 : vector<1x1xf32>
    %58 = vector.broadcast %57 : vector<1x1xf32> to vector<1x256xf32>
    %59 = arith.mulf %53, %58 : vector<1x256xf32>
    %60 = arith.mulf %39, %39 : vector<16x256xf32>
    %cst_30 = arith.constant dense<0.000000e+00> : vector<16xf32>
    %61 = vector.multi_reduction <add>, %60, %cst_30 [1] : vector<16x256xf32> to vector<16xf32>
    %62 = vector.shape_cast %61 : vector<16xf32> to vector<16x1xf32>
    %63 = math.rsqrt %62 : vector<16x1xf32>
    %64 = vector.broadcast %63 : vector<16x1xf32> to vector<16x256xf32>
    %65 = arith.mulf %39, %64 : vector<16x256xf32>
    %66 = vector.broadcast %59 : vector<1x256xf32> to vector<16x256xf32>
    %67 = arith.mulf %66, %65 : vector<16x256xf32>
    %cst_31 = arith.constant dense<0.000000e+00> : vector<16xf32>
    %68 = vector.multi_reduction <add>, %67, %cst_31 [1] : vector<16x256xf32> to vector<16xf32>
    %69 = vector.shape_cast %68 : vector<16xf32> to vector<16x1xf32>
    %70 = vector.broadcast %69 : vector<16x1xf32> to vector<16x256xf32>
    %71 = arith.mulf %39, %70 : vector<16x256xf32>
    %72 = arith.negf %71 : vector<16x256xf32>
    %73 = math.exp %72 : vector<16x256xf32>
    %cst_32 = arith.constant 1.000000e+00 : f32
    %74 = vector.broadcast %cst_32 : f32 to vector<16x256xf32>
    %75 = arith.addf %74, %73 : vector<16x256xf32>
    %76 = arith.divf %74, %75 : vector<16x256xf32>
    %77 = arith.mulf %76, %3 : vector<16x256xf32>
    %cst_33 = arith.constant 0.000000e+00 : f32
    %78 = vector.broadcast %cst_33 : f32 to vector<1x256xf32>
    %79 = vector.extract_strided_slice %77 {offsets = [0, 0], sizes = [15, 256], strides = [1, 1]} : vector<16x256xf32> to vector<15x256xf32>
    %80 = tpu.concatenate %78, %79 in 0 : vector<1x256xf32>, vector<15x256xf32> -> vector<16x256xf32>
    %81 = vector.extract_strided_slice %77 {offsets = [1, 0], sizes = [15, 256], strides = [1, 1]} : vector<16x256xf32> to vector<15x256xf32>
    %82 = tpu.concatenate %81, %78 in 0 : vector<15x256xf32>, vector<1x256xf32> -> vector<16x256xf32>
    %83 = tpu.concatenate %80, %77, %82 in 1 : vector<16x256xf32>, vector<16x256xf32>, vector<16x256xf32> -> vector<16x768xf32>
    %84 = arith.truncf %83 : vector<16x768xf32> to vector<16x768xbf16>
    %c0_34 = arith.constant 0 : index
    %c0_35 = arith.constant 0 : index
    %85 = vector.load %arg9[%c0_34, %c0_35] : memref<768x128xbf16, #tpu.memory_space<vmem>>, vector<768x128xbf16>
    %cst_36 = arith.constant dense<0.000000e+00> : vector<16x128xf32>
    %86 = tpu.matmul %84, %85, %cst_36 {dimension_numbers = #tpu.dot_dimension_numbers<[1], [0], [0], [1], [0, 0, 1, 1], [], []>} : vector<16x768xbf16>, vector<768x128xbf16>, vector<16x128xf32> -> vector<16x128xf32>
    %c0_37 = arith.constant 0 : index
    %c0_38 = arith.constant 0 : index
    %87 = vector.load %arg10[%c0_37, %c0_38] : memref<1x128xf32, #tpu.memory_space<vmem>>, vector<1x128xf32>
    %88 = vector.broadcast %87 : vector<1x128xf32> to vector<16x128xf32>
    %89 = arith.addf %86, %88 : vector<16x128xf32>
    %cst_39 = arith.constant 0.000000e+00 : f32
    %90 = vector.broadcast %cst_39 : f32 to vector<16x128xf32>
    %91 = arith.cmpf ogt, %89, %90 : vector<16x128xf32>
    %cst_40 = arith.constant 2.000000e-01 : f32
    %92 = vector.broadcast %cst_40 : f32 to vector<16x128xf32>
    %93 = arith.mulf %92, %89 : vector<16x128xf32>
    %94 = arith.select %91, %89, %93 : vector<16x128xi1>, vector<16x128xf32>
    %cst_41 = arith.constant 0.000000e+00 : f32
    %95 = vector.broadcast %cst_41 : f32 to vector<1x128xf32>
    %96 = vector.extract_strided_slice %94 {offsets = [0, 0], sizes = [15, 128], strides = [1, 1]} : vector<16x128xf32> to vector<15x128xf32>
    %97 = tpu.concatenate %95, %96 in 0 : vector<1x128xf32>, vector<15x128xf32> -> vector<16x128xf32>
    %98 = vector.extract_strided_slice %94 {offsets = [1, 0], sizes = [15, 128], strides = [1, 1]} : vector<16x128xf32> to vector<15x128xf32>
    %99 = tpu.concatenate %98, %95 in 0 : vector<15x128xf32>, vector<1x128xf32> -> vector<16x128xf32>
    %100 = tpu.concatenate %97, %94, %99 in 1 : vector<16x128xf32>, vector<16x128xf32>, vector<16x128xf32> -> vector<16x384xf32>
    %101 = arith.truncf %100 : vector<16x384xf32> to vector<16x384xbf16>
    %c0_42 = arith.constant 0 : index
    %c0_43 = arith.constant 0 : index
    %102 = vector.load %arg11[%c0_42, %c0_43] : memref<384x128xbf16, #tpu.memory_space<vmem>>, vector<384x128xbf16>
    %cst_44 = arith.constant dense<0.000000e+00> : vector<16x128xf32>
    %103 = tpu.matmul %101, %102, %cst_44 {dimension_numbers = #tpu.dot_dimension_numbers<[1], [0], [0], [1], [0, 0, 1, 1], [], []>} : vector<16x384xbf16>, vector<384x128xbf16>, vector<16x128xf32> -> vector<16x128xf32>
    %c0_45 = arith.constant 0 : index
    %c0_46 = arith.constant 0 : index
    %104 = vector.load %arg12[%c0_45, %c0_46] : memref<1x128xf32, #tpu.memory_space<vmem>>, vector<1x128xf32>
    %105 = vector.broadcast %104 : vector<1x128xf32> to vector<16x128xf32>
    %106 = arith.addf %103, %105 : vector<16x128xf32>
    %cst_47 = arith.constant 0.000000e+00 : f32
    %107 = vector.broadcast %cst_47 : f32 to vector<16x128xf32>
    %108 = arith.cmpf ogt, %106, %107 : vector<16x128xf32>
    %cst_48 = arith.constant 2.000000e-01 : f32
    %109 = vector.broadcast %cst_48 : f32 to vector<16x128xf32>
    %110 = arith.mulf %109, %106 : vector<16x128xf32>
    %111 = arith.select %108, %106, %110 : vector<16x128xi1>, vector<16x128xf32>
    %c0_49 = arith.constant 0 : index
    %c0_50 = arith.constant 0 : index
    %112 = vector.load %arg13[%c0_49, %c0_50] : memref<1x128xf32, #tpu.memory_space<vmem>>, vector<1x128xf32>
    %cst_51 = arith.constant dense<0.000000e+00> : vector<1x16xf32>
    %113 = tpu.matmul %112, %111, %cst_51 {dimension_numbers = #tpu.dot_dimension_numbers<[1], [1], [0], [0], [0, 0, 1, 0], [], []>} : vector<1x128xf32>, vector<16x128xf32>, vector<1x16xf32> -> vector<1x16xf32>
    %c0_52 = arith.constant 0 : index
    %c0_53 = arith.constant 0 : index
    %114 = vector.load %arg14[%c0_52, %c0_53] : memref<1x1xf32, #tpu.memory_space<vmem>>, vector<1x1xf32>
    %115 = vector.broadcast %114 : vector<1x1xf32> to vector<1x16xf32>
    %116 = arith.addf %113, %115 : vector<1x16xf32>
    %117 = arith.negf %116 : vector<1x16xf32>
    %118 = math.exp %117 : vector<1x16xf32>
    %cst_54 = arith.constant 1.000000e+00 : f32
    %119 = vector.broadcast %cst_54 : f32 to vector<1x16xf32>
    %120 = arith.addf %119, %118 : vector<1x16xf32>
    %121 = arith.divf %119, %120 : vector<1x16xf32>
    %c0_55 = arith.constant 0 : index
    %c0_56 = arith.constant 0 : index
    %c0_57 = arith.constant 0 : index
    %122 = vector.load %arg15[%c0_55, %c0_56, %c0_57] : memref<1x1x16xf32, #tpu.memory_space<vmem>>, vector<1x1x16xf32>
    %123 = vector.shape_cast %122 : vector<1x1x16xf32> to vector<1x16xf32>
    %124 = vector.shape_cast %121 : vector<1x16xf32> to vector<1x1x16xf32>
    tpu.vector_store %arg15[%c0_55, %c0_56, %c0_57], %124 {strides = array<i32>} : memref<1x1x16xf32, #tpu.memory_space<vmem>>, vector<1x1x16xf32>,
    %c0_58 = arith.constant 0 : index
    %c0_59 = arith.constant 0 : index
    %c0_60 = arith.constant 0 : index
    %125 = vector.load %arg16[%c0_58, %c0_59, %c0_60] : memref<1x16x256xf32, #tpu.memory_space<vmem>>, vector<1x16x256xf32>
    %126 = vector.shape_cast %125 : vector<1x16x256xf32> to vector<16x256xf32>
    %127 = vector.shape_cast %77 : vector<16x256xf32> to vector<1x16x256xf32>
    tpu.vector_store %arg16[%c0_58, %c0_59, %c0_60], %127 {strides = array<i32>} : memref<1x16x256xf32, #tpu.memory_space<vmem>>, vector<1x16x256xf32>,
    %c0_61 = arith.constant 0 : index
    %c0_62 = arith.constant 0 : index
    %c0_63 = arith.constant 0 : index
    %128 = vector.load %arg17[%c0_61, %c0_62, %c0_63] : memref<1x16x256xf32, #tpu.memory_space<vmem>>, vector<1x16x256xf32>
    %129 = vector.shape_cast %128 : vector<1x16x256xf32> to vector<16x256xf32>
    %130 = vector.shape_cast %38 : vector<16x256xf32> to vector<1x16x256xf32>
    tpu.vector_store %arg17[%c0_61, %c0_62, %c0_63], %130 {strides = array<i32>} : memref<1x16x256xf32, #tpu.memory_space<vmem>>, vector<1x16x256xf32>,
    return
  }
  func.func @transform_0(%arg0: i32) -> (i32, i32, i32) {
    %c0_i32 = arith.constant 0 : i32
    %c0_i32_0 = arith.constant 0 : i32
    %c0_i32_1 = arith.constant 0 : i32
    return %arg0, %c0_i32, %c0_i32_0 : i32, i32, i32
  }
  func.func @transform_1(%arg0: i32) -> (i32, i32, i32) {
    %c0_i32 = arith.constant 0 : i32
    %c0_i32_0 = arith.constant 0 : i32
    %c0_i32_1 = arith.constant 0 : i32
    return %arg0, %c0_i32, %c0_i32_0 : i32, i32, i32
  }
  func.func @transform_2(%arg0: i32) -> (i32, i32) {
    %c0_i32 = arith.constant 0 : i32
    %c0_i32_0 = arith.constant 0 : i32
    %c0_i32_1 = arith.constant 0 : i32
    return %c0_i32, %c0_i32_0 : i32, i32
  }
  func.func @transform_3(%arg0: i32) -> (i32, i32) {
    %c0_i32 = arith.constant 0 : i32
    %c0_i32_0 = arith.constant 0 : i32
    %c0_i32_1 = arith.constant 0 : i32
    return %c0_i32, %c0_i32_0 : i32, i32
  }
  func.func @transform_4(%arg0: i32) -> (i32, i32) {
    %c0_i32 = arith.constant 0 : i32
    %c0_i32_0 = arith.constant 0 : i32
    %c0_i32_1 = arith.constant 0 : i32
    return %c0_i32, %c0_i32_0 : i32, i32
  }
  func.func @transform_5(%arg0: i32) -> (i32, i32) {
    %c0_i32 = arith.constant 0 : i32
    %c0_i32_0 = arith.constant 0 : i32
    %c0_i32_1 = arith.constant 0 : i32
    return %c0_i32, %c0_i32_0 : i32, i32
  }
  func.func @transform_6(%arg0: i32) -> (i32, i32) {
    %c0_i32 = arith.constant 0 : i32
    %c0_i32_0 = arith.constant 0 : i32
    %c0_i32_1 = arith.constant 0 : i32
    return %c0_i32, %c0_i32_0 : i32, i32
  }
  func.func @transform_7(%arg0: i32) -> (i32, i32) {
    %c0_i32 = arith.constant 0 : i32
    %c0_i32_0 = arith.constant 0 : i32
    %c0_i32_1 = arith.constant 0 : i32
    return %c0_i32, %c0_i32_0 : i32, i32
  }
  func.func @transform_8(%arg0: i32) -> (i32, i32) {
    %c0_i32 = arith.constant 0 : i32
    %c0_i32_0 = arith.constant 0 : i32
    %c0_i32_1 = arith.constant 0 : i32
    return %c0_i32, %c0_i32_0 : i32, i32
  }
  func.func @transform_9(%arg0: i32) -> (i32, i32) {
    %c0_i32 = arith.constant 0 : i32
    %c0_i32_0 = arith.constant 0 : i32
    %c0_i32_1 = arith.constant 0 : i32
    return %c0_i32, %c0_i32_0 : i32, i32
  }
  func.func @transform_10(%arg0: i32) -> (i32, i32) {
    %c0_i32 = arith.constant 0 : i32
    %c0_i32_0 = arith.constant 0 : i32
    %c0_i32_1 = arith.constant 0 : i32
    return %c0_i32, %c0_i32_0 : i32, i32
  }
  func.func @transform_11(%arg0: i32) -> (i32, i32) {
    %c0_i32 = arith.constant 0 : i32
    %c0_i32_0 = arith.constant 0 : i32
    %c0_i32_1 = arith.constant 0 : i32
    return %c0_i32, %c0_i32_0 : i32, i32
  }
  func.func @transform_12(%arg0: i32) -> (i32, i32) {
    %c0_i32 = arith.constant 0 : i32
    %c0_i32_0 = arith.constant 0 : i32
    %c0_i32_1 = arith.constant 0 : i32
    return %c0_i32, %c0_i32_0 : i32, i32
  }
  func.func @transform_13(%arg0: i32) -> (i32, i32) {
    %c0_i32 = arith.constant 0 : i32
    %c0_i32_0 = arith.constant 0 : i32
    %c0_i32_1 = arith.constant 0 : i32
    return %c0_i32, %c0_i32_0 : i32, i32
  }
  func.func @transform_14(%arg0: i32) -> (i32, i32, i32) {
    %c0_i32 = arith.constant 0 : i32
    %c0_i32_0 = arith.constant 0 : i32
    %c0_i32_1 = arith.constant 0 : i32
    return %arg0, %c0_i32, %c0_i32_0 : i32, i32, i32
  }
  func.func @transform_15(%arg0: i32) -> (i32, i32, i32) {
    %c0_i32 = arith.constant 0 : i32
    %c0_i32_0 = arith.constant 0 : i32
    %c0_i32_1 = arith.constant 0 : i32
    return %arg0, %c0_i32, %c0_i32_0 : i32, i32, i32
  }
  func.func @transform_16(%arg0: i32) -> (i32, i32, i32) {
    %c0_i32 = arith.constant 0 : i32
    %c0_i32_0 = arith.constant 0 : i32
    %c0_i32_1 = arith.constant 0 : i32
    return %arg0, %c0_i32, %c0_i32_0 : i32, i32, i32
  }
}

</mosaic_0001>

<llo_original>
// kernel: tpu_custom_call.1
$region0: #{tpu_custom_call.1}
  #allocation0 [shape = 'u32[]', space=smem, size = 0x4, offset = 0x4, fixed_abs, tag = 'smem constant byte address 0x4 - core index']
  #allocation1 [shape = 'u32[144,128]{1,0:T(1,128)}', space=vmem, size = 0x12000, scoped, tag = 'internal scratch']
  #allocation2 [shape = 'f32[1,1]{1,0:T(1,128)S(1)}', space=vmem, size = 0x200, scoped, tag = 'scoped memory for tpu_custom_call.1']
  %s0 = inlined_call_operand.hbm [shape: f32[2,16,256], index: 0, kind: input, shape index: {}]
  %s1 = inlined_call_operand.hbm [shape: f32[2,16,256], index: 1, kind: input, shape index: {}]
  %s2 = inlined_call_operand.hbm [shape: bf16[768,128], index: 2, kind: input, shape index: {}]
  %s3 = inlined_call_operand.hbm [shape: f32[1,128], index: 3, kind: input, shape index: {}]
  %s4 = inlined_call_operand.hbm [shape: bf16[384,512], index: 4, kind: input, shape index: {}]
  %s5 = inlined_call_operand.hbm [shape: f32[1,512], index: 5, kind: input, shape index: {}]
  %s6 = inlined_call_operand.hbm [shape: bf16[256,256], index: 6, kind: input, shape index: {}]
  %s7 = inlined_call_operand.hbm [shape: f32[1,256], index: 7, kind: input, shape index: {}]
  %s8 = inlined_call_operand.hbm [shape: bf16[768,128], index: 8, kind: input, shape index: {}]
  %s9 = inlined_call_operand.hbm [shape: f32[1,128], index: 9, kind: input, shape index: {}]
  %s10 = inlined_call_operand.hbm [shape: bf16[384,128], index: 10, kind: input, shape index: {}]
  %s11 = inlined_call_operand.hbm [shape: f32[1,128], index: 11, kind: input, shape index: {}]
  %s12 = inlined_call_operand.hbm [shape: f32[1,128], index: 12, kind: input, shape index: {}]
  %s13 = inlined_call_operand.<no memory space> [shape: f32[1,1], index: 13, kind: input, shape index: {}]
  %s14 = inlined_call_operand.hbm [shape: f32[2,1,16], index: 14, kind: output, shape index: {0}]
  %s15 = inlined_call_operand.hbm [shape: f32[2,16,256], index: 15, kind: output, shape index: {1}]
  %s16 = inlined_call_operand.hbm [shape: f32[2,16,256], index: 16, kind: output, shape index: {2}]
  %17 = xla_tuple %s14, %s15, %s16
  %s18 = sld [smem:[#allocation0]]
  $region157: #{tpu_custom_call.1} parent=0
    _
  %s20 = ssub.s32 1, %s18
  %s21 = scalar_select 0, %s20, %s18
  %v22 = vstv %s13
  %23 = vst [vmem:[#allocation2] sm:$0x1] %v22
  $region1: #{tpu_custom_call.1} parent=0
    #allocation3 [shape = 'u8[32768]{0}', space=vmem, size = 0x8000, scoped, tag = 'input window, operand 0']
    #allocation4 [shape = 's32[2]{0}', space=sflag, size = 0x8, scoped, tag = 'scoped memory for tpu_custom_call.1']
    #allocation5 [shape = 's32[2]{0}', space=sflag, size = 0x8, scoped, tag = 'scoped memory for tpu_custom_call.1']
    #allocation6 [shape = 'u8[32768]{0}', space=vmem, size = 0x8000, scoped, tag = 'input window, operand 1']
    #allocation7 [shape = 's32[2]{0}', space=sflag, size = 0x8, scoped, tag = 'scoped memory for tpu_custom_call.1']
    #allocation8 [shape = 'u8[196608]{0}', space=vmem, size = 0x30000, scoped, tag = 'input window, operand 2, single buffered']
    #allocation9 [shape = 'u8[512]{0}', space=vmem, size = 0x400, scoped, tag = 'input window, operand 3, single buffered']
    #allocation10 [shape = 's32[1]{0}', space=sflag, size = 0x4, scoped, tag = 'scoped memory for tpu_custom_call.1']
    #allocation11 [shape = 'u8[393216]{0}', space=vmem, size = 0x60000, scoped, tag = 'input window, operand 4, single buffered']
    #allocation12 [shape = 'u8[2048]{0}', space=vmem, size = 0x800, scoped, tag = 'input window, operand 5, single buffered']
    #allocation13 [shape = 's32[1]{0}', space=sflag, size = 0x4, scoped, tag = 'scoped memory for tpu_custom_call.1']
    #allocation14 [shape = 'u8[131072]{0}', space=vmem, size = 0x20000, scoped, tag = 'input window, operand 6, single buffered']
    #allocation15 [shape = 'u8[1024]{0}', space=vmem, size = 0x400, scoped, tag = 'input window, operand 7, single buffered']
    #allocation16 [shape = 's32[1]{0}', space=sflag, size = 0x4, scoped, tag = 'scoped memory for tpu_custom_call.1']
    #allocation17 [shape = 'u8[196608]{0}', space=vmem, size = 0x30000, scoped, tag = 'input window, operand 8, single buffered']
    #allocation18 [shape = 'u8[512]{0}', space=vmem, size = 0x400, scoped, tag = 'input window, operand 9, single buffered']
    #allocation19 [shape = 's32[1]{0}', space=sflag, size = 0x4, scoped, tag = 'scoped memory for tpu_custom_call.1']
    #allocation20 [shape = 'u8[98304]{0}', space=vmem, size = 0x18000, scoped, tag = 'input window, operand 10, single buffered']
    #allocation21 [shape = 'u8[512]{0}', space=vmem, size = 0x400, scoped, tag = 'input window, operand 11, single buffered']
    #allocation22 [shape = 's32[1]{0}', space=sflag, size = 0x4, scoped, tag = 'scoped memory for tpu_custom_call.1']
    #allocation23 [shape = 'u8[512]{0}', space=vmem, size = 0x400, scoped, tag = 'input window, operand 12, single buffered']
    #allocation24 [shape = 'u8[1024]{0}', space=vmem, size = 0x400, scoped, tag = 'output window, operand 0']
    #allocation25 [shape = 'u8[32768]{0}', space=vmem, size = 0x8000, scoped, tag = 'output window, operand 1']
    #allocation26 [shape = 's32[2]{0}', space=sflag, size = 0x8, scoped, tag = 'scoped memory for tpu_custom_call.1']
    #allocation27 [shape = 'u8[32768]{0}', space=vmem, size = 0x8000, scoped, tag = 'output window, operand 2']
    %24 = vsyncpa [#allocation4], 0
    %s25 = scalar_lea.sflag [#allocation4], 1
    %26 = vsyncpa %s25, 0
    %27 = vsyncpa [#allocation7], 0
    %s28 = scalar_lea.sflag [#allocation7], 1
    %29 = vsyncpa %s28, 0
    %30 = vsyncpa [#allocation10], 0
    %31 = vsyncpa [#allocation13], 0
    %32 = vsyncpa [#allocation16], 0
    %33 = vsyncpa [#allocation19], 0
    %34 = vsyncpa [#allocation22], 0
    %35 = vsyncpa [#allocation5], 0
    %s36 = scalar_lea.sflag [#allocation5], 1
    %37 = vsyncpa %s36, 0
    %38 = vsyncpa [#allocation26], 0
    %s39 = scalar_lea.sflag [#allocation26], 1
    %40 = vsyncpa %s39, 0
    loop: start=0, step=1, limit=4
    $region2: #{tpu_custom_call.1} parent=1 // loop_pre_header
      _
    $region3: #{tpu_custom_call.1} parent=1 // loop_header
      %s42 = sphi 0, %s46
      %p43 = scmp.ge.s32.totalorder %s42, 4
      %s52 = sphi 0, %s54
      %s55 = sphi 0, %s52
      %s56 = sphi 0, %s55
      %s72 = sphi 0, %s56
      %s78 = sphi 0, %s80
      %s81 = sphi 0, %s78
      %s82 = sphi 0, %s81
      %s98 = sphi 0, %s82
      %s102 = sphi 0, %s102
      %s104 = sphi 0, %s102
      %s105 = sphi 0, %s104
      %s119 = sphi 0, %s105
      %s123 = sphi 0, %s123
      %s125 = sphi 0, %s123
      %s126 = sphi 0, %s125
      %s140 = sphi 0, %s126
      %s144 = sphi 0, %s144
      %s146 = sphi 0, %s144
      %s147 = sphi 0, %s146
      %s161 = sphi 0, %s147
      %s165 = sphi 0, %s165
      %s167 = sphi 0, %s165
      %s168 = sphi 0, %s167
      %s182 = sphi 0, %s168
      %s186 = sphi 0, %s186
      %s188 = sphi 0, %s186
      %s189 = sphi 0, %s188
      %s203 = sphi 0, %s189
      %s207 = sphi 0, %s207
      %s209 = sphi 0, %s207
      %s210 = sphi 0, %s209
      %s224 = sphi 0, %s210
      %s228 = sphi 0, %s228
      %s230 = sphi 0, %s228
      %s231 = sphi 0, %s230
      %s245 = sphi 0, %s231
      %s249 = sphi 0, %s249
      %s251 = sphi 0, %s249
      %s252 = sphi 0, %s251
      %s266 = sphi 0, %s252
      %s270 = sphi 0, %s270
      %s272 = sphi 0, %s270
      %s273 = sphi 0, %s272
      %s287 = sphi 0, %s273
      %s291 = sphi 0, %s291
      %s293 = sphi 0, %s291
      %s294 = sphi 0, %s293
      %s308 = sphi 0, %s294
      %s312 = sphi 0, %s312
      %s314 = sphi 0, %s312
      %s315 = sphi 0, %s314
      %s329 = sphi 0, %s315
      %s333 = sphi 0, %s333
      %s335 = sphi 0, %s333
      %s336 = sphi 0, %s335
      %s350 = sphi 0, %s336
      %s356 = sphi 0, %s358
      %s359 = sphi 0, %s356
      %s360 = sphi 0, %s359
      %s376 = sphi 0, %s360
      %s382 = sphi 0, %s384
      %s385 = sphi 0, %s382
      %s386 = sphi 0, %s385
      %s402 = sphi 0, %s386
      %s408 = sphi 0, %s410
      %s411 = sphi 0, %s408
      %s412 = sphi 0, %s411
      %s428 = sphi 0, %s412
    $region4: #{tpu_custom_call.1} parent=1 // loop_header_branch
      %45 = sbr.rel (%p43) target = $region8
    $region5: #{tpu_custom_call.1} parent=1 // loop_body
      %s47 = ssub.s32 %s42, 1
      %s48 = ssub.s32 %s42, 2
      %s49 = sadd.s32 %s42, 1
      %s50 = ssub.s32 %s42, %s49
      %p51 = scmp.eq.s32.totalorder %s50, 0
      %s53 = sadd.s32 %s52, 1
      %s54 = scalar_select %p51, %s52, %s53
      %p57 = pneg %p51
      %p58 = scmp.eq.s32.totalorder %s42, 1
      %p59 = por %p57, %p58
      %p60 = scmp.ne.s32.totalorder %s52, %s55
      %p61 = scmp.eq.s32.totalorder %s42, 0
      %p62 = por %p60, %p61
      %p63 = scmp.ne.s32.totalorder %s52, %s55
      %p64 = scmp.eq.s32.totalorder %s47, 1
      %p65 = por %p63, %p64
      %p66 = scmp.ne.s32.totalorder %s55, %s56
      %p67 = scmp.eq.s32.totalorder %s47, 0
      %p68 = por %p66, %p67
      %p69 = scmp.ne.s32.totalorder %s55, %s56
      %p70 = scmp.eq.s32.totalorder %s48, 1
      %p71 = por %p69, %p70
      %p73 = scmp.ne.s32.totalorder %s56, %s72
      %p74 = scmp.eq.s32.totalorder %s48, 0
      %p75 = por %p73, %p74
      %s76 = ssub.s32 %s42, %s49
      %p77 = scmp.eq.s32.totalorder %s76, 0
      %s79 = sadd.s32 %s78, 1
      %s80 = scalar_select %p77, %s78, %s79
      %p83 = pneg %p77
      %p84 = scmp.eq.s32.totalorder %s42, 1
      %p85 = por %p83, %p84
      %p86 = scmp.ne.s32.totalorder %s78, %s81
      %p87 = scmp.eq.s32.totalorder %s42, 0
      %p88 = por %p86, %p87
      %p89 = scmp.ne.s32.totalorder %s78, %s81
      %p90 = scmp.eq.s32.totalorder %s47, 1
      %p91 = por %p89, %p90
      %p92 = scmp.ne.s32.totalorder %s81, %s82
      %p93 = scmp.eq.s32.totalorder %s47, 0
      %p94 = por %p92, %p93
      %p95 = scmp.ne.s32.totalorder %s81, %s82
      %p96 = scmp.eq.s32.totalorder %s48, 1
      %p97 = por %p95, %p96
      %p99 = scmp.ne.s32.totalorder %s82, %s98
      %p100 = scmp.eq.s32.totalorder %s48, 0
      %p101 = por %p99, %p100
      %s103 = sadd.s32 %s102, 1
      %p106 = scmp.eq.s32.totalorder %s42, 1
      %p107 = scmp.ne.s32.totalorder %s102, %s104
      %p108 = scmp.eq.s32.totalorder %s42, 0
      %p109 = por %p107, %p108
      %p110 = scmp.ne.s32.totalorder %s102, %s104
      %p111 = scmp.eq.s32.totalorder %s47, 1
      %p112 = por %p110, %p111
      %p113 = scmp.ne.s32.totalorder %s104, %s105
      %p114 = scmp.eq.s32.totalorder %s47, 0
      %p115 = por %p113, %p114
      %p116 = scmp.ne.s32.totalorder %s104, %s105
      %p117 = scmp.eq.s32.totalorder %s48, 1
      %p118 = por %p116, %p117
      %p120 = scmp.ne.s32.totalorder %s105, %s119
      %p121 = scmp.eq.s32.totalorder %s48, 0
      %p122 = por %p120, %p121
      %s124 = sadd.s32 %s123, 1
      %p127 = scmp.eq.s32.totalorder %s42, 1
      %p128 = scmp.ne.s32.totalorder %s123, %s125
      %p129 = scmp.eq.s32.totalorder %s42, 0
      %p130 = por %p128, %p129
      %p131 = scmp.ne.s32.totalorder %s123, %s125
      %p132 = scmp.eq.s32.totalorder %s47, 1
      %p133 = por %p131, %p132
      %p134 = scmp.ne.s32.totalorder %s125, %s126
      %p135 = scmp.eq.s32.totalorder %s47, 0
      %p136 = por %p134, %p135
      %p137 = scmp.ne.s32.totalorder %s125, %s126
      %p138 = scmp.eq.s32.totalorder %s48, 1
      %p139 = por %p137, %p138
      %p141 = scmp.ne.s32.totalorder %s126, %s140
      %p142 = scmp.eq.s32.totalorder %s48, 0
      %p143 = por %p141, %p142
      %s145 = sadd.s32 %s144, 1
      %p148 = scmp.eq.s32.totalorder %s42, 1
      %p149 = scmp.ne.s32.totalorder %s144, %s146
      %p150 = scmp.eq.s32.totalorder %s42, 0
      %p151 = por %p149, %p150
      %p152 = scmp.ne.s32.totalorder %s144, %s146
      %p153 = scmp.eq.s32.totalorder %s47, 1
      %p154 = por %p152, %p153
      %p155 = scmp.ne.s32.totalorder %s146, %s147
      %p156 = scmp.eq.s32.totalorder %s47, 0
      %p157 = por %p155, %p156
      %p158 = scmp.ne.s32.totalorder %s146, %s147
      %p159 = scmp.eq.s32.totalorder %s48, 1
      %p160 = por %p158, %p159
      %p162 = scmp.ne.s32.totalorder %s147, %s161
      %p163 = scmp.eq.s32.totalorder %s48, 0
      %p164 = por %p162, %p163
      %s166 = sadd.s32 %s165, 1
      %p169 = scmp.eq.s32.totalorder %s42, 1
      %p170 = scmp.ne.s32.totalorder %s165, %s167
      %p171 = scmp.eq.s32.totalorder %s42, 0
      %p172 = por %p170, %p171
      %p173 = scmp.ne.s32.totalorder %s165, %s167
      %p174 = scmp.eq.s32.totalorder %s47, 1
      %p175 = por %p173, %p174
      %p176 = scmp.ne.s32.totalorder %s167, %s168
      %p177 = scmp.eq.s32.totalorder %s47, 0
      %p178 = por %p176, %p177
      %p179 = scmp.ne.s32.totalorder %s167, %s168
      %p180 = scmp.eq.s32.totalorder %s48, 1
      %p181 = por %p179, %p180
      %p183 = scmp.ne.s32.totalorder %s168, %s182
      %p184 = scmp.eq.s32.totalorder %s48, 0
      %p185 = por %p183, %p184
      %s187 = sadd.s32 %s186, 1
      %p190 = scmp.eq.s32.totalorder %s42, 1
      %p191 = scmp.ne.s32.totalorder %s186, %s188
      %p192 = scmp.eq.s32.totalorder %s42, 0
      %p193 = por %p191, %p192
      %p194 = scmp.ne.s32.totalorder %s186, %s188
      %p195 = scmp.eq.s32.totalorder %s47, 1
      %p196 = por %p194, %p195
      %p197 = scmp.ne.s32.totalorder %s188, %s189
      %p198 = scmp.eq.s32.totalorder %s47, 0
      %p199 = por %p197, %p198
      %p200 = scmp.ne.s32.totalorder %s188, %s189
      %p201 = scmp.eq.s32.totalorder %s48, 1
      %p202 = por %p200, %p201
      %p204 = scmp.ne.s32.totalorder %s189, %s203
      %p205 = scmp.eq.s32.totalorder %s48, 0
      %p206 = por %p204, %p205
      %s208 = sadd.s32 %s207, 1
      %p211 = scmp.eq.s32.totalorder %s42, 1
      %p212 = scmp.ne.s32.totalorder %s207, %s209
      %p213 = scmp.eq.s32.totalorder %s42, 0
      %p214 = por %p212, %p213
      %p215 = scmp.ne.s32.totalorder %s207, %s209
      %p216 = scmp.eq.s32.totalorder %s47, 1
      %p217 = por %p215, %p216
      %p218 = scmp.ne.s32.totalorder %s209, %s210
      %p219 = scmp.eq.s32.totalorder %s47, 0
      %p220 = por %p218, %p219
      %p221 = scmp.ne.s32.totalorder %s209, %s210
      %p222 = scmp.eq.s32.totalorder %s48, 1
      %p223 = por %p221, %p222
      %p225 = scmp.ne.s32.totalorder %s210, %s224
      %p226 = scmp.eq.s32.totalorder %s48, 0
      %p227 = por %p225, %p226
      %s229 = sadd.s32 %s228, 1
      %p232 = scmp.eq.s32.totalorder %s42, 1
      %p233 = scmp.ne.s32.totalorder %s228, %s230
      %p234 = scmp.eq.s32.totalorder %s42, 0
      %p235 = por %p233, %p234
      %p236 = scmp.ne.s32.totalorder %s228, %s230
      %p237 = scmp.eq.s32.totalorder %s47, 1
      %p238 = por %p236, %p237
      %p239 = scmp.ne.s32.totalorder %s230, %s231
      %p240 = scmp.eq.s32.totalorder %s47, 0
      %p241 = por %p239, %p240
      %p242 = scmp.ne.s32.totalorder %s230, %s231
      %p243 = scmp.eq.s32.totalorder %s48, 1
      %p244 = por %p242, %p243
      %p246 = scmp.ne.s32.totalorder %s231, %s245
      %p247 = scmp.eq.s32.totalorder %s48, 0
      %p248 = por %p246, %p247
      %s250 = sadd.s32 %s249, 1
      %p253 = scmp.eq.s32.totalorder %s42, 1
      %p254 = scmp.ne.s32.totalorder %s249, %s251
      %p255 = scmp.eq.s32.totalorder %s42, 0
      %p256 = por %p254, %p255
      %p257 = scmp.ne.s32.totalorder %s249, %s251
      %p258 = scmp.eq.s32.totalorder %s47, 1
      %p259 = por %p257, %p258
      %p260 = scmp.ne.s32.totalorder %s251, %s252
      %p261 = scmp.eq.s32.totalorder %s47, 0
      %p262 = por %p260, %p261
      %p263 = scmp.ne.s32.totalorder %s251, %s252
      %p264 = scmp.eq.s32.totalorder %s48, 1
      %p265 = por %p263, %p264
      %p267 = scmp.ne.s32.totalorder %s252, %s266
      %p268 = scmp.eq.s32.totalorder %s48, 0
      %p269 = por %p267, %p268
      %s271 = sadd.s32 %s270, 1
      %p274 = scmp.eq.s32.totalorder %s42, 1
      %p275 = scmp.ne.s32.totalorder %s270, %s272
      %p276 = scmp.eq.s32.totalorder %s42, 0
      %p277 = por %p275, %p276
      %p278 = scmp.ne.s32.totalorder %s270, %s272
      %p279 = scmp.eq.s32.totalorder %s47, 1
      %p280 = por %p278, %p279
      %p281 = scmp.ne.s32.totalorder %s272, %s273
      %p282 = scmp.eq.s32.totalorder %s47, 0
      %p283 = por %p281, %p282
      %p284 = scmp.ne.s32.totalorder %s272, %s273
      %p285 = scmp.eq.s32.totalorder %s48, 1
      %p286 = por %p284, %p285
      %p288 = scmp.ne.s32.totalorder %s273, %s287
      %p289 = scmp.eq.s32.totalorder %s48, 0
      %p290 = por %p288, %p289
      %s292 = sadd.s32 %s291, 1
      %p295 = scmp.eq.s32.totalorder %s42, 1
      %p296 = scmp.ne.s32.totalorder %s291, %s293
      %p297 = scmp.eq.s32.totalorder %s42, 0
      %p298 = por %p296, %p297
      %p299 = scmp.ne.s32.totalorder %s291, %s293
      %p300 = scmp.eq.s32.totalorder %s47, 1
      %p301 = por %p299, %p300
      %p302 = scmp.ne.s32.totalorder %s293, %s294
      %p303 = scmp.eq.s32.totalorder %s47, 0
      %p304 = por %p302, %p303
      %p305 = scmp.ne.s32.totalorder %s293, %s294
      %p306 = scmp.eq.s32.totalorder %s48, 1
      %p307 = por %p305, %p306
      %p309 = scmp.ne.s32.totalorder %s294, %s308
      %p310 = scmp.eq.s32.totalorder %s48, 0
      %p311 = por %p309, %p310
      %s313 = sadd.s32 %s312, 1
      %p316 = scmp.eq.s32.totalorder %s42, 1
      %p317 = scmp.ne.s32.totalorder %s312, %s314
      %p318 = scmp.eq.s32.totalorder %s42, 0
      %p319 = por %p317, %p318
      %p320 = scmp.ne.s32.totalorder %s312, %s314
      %p321 = scmp.eq.s32.totalorder %s47, 1
      %p322 = por %p320, %p321
      %p323 = scmp.ne.s32.totalorder %s314, %s315
      %p324 = scmp.eq.s32.totalorder %s47, 0
      %p325 = por %p323, %p324
      %p326 = scmp.ne.s32.totalorder %s314, %s315
      %p327 = scmp.eq.s32.totalorder %s48, 1
      %p328 = por %p326, %p327
      %p330 = scmp.ne.s32.totalorder %s315, %s329
      %p331 = scmp.eq.s32.totalorder %s48, 0
      %p332 = por %p330, %p331
      %s334 = sadd.s32 %s333, 1
      %p337 = scmp.eq.s32.totalorder %s42, 1
      %p338 = scmp.ne.s32.totalorder %s333, %s335
      %p339 = scmp.eq.s32.totalorder %s42, 0
      %p340 = por %p338, %p339
      %p341 = scmp.ne.s32.totalorder %s333, %s335
      %p342 = scmp.eq.s32.totalorder %s47, 1
      %p343 = por %p341, %p342
      %p344 = scmp.ne.s32.totalorder %s335, %s336
      %p345 = scmp.eq.s32.totalorder %s47, 0
      %p346 = por %p344, %p345
      %p347 = scmp.ne.s32.totalorder %s335, %s336
      %p348 = scmp.eq.s32.totalorder %s48, 1
      %p349 = por %p347, %p348
      %p351 = scmp.ne.s32.totalorder %s336, %s350
      %p352 = scmp.eq.s32.totalorder %s48, 0
      %p353 = por %p351, %p352
      %s354 = ssub.s32 %s42, %s49
      %p355 = scmp.eq.s32.totalorder %s354, 0
      %s357 = sadd.s32 %s356, 1
      %s358 = scalar_select %p355, %s356, %s357
      %p361 = pneg %p355
      %p362 = scmp.eq.s32.totalorder %s42, 1
      %p363 = por %p361, %p362
      %p364 = scmp.ne.s32.totalorder %s356, %s359
      %p365 = scmp.eq.s32.totalorder %s42, 0
      %p366 = por %p364, %p365
      %p367 = scmp.ne.s32.totalorder %s356, %s359
      %p368 = scmp.eq.s32.totalorder %s47, 1
      %p369 = por %p367, %p368
      %p370 = scmp.ne.s32.totalorder %s359, %s360
      %p371 = scmp.eq.s32.totalorder %s47, 0
      %p372 = por %p370, %p371
      %p373 = scmp.ne.s32.totalorder %s359, %s360
      %p374 = scmp.eq.s32.totalorder %s48, 1
      %p375 = por %p373, %p374
      %p377 = scmp.ne.s32.totalorder %s360, %s376
      %p378 = scmp.eq.s32.totalorder %s48, 0
      %p379 = por %p377, %p378
      %s380 = ssub.s32 %s42, %s49
      %p381 = scmp.eq.s32.totalorder %s380, 0
      %s383 = sadd.s32 %s382, 1
      %s384 = scalar_select %p381, %s382, %s383
      %p387 = pneg %p381
      %p388 = scmp.eq.s32.totalorder %s42, 1
      %p389 = por %p387, %p388
      %p390 = scmp.ne.s32.totalorder %s382, %s385
      %p391 = scmp.eq.s32.totalorder %s42, 0
      %p392 = por %p390, %p391
      %p393 = scmp.ne.s32.totalorder %s382, %s385
      %p394 = scmp.eq.s32.totalorder %s47, 1
      %p395 = por %p393, %p394
      %p396 = scmp.ne.s32.totalorder %s385, %s386
      %p397 = scmp.eq.s32.totalorder %s47, 0
      %p398 = por %p396, %p397
      %p399 = scmp.ne.s32.totalorder %s385, %s386
      %p400 = scmp.eq.s32.totalorder %s48, 1
      %p401 = por %p399, %p400
      %p403 = scmp.ne.s32.totalorder %s386, %s402
      %p404 = scmp.eq.s32.totalorder %s48, 0
      %p405 = por %p403, %p404
      %s406 = ssub.s32 %s42, %s49
      %p407 = scmp.eq.s32.totalorder %s406, 0
      %s409 = sadd.s32 %s408, 1
      %s410 = scalar_select %p407, %s408, %s409
      %p413 = pneg %p407
      %p414 = scmp.eq.s32.totalorder %s42, 1
      %p415 = por %p413, %p414
      %p416 = scmp.ne.s32.totalorder %s408, %s411
      %p417 = scmp.eq.s32.totalorder %s42, 0
      %p418 = por %p416, %p417
      %p419 = scmp.ne.s32.totalorder %s408, %s411
      %p420 = scmp.eq.s32.totalorder %s47, 1
      %p421 = por %p419, %p420
      %p422 = scmp.ne.s32.totalorder %s411, %s412
      %p423 = scmp.eq.s32.totalorder %s47, 0
      %p424 = por %p422, %p423
      %p425 = scmp.ne.s32.totalorder %s411, %s412
      %p426 = scmp.eq.s32.totalorder %s48, 1
      %p427 = por %p425, %p426
      %p429 = scmp.ne.s32.totalorder %s412, %s428
      %p430 = scmp.eq.s32.totalorder %s48, 0
      %p431 = por %p429, %p430
      %p432 = scmp.le.s32.totalorder 1, %s42
      %p433 = scmp.lt.s32.totalorder %s42, 3
      %p434 = pnand %p432, %p433
      %p435 = pneg %p434
      // Predicated region
      $region9: #{tpu_custom_call.1} parent=5 // pred_check
        _
      $region10: #{tpu_custom_call.1} parent=5 // pred_check_branch
        %437 = sbr.rel (%p434) target = $region12
      $region11: #{tpu_custom_call.1} parent=5 // pred_region
        %s438 = ssub.s32 %s42, 1
        // Predicated region
        $region13: #{tpu_custom_call.1} parent=11 // pred_check
          %p439 = pneg %p115
        $region14: #{tpu_custom_call.1} parent=11 // pred_check_branch
          %441 = sbr.rel (%p439) target = $region16
        $region15: #{tpu_custom_call.1} parent=11 // pred_region
          %s443 = ssub.s32 6144, 6144
          %444 = vsyncadd [#allocation7], %s443
          %s445 = sshll.u32 [#allocation8], 4
          %s446 = int_to_ptr.vmem [resolvable:$true] %s445
          %451 = dma.hbm_to_vmem [thread:$0]  %s2, 6144, %s446, [#allocation7], 64, 64, 4
        $region16: #{tpu_custom_call.1} parent=11 // pred_fallthru
          _
        // Predicated region
        $region17: #{tpu_custom_call.1} parent=11 // pred_check
          %p452 = pneg %p136
        $region18: #{tpu_custom_call.1} parent=11 // pred_check_branch
          %454 = sbr.rel (%p452) target = $region20
        $region19: #{tpu_custom_call.1} parent=11 // pred_region
          %s456 = ssub.s32 16, 16
          %457 = vsyncadd [#allocation10], %s456
          %s459 = sshll.u32 [#allocation9], 4
          %s460 = int_to_ptr.vmem [resolvable:$true] %s459
          %462 = dma.hbm_to_vmem [thread:$0]  %s3, 16, %s460, [#allocation10]
        $region20: #{tpu_custom_call.1} parent=11 // pred_fallthru
          _
        // Predicated region
        $region21: #{tpu_custom_call.1} parent=11 // pred_check
          %p463 = pneg %p157
        $region22: #{tpu_custom_call.1} parent=11 // pred_check_branch
          %465 = sbr.rel (%p463) target = $region24
        $region23: #{tpu_custom_call.1} parent=11 // pred_region
          %s467 = ssub.s32 12288, 12288
          %468 = vsyncadd [#allocation10], %s467
          %s469 = sshll.u32 [#allocation11], 4
          %s470 = int_to_ptr.vmem [resolvable:$true] %s469
          %475 = dma.hbm_to_vmem [thread:$0]  %s4, 12288, %s470, [#allocation10], 256, 256, 16
        $region24: #{tpu_custom_call.1} parent=11 // pred_fallthru
          _
        // Predicated region
        $region25: #{tpu_custom_call.1} parent=11 // pred_check
          %p476 = pneg %p178
        $region26: #{tpu_custom_call.1} parent=11 // pred_check_branch
          %478 = sbr.rel (%p476) target = $region28
        $region27: #{tpu_custom_call.1} parent=11 // pred_region
          %s480 = ssub.s32 64, 64
          %481 = vsyncadd [#allocation13], %s480
          %s483 = sshll.u32 [#allocation12], 4
          %s484 = int_to_ptr.vmem [resolvable:$true] %s483
          %486 = dma.hbm_to_vmem [thread:$0]  %s5, 64, %s484, [#allocation13]
        $region28: #{tpu_custom_call.1} parent=11 // pred_fallthru
          _
        // Predicated region
        $region29: #{tpu_custom_call.1} parent=11 // pred_check
          %p487 = pneg %p199
        $region30: #{tpu_custom_call.1} parent=11 // pred_check_branch
          %489 = sbr.rel (%p487) target = $region32
        $region31: #{tpu_custom_call.1} parent=11 // pred_region
          %s491 = ssub.s32 4096, 4096
          %492 = vsyncadd [#allocation13], %s491
          %s493 = sshll.u32 [#allocation14], 4
          %s494 = int_to_ptr.vmem [resolvable:$true] %s493
          %499 = dma.hbm_to_vmem [thread:$0]  %s6, 4096, %s494, [#allocation13], 128, 128, 8
        $region32: #{tpu_custom_call.1} parent=11 // pred_fallthru
          _
        // Predicated region
        $region33: #{tpu_custom_call.1} parent=11 // pred_check
          %p500 = pneg %p220
        $region34: #{tpu_custom_call.1} parent=11 // pred_check_branch
          %502 = sbr.rel (%p500) target = $region36
        $region35: #{tpu_custom_call.1} parent=11 // pred_region
          %s504 = ssub.s32 32, 32
          %505 = vsyncadd [#allocation16], %s504
          %s507 = sshll.u32 [#allocation15], 4
          %s508 = int_to_ptr.vmem [resolvable:$true] %s507
          %510 = dma.hbm_to_vmem [thread:$0]  %s7, 32, %s508, [#allocation16]
        $region36: #{tpu_custom_call.1} parent=11 // pred_fallthru
          _
        // Predicated region
        $region37: #{tpu_custom_call.1} parent=11 // pred_check
          %p511 = pneg %p241
        $region38: #{tpu_custom_call.1} parent=11 // pred_check_branch
          %513 = sbr.rel (%p511) target = $region40
        $region39: #{tpu_custom_call.1} parent=11 // pred_region
          %s515 = ssub.s32 6144, 6144
          %516 = vsyncadd [#allocation16], %s515
          %s517 = sshll.u32 [#allocation17], 4
          %s518 = int_to_ptr.vmem [resolvable:$true] %s517
          %523 = dma.hbm_to_vmem [thread:$0]  %s8, 6144, %s518, [#allocation16], 64, 64, 4
        $region40: #{tpu_custom_call.1} parent=11 // pred_fallthru
          _
        // Predicated region
        $region41: #{tpu_custom_call.1} parent=11 // pred_check
          %p524 = pneg %p262
        $region42: #{tpu_custom_call.1} parent=11 // pred_check_branch
          %526 = sbr.rel (%p524) target = $region44
        $region43: #{tpu_custom_call.1} parent=11 // pred_region
          %s528 = ssub.s32 16, 16
          %529 = vsyncadd [#allocation19], %s528
          %s531 = sshll.u32 [#allocation18], 4
          %s532 = int_to_ptr.vmem [resolvable:$true] %s531
          %534 = dma.hbm_to_vmem [thread:$0]  %s9, 16, %s532, [#allocation19]
        $region44: #{tpu_custom_call.1} parent=11 // pred_fallthru
          _
        // Predicated region
        $region45: #{tpu_custom_call.1} parent=11 // pred_check
          %p535 = pneg %p283
        $region46: #{tpu_custom_call.1} parent=11 // pred_check_branch
          %537 = sbr.rel (%p535) target = $region48
        $region47: #{tpu_custom_call.1} parent=11 // pred_region
          %s539 = ssub.s32 3072, 3072
          %540 = vsyncadd [#allocation19], %s539
          %s541 = sshll.u32 [#allocation20], 4
          %s542 = int_to_ptr.vmem [resolvable:$true] %s541
          %547 = dma.hbm_to_vmem [thread:$0]  %s10, 3072, %s542, [#allocation19], 64, 64, 4
        $region48: #{tpu_custom_call.1} parent=11 // pred_fallthru
          _
        // Predicated region
        $region49: #{tpu_custom_call.1} parent=11 // pred_check
          %p548 = pneg %p304
        $region50: #{tpu_custom_call.1} parent=11 // pred_check_branch
          %550 = sbr.rel (%p548) target = $region52
        $region51: #{tpu_custom_call.1} parent=11 // pred_region
          %s552 = ssub.s32 16, 16
          %553 = vsyncadd [#allocation22], %s552
          %s555 = sshll.u32 [#allocation21], 4
          %s556 = int_to_ptr.vmem [resolvable:$true] %s555
          %558 = dma.hbm_to_vmem [thread:$0]  %s11, 16, %s556, [#allocation22]
        $region52: #{tpu_custom_call.1} parent=11 // pred_fallthru
          _
        // Predicated region
        $region53: #{tpu_custom_call.1} parent=11 // pred_check
          %p559 = pneg %p325
        $region54: #{tpu_custom_call.1} parent=11 // pred_check_branch
          %561 = sbr.rel (%p559) target = $region56
        $region55: #{tpu_custom_call.1} parent=11 // pred_region
          %s563 = ssub.s32 16, 16
          %564 = vsyncadd [#allocation22], %s563
          %s566 = sshll.u32 [#allocation23], 4
          %s567 = int_to_ptr.vmem [resolvable:$true] %s566
          %569 = dma.hbm_to_vmem [thread:$0]  %s12, 16, %s567, [#allocation22]
        $region56: #{tpu_custom_call.1} parent=11 // pred_fallthru
          _
        // Predicated region
        $region57: #{tpu_custom_call.1} parent=11 // pred_check
          %p570 = pneg %p346
        $region58: #{tpu_custom_call.1} parent=11 // pred_check_branch
          %572 = sbr.rel (%p570) target = $region60
        $region59: #{tpu_custom_call.1} parent=11 // pred_region
          _
        $region60: #{tpu_custom_call.1} parent=11 // pred_fallthru
          _
      $region12: #{tpu_custom_call.1} parent=5 // pred_fallthru
        _
      %p573 = scmp.lt.s32.totalorder %s42, 2
      // Predicated region
      $region61: #{tpu_custom_call.1} parent=5 // pred_check
        %p574 = pneg %p573
      $region62: #{tpu_custom_call.1} parent=5 // pred_check_branch
        %576 = sbr.rel (%p574) target = $region64
      $region63: #{tpu_custom_call.1} parent=5 // pred_region
        // Predicated region
        $region65: #{tpu_custom_call.1} parent=63 // pred_check
          %p577 = pneg %p62
        $region66: #{tpu_custom_call.1} parent=63 // pred_check_branch
          %579 = sbr.rel (%p577) target = $region68
        $region67: #{tpu_custom_call.1} parent=63 // pred_region
          %s580 = sand.u32 %s52, 1
          %s581 = scalar_lea.sflag [#allocation4], %s580
          %s582 = sand.u32 %s52, 1
          %s583 = smul.addr %s582, 32
          %s584 = scalar_lea.vmem [#allocation3], %s583
          %s586 = ssub.s32 512, 512
          %587 = vsyncadd %s581, %s586
          %s588 = smul.addr %s42, 4
          %s589 = smul.addr %s588, 128
          %s590 = scalar_lea.hbm %s0, %s589
          %s591 = sshll.u32 %s584, 4
          %s592 = int_to_ptr.vmem [resolvable:$true] %s591
          %597 = dma.hbm_to_vmem [thread:$0]  %s590, 512, %s592, %s581, 256, 256, 16
        $region68: #{tpu_custom_call.1} parent=63 // pred_fallthru
          _
        // Predicated region
        $region69: #{tpu_custom_call.1} parent=63 // pred_check
          %p598 = pneg %p88
        $region70: #{tpu_custom_call.1} parent=63 // pred_check_branch
          %600 = sbr.rel (%p598) target = $region72
        $region71: #{tpu_custom_call.1} parent=63 // pred_region
          %s601 = sand.u32 %s42, 1
          %s602 = scalar_lea.sflag [#allocation7], %s601
          %s603 = sand.u32 %s78, 1
          %s604 = smul.addr %s603, 32
          %s605 = scalar_lea.vmem [#allocation6], %s604
          %s607 = ssub.s32 512, 512
          %608 = vsyncadd %s602, %s607
          %s609 = smul.addr %s42, 4
          %s610 = smul.addr %s609, 128
          %s611 = scalar_lea.hbm %s1, %s610
          %s612 = sshll.u32 %s605, 4
          %s613 = int_to_ptr.vmem [resolvable:$true] %s612
          %618 = dma.hbm_to_vmem [thread:$0]  %s611, 512, %s613, %s602, 256, 256, 16
        $region72: #{tpu_custom_call.1} parent=63 // pred_fallthru
          _
      $region64: #{tpu_custom_call.1} parent=5 // pred_fallthru
        _
      %p619 = scmp.le.s32.totalorder 1, %s42
      %p620 = scmp.lt.s32.totalorder %s42, 3
      %p621 = pnand %p619, %p620
      %p622 = pneg %p621
      // Predicated region
      $region73: #{tpu_custom_call.1} parent=5 // pred_check
        _
      $region74: #{tpu_custom_call.1} parent=5 // pred_check_branch
        %624 = sbr.rel (%p621) target = $region76
      $region75: #{tpu_custom_call.1} parent=5 // pred_region
        %s625 = ssub.s32 %s42, 1
        %s626 = sand.u32 %s55, 1
        %s627 = scalar_lea.sflag [#allocation4], %s626
        %s628 = sand.u32 %s55, 1
        %s629 = smul.addr %s628, 32
        %s630 = scalar_lea.vmem [#allocation3], %s629
        // Predicated region
        $region77: #{tpu_custom_call.1} parent=75 // pred_check
          %p631 = pneg %p68
        $region78: #{tpu_custom_call.1} parent=75 // pred_check_branch
          %633 = sbr.rel (%p631) target = $region80
        $region79: #{tpu_custom_call.1} parent=75 // pred_region
          %634 = dma.done %s627, 512
        $region80: #{tpu_custom_call.1} parent=75 // pred_fallthru
          _
        %s635 = sand.u32 %s47, 1
        %s636 = scalar_lea.sflag [#allocation7], %s635
        %s637 = sand.u32 %s81, 1
        %s638 = smul.addr %s637, 32
        %s639 = scalar_lea.vmem [#allocation6], %s638
        // Predicated region
        $region81: #{tpu_custom_call.1} parent=75 // pred_check
          %p640 = pneg %p94
        $region82: #{tpu_custom_call.1} parent=75 // pred_check_branch
          %642 = sbr.rel (%p640) target = $region84
        $region83: #{tpu_custom_call.1} parent=75 // pred_region
          %643 = dma.done %s636, 512
        $region84: #{tpu_custom_call.1} parent=75 // pred_fallthru
          _
        // Predicated region
        $region85: #{tpu_custom_call.1} parent=75 // pred_check
          %p644 = pneg %p115
        $region86: #{tpu_custom_call.1} parent=75 // pred_check_branch
          %646 = sbr.rel (%p644) target = $region88
        $region87: #{tpu_custom_call.1} parent=75 // pred_region
          %647 = dma.done [#allocation7], 6144
        $region88: #{tpu_custom_call.1} parent=75 // pred_fallthru
          _
        // Predicated region
        $region89: #{tpu_custom_call.1} parent=75 // pred_check
          %p648 = pneg %p136
        $region90: #{tpu_custom_call.1} parent=75 // pred_check_branch
          %650 = sbr.rel (%p648) target = $region92
        $region91: #{tpu_custom_call.1} parent=75 // pred_region
          %651 = dma.done [#allocation10], 16
        $region92: #{tpu_custom_call.1} parent=75 // pred_fallthru
          _
        // Predicated region
        $region93: #{tpu_custom_call.1} parent=75 // pred_check
          %p652 = pneg %p157
        $region94: #{tpu_custom_call.1} parent=75 // pred_check_branch
          %654 = sbr.rel (%p652) target = $region96
        $region95: #{tpu_custom_call.1} parent=75 // pred_region
          %655 = dma.done [#allocation10], 12288
        $region96: #{tpu_custom_call.1} parent=75 // pred_fallthru
          _
        // Predicated region
        $region97: #{tpu_custom_call.1} parent=75 // pred_check
          %p656 = pneg %p178
        $region98: #{tpu_custom_call.1} parent=75 // pred_check_branch
          %658 = sbr.rel (%p656) target = $region100
        $region99: #{tpu_custom_call.1} parent=75 // pred_region
          %659 = dma.done [#allocation13], 64
        $region100: #{tpu_custom_call.1} parent=75 // pred_fallthru
          _
        // Predicated region
        $region101: #{tpu_custom_call.1} parent=75 // pred_check
          %p660 = pneg %p199
        $region102: #{tpu_custom_call.1} parent=75 // pred_check_branch
          %662 = sbr.rel (%p660) target = $region104
        $region103: #{tpu_custom_call.1} parent=75 // pred_region
          %663 = dma.done [#allocation13], 4096
        $region104: #{tpu_custom_call.1} parent=75 // pred_fallthru
          _
        // Predicated region
        $region105: #{tpu_custom_call.1} parent=75 // pred_check
          %p664 = pneg %p220
        $region106: #{tpu_custom_call.1} parent=75 // pred_check_branch
          %666 = sbr.rel (%p664) target = $region108
        $region107: #{tpu_custom_call.1} parent=75 // pred_region
          %667 = dma.done [#allocation16], 32
        $region108: #{tpu_custom_call.1} parent=75 // pred_fallthru
          _
        // Predicated region
        $region109: #{tpu_custom_call.1} parent=75 // pred_check
          %p668 = pneg %p241
        $region110: #{tpu_custom_call.1} parent=75 // pred_check_branch
          %670 = sbr.rel (%p668) target = $region112
        $region111: #{tpu_custom_call.1} parent=75 // pred_region
          %671 = dma.done [#allocation16], 6144
        $region112: #{tpu_custom_call.1} parent=75 // pred_fallthru
          _
        // Predicated region
        $region113: #{tpu_custom_call.1} parent=75 // pred_check
          %p672 = pneg %p262
        $region114: #{tpu_custom_call.1} parent=75 // pred_check_branch
          %674 = sbr.rel (%p672) target = $region116
        $region115: #{tpu_custom_call.1} parent=75 // pred_region
          %675 = dma.done [#allocation19], 16
        $region116: #{tpu_custom_call.1} parent=75 // pred_fallthru
          _
        // Predicated region
        $region117: #{tpu_custom_call.1} parent=75 // pred_check
          %p676 = pneg %p283
        $region118: #{tpu_custom_call.1} parent=75 // pred_check_branch
          %678 = sbr.rel (%p676) target = $region120
        $region119: #{tpu_custom_call.1} parent=75 // pred_region
          %679 = dma.done [#allocation19], 3072
        $region120: #{tpu_custom_call.1} parent=75 // pred_fallthru
          _
        // Predicated region
        $region121: #{tpu_custom_call.1} parent=75 // pred_check
          %p680 = pneg %p304
        $region122: #{tpu_custom_call.1} parent=75 // pred_check_branch
          %682 = sbr.rel (%p680) target = $region124
        $region123: #{tpu_custom_call.1} parent=75 // pred_region
          %683 = dma.done [#allocation22], 16
        $region124: #{tpu_custom_call.1} parent=75 // pred_fallthru
          _
        // Predicated region
        $region125: #{tpu_custom_call.1} parent=75 // pred_check
          %p684 = pneg %p325
        $region126: #{tpu_custom_call.1} parent=75 // pred_check_branch
          %686 = sbr.rel (%p684) target = $region128
        $region127: #{tpu_custom_call.1} parent=75 // pred_region
          %687 = dma.done [#allocation22], 16
        $region128: #{tpu_custom_call.1} parent=75 // pred_fallthru
          _
        %s688 = sand.u32 %s55, 1
        %s689 = scalar_lea.sflag [#allocation4], %s688
        %s690 = sand.u32 %s55, 1
        %s691 = smul.addr %s690, 32
        %s692 = scalar_lea.vmem [#allocation3], %s691
        %p693 = pneg %p68
        %p694 = pneg %p65
        %s695 = sand.u32 %s47, 1
        %s696 = scalar_lea.sflag [#allocation7], %s695
        %s697 = sand.u32 %s81, 1
        %s698 = smul.addr %s697, 32
        %s699 = scalar_lea.vmem [#allocation6], %s698
        %p700 = pneg %p94
        %p701 = pneg %p91
        %p702 = pneg %p115
        %p703 = pneg %p112
        %p704 = pneg %p136
        %p705 = pneg %p133
        %p706 = pneg %p157
        %p707 = pneg %p154
        %p708 = pneg %p178
        %p709 = pneg %p175
        %p710 = pneg %p199
        %p711 = pneg %p196
        %p712 = pneg %p220
        %p713 = pneg %p217
        %p714 = pneg %p241
        %p715 = pneg %p238
        %p716 = pneg %p262
        %p717 = pneg %p259
        %p718 = pneg %p283
        %p719 = pneg %p280
        %p720 = pneg %p304
        %p721 = pneg %p301
        %p722 = pneg %p325
        %p723 = pneg %p322
        %p724 = pneg %p346
        %p725 = pneg %p343
        %p726 = pneg %p372
        %p727 = pneg %p369
        %s728 = sand.u32 %s359, 1
        %s729 = scalar_lea.sflag [#allocation5], %s728
        %s730 = sand.u32 %s359, 1
        %s731 = scalar_lea.vmem [#allocation24], %s730
        %p732 = pneg %p398
        %p733 = pneg %p395
        %s734 = sand.u32 %s47, 1
        %s735 = scalar_lea.sflag [#allocation26], %s734
        %s736 = sand.u32 %s385, 1
        %s737 = smul.addr %s736, 32
        %s738 = scalar_lea.vmem [#allocation25], %s737
        %p739 = pneg %p424
        %p740 = pneg %p421
        %s741 = sand.u32 %s47, 1
        %s742 = scalar_lea.sflag [#allocation26], %s741
        %s743 = sand.u32 %s411, 1
        %s744 = smul.addr %s743, 32
        %s745 = scalar_lea.vmem [#allocation27], %s744
        %v747 = vld [vmem:[%s630] sm:$0xff]
        %v748 = vld [vmem:[%s630 + $0x8] sm:$0xff]
        %v749 = vld [vmem:[%s630 + $0x10] sm:$0xff]
        %v750 = vld [vmem:[%s630 + $0x18] sm:$0xff]
        %v751 = vld [vmem:[%s639] sm:$0xff]
        %v752 = vld [vmem:[%s639 + $0x8] sm:$0xff]
        %v753 = vld [vmem:[%s639 + $0x10] sm:$0xff]
        %v754 = vld [vmem:[%s639 + $0x18] sm:$0xff]
        %vm759 = vcmask 1040384
        %v760 = vrot.slane %v747, 7
        %v761 = vrot.slane %v748, 7
        %v762 = vrot.slane %v749, 7
        %v763 = vsel %vm759, %v760, %v762
        %v764 = vrot.slane %v750, 7
        %v765 = vsel %vm759, %v761, %v764
        %v770 = vsel %vm759, 0.0, %v760
        %v771 = vsel %vm759, 0.0, %v761
        %vm772 = vcmask 1046528
        %v773 = vrot.slane %v747, 1
        %v774 = vrot.slane %v749, 1
        %v775 = vsel %vm772, %v773, %v774
        %v776 = vrot.slane %v748, 1
        %v777 = vrot.slane %v750, 1
        %v778 = vsel %vm772, %v776, %v777
        %v783 = vsel %vm772, %v774, 0.0
        %v784 = vsel %vm772, %v777, 0.0
        %v785 = vpack.c.bf16 %v763, %v770
        %v786 = vpack.c.bf16 %v765, %v771
        %v787 = vpack.c.bf16 %v749, %v747
        %v788 = vpack.c.bf16 %v750, %v748
        %v789 = vpack.c.bf16 %v783, %v775
        %v790 = vpack.c.bf16 %v784, %v778
        %v791 = vld [vmem:[#allocation8] sm:$0xf]
        %v792 = vld [vmem:[#allocation8 + $0x4] sm:$0xf]
        %v793 = vld [vmem:[#allocation8 + $0x8] sm:$0xf]
        %v794 = vld [vmem:[#allocation8 + $0xc] sm:$0xf]
        %v795 = vld [vmem:[#allocation8 + $0x10] sm:$0xf]
        %v796 = vld [vmem:[#allocation8 + $0x14] sm:$0xf]
        %v797 = vld [vmem:[#allocation8 + $0x18] sm:$0xf]
        %v798 = vld [vmem:[#allocation8 + $0x1c] sm:$0xf]
        %v799 = vld [vmem:[#allocation8 + $0x20] sm:$0xf]
        %v800 = vld [vmem:[#allocation8 + $0x24] sm:$0xf]
        %v801 = vld [vmem:[#allocation8 + $0x28] sm:$0xf]
        %v802 = vld [vmem:[#allocation8 + $0x2c] sm:$0xf]
        %v803 = vld [vmem:[#allocation8 + $0x30] sm:$0xf]
        %v804 = vld [vmem:[#allocation8 + $0x34] sm:$0xf]
        %v805 = vld [vmem:[#allocation8 + $0x38] sm:$0xf]
        %v806 = vld [vmem:[#allocation8 + $0x3c] sm:$0xf]
        %v807 = vld [vmem:[#allocation8 + $0x40] sm:$0xf]
        %v808 = vld [vmem:[#allocation8 + $0x44] sm:$0xf]
        %v809 = vld [vmem:[#allocation8 + $0x48] sm:$0xf]
        %v810 = vld [vmem:[#allocation8 + $0x4c] sm:$0xf]
        %v811 = vld [vmem:[#allocation8 + $0x50] sm:$0xf]
        %v812 = vld [vmem:[#allocation8 + $0x54] sm:$0xf]
        %v813 = vld [vmem:[#allocation8 + $0x58] sm:$0xf]
        %v814 = vld [vmem:[#allocation8 + $0x5c] sm:$0xf]
        %v815 = vld [vmem:[#allocation8 + $0x60] sm:$0xf]
        %v816 = vld [vmem:[#allocation8 + $0x64] sm:$0xf]
        %v817 = vld [vmem:[#allocation8 + $0x68] sm:$0xf]
        %v818 = vld [vmem:[#allocation8 + $0x6c] sm:$0xf]
        %v819 = vld [vmem:[#allocation8 + $0x70] sm:$0xf]
        %v820 = vld [vmem:[#allocation8 + $0x74] sm:$0xf]
        %v821 = vld [vmem:[#allocation8 + $0x78] sm:$0xf]
        %v822 = vld [vmem:[#allocation8 + $0x7c] sm:$0xf]
        %v823 = vld [vmem:[#allocation8 + $0x80] sm:$0xf]
        %v824 = vld [vmem:[#allocation8 + $0x84] sm:$0xf]
        %v825 = vld [vmem:[#allocation8 + $0x88] sm:$0xf]
        %v826 = vld [vmem:[#allocation8 + $0x8c] sm:$0xf]
        %v827 = vld [vmem:[#allocation8 + $0x90] sm:$0xf]
        %v828 = vld [vmem:[#allocation8 + $0x94] sm:$0xf]
        %v829 = vld [vmem:[#allocation8 + $0x98] sm:$0xf]
        %v830 = vld [vmem:[#allocation8 + $0x9c] sm:$0xf]
        %v831 = vld [vmem:[#allocation8 + $0xa0] sm:$0xf]
        %v832 = vld [vmem:[#allocation8 + $0xa4] sm:$0xf]
        %v833 = vld [vmem:[#allocation8 + $0xa8] sm:$0xf]
        %v834 = vld [vmem:[#allocation8 + $0xac] sm:$0xf]
        %v835 = vld [vmem:[#allocation8 + $0xb0] sm:$0xf]
        %v836 = vld [vmem:[#allocation8 + $0xb4] sm:$0xf]
        %v837 = vld [vmem:[#allocation8 + $0xb8] sm:$0xf]
        %v838 = vld [vmem:[#allocation8 + $0xbc] sm:$0xf]
        %v839 = vld [vmem:[#allocation8 + $0xc0] sm:$0xf]
        %v840 = vld [vmem:[#allocation8 + $0xc4] sm:$0xf]
        %v841 = vld [vmem:[#allocation8 + $0xc8] sm:$0xf]
        %v842 = vld [vmem:[#allocation8 + $0xcc] sm:$0xf]
        %v843 = vld [vmem:[#allocation8 + $0xd0] sm:$0xf]
        %v844 = vld [vmem:[#allocation8 + $0xd4] sm:$0xf]
        %v845 = vld [vmem:[#allocation8 + $0xd8] sm:$0xf]
        %v846 = vld [vmem:[#allocation8 + $0xdc] sm:$0xf]
        %v847 = vld [vmem:[#allocation8 + $0xe0] sm:$0xf]
        %v848 = vld [vmem:[#allocation8 + $0xe4] sm:$0xf]
        %v849 = vld [vmem:[#allocation8 + $0xe8] sm:$0xf]
        %v850 = vld [vmem:[#allocation8 + $0xec] sm:$0xf]
        %v851 = vld [vmem:[#allocation8 + $0xf0] sm:$0xf]
        %v852 = vld [vmem:[#allocation8 + $0xf4] sm:$0xf]
        %v853 = vld [vmem:[#allocation8 + $0xf8] sm:$0xf]
        %v854 = vld [vmem:[#allocation8 + $0xfc] sm:$0xf]
        %v855 = vld [vmem:[#allocation8 + $0x100] sm:$0xf]
        %v856 = vld [vmem:[#allocation8 + $0x104] sm:$0xf]
        %v857 = vld [vmem:[#allocation8 + $0x108] sm:$0xf]
        %v858 = vld [vmem:[#allocation8 + $0x10c] sm:$0xf]
        %v859 = vld [vmem:[#allocation8 + $0x110] sm:$0xf]
        %v860 = vld [vmem:[#allocation8 + $0x114] sm:$0xf]
        %v861 = vld [vmem:[#allocation8 + $0x118] sm:$0xf]
        %v862 = vld [vmem:[#allocation8 + $0x11c] sm:$0xf]
        %v863 = vld [vmem:[#allocation8 + $0x120] sm:$0xf]
        %v864 = vld [vmem:[#allocation8 + $0x124] sm:$0xf]
        %v865 = vld [vmem:[#allocation8 + $0x128] sm:$0xf]
        %v866 = vld [vmem:[#allocation8 + $0x12c] sm:$0xf]
        %v867 = vld [vmem:[#allocation8 + $0x130] sm:$0xf]
        %v868 = vld [vmem:[#allocation8 + $0x134] sm:$0xf]
        %v869 = vld [vmem:[#allocation8 + $0x138] sm:$0xf]
        %v870 = vld [vmem:[#allocation8 + $0x13c] sm:$0xf]
        %v871 = vld [vmem:[#allocation8 + $0x140] sm:$0xf]
        %v872 = vld [vmem:[#allocation8 + $0x144] sm:$0xf]
        %v873 = vld [vmem:[#allocation8 + $0x148] sm:$0xf]
        %v874 = vld [vmem:[#allocation8 + $0x14c] sm:$0xf]
        %v875 = vld [vmem:[#allocation8 + $0x150] sm:$0xf]
        %v876 = vld [vmem:[#allocation8 + $0x154] sm:$0xf]
        %v877 = vld [vmem:[#allocation8 + $0x158] sm:$0xf]
        %v878 = vld [vmem:[#allocation8 + $0x15c] sm:$0xf]
        %v879 = vld [vmem:[#allocation8 + $0x160] sm:$0xf]
        %v880 = vld [vmem:[#allocation8 + $0x164] sm:$0xf]
        %v881 = vld [vmem:[#allocation8 + $0x168] sm:$0xf]
        %v882 = vld [vmem:[#allocation8 + $0x16c] sm:$0xf]
        %v883 = vld [vmem:[#allocation8 + $0x170] sm:$0xf]
        %v884 = vld [vmem:[#allocation8 + $0x174] sm:$0xf]
        %v885 = vld [vmem:[#allocation8 + $0x178] sm:$0xf]
        %v886 = vld [vmem:[#allocation8 + $0x17c] sm:$0xf]
        %v887 = vld [vmem:[#allocation9] sm:$0x1]
        %v889 = vlaneseq
        %v890 = vshrl.u32 %v889, 7
        %v891 = vsub.s32 0, %v890
        %v892 = vrot.slane %v887, %v891
        %v990 = vunpack.c.l.b16 %v791
        %v991 = vunpack.c.l.b16 %v792
        %v992 = vunpack.c.l.b16 %v793
        %v993 = vunpack.c.l.b16 %v794
        %v994 = vunpack.c.l.b16 %v795
        %v995 = vunpack.c.l.b16 %v796
        %v996 = vunpack.c.l.b16 %v797
        %v997 = vunpack.c.l.b16 %v798
        %v998 = vunpack.c.l.b16 %v799
        %v999 = vunpack.c.l.b16 %v800
        %v1000 = vunpack.c.l.b16 %v801
        %v1001 = vunpack.c.l.b16 %v802
        %v1002 = vunpack.c.l.b16 %v803
        %v1003 = vunpack.c.l.b16 %v804
        %v1004 = vunpack.c.l.b16 %v805
        %v1005 = vunpack.c.l.b16 %v806
        %v1006 = vunpack.c.l.b16 %v807
        %v1007 = vunpack.c.l.b16 %v808
        %v1008 = vunpack.c.l.b16 %v809
        %v1009 = vunpack.c.l.b16 %v810
        %v1010 = vunpack.c.l.b16 %v811
        %v1011 = vunpack.c.l.b16 %v812
        %v1012 = vunpack.c.l.b16 %v813
        %v1013 = vunpack.c.l.b16 %v814
        %v1014 = vunpack.c.l.b16 %v815
        %v1015 = vunpack.c.l.b16 %v816
        %v1016 = vunpack.c.l.b16 %v817
        %v1017 = vunpack.c.l.b16 %v818
        %v1018 = vunpack.c.l.b16 %v819
        %v1019 = vunpack.c.l.b16 %v820
        %v1020 = vunpack.c.l.b16 %v821
        %v1021 = vunpack.c.l.b16 %v822
        %v1022 = vunpack.c.l.b16 %v823
        %v1023 = vunpack.c.l.b16 %v824
        %v1024 = vunpack.c.l.b16 %v825
        %v1025 = vunpack.c.l.b16 %v826
        %v1026 = vunpack.c.l.b16 %v827
        %v1027 = vunpack.c.l.b16 %v828
        %v1028 = vunpack.c.l.b16 %v829
        %v1029 = vunpack.c.l.b16 %v830
        %v1030 = vunpack.c.l.b16 %v831
        %v1031 = vunpack.c.l.b16 %v832
        %v1032 = vunpack.c.l.b16 %v833
        %v1033 = vunpack.c.l.b16 %v834
        %v1034 = vunpack.c.l.b16 %v835
        %v1035 = vunpack.c.l.b16 %v836
        %v1036 = vunpack.c.l.b16 %v837
        %v1037 = vunpack.c.l.b16 %v838
        %v1038 = vunpack.c.l.b16 %v839
        %v1039 = vunpack.c.l.b16 %v840
        %v1040 = vunpack.c.l.b16 %v841
        %v1041 = vunpack.c.l.b16 %v842
        %v1042 = vunpack.c.l.b16 %v843
        %v1043 = vunpack.c.l.b16 %v844
        %v1044 = vunpack.c.l.b16 %v845
        %v1045 = vunpack.c.l.b16 %v846
        %v1046 = vunpack.c.l.b16 %v847
        %v1047 = vunpack.c.l.b16 %v848
        %v1048 = vunpack.c.l.b16 %v849
        %v1049 = vunpack.c.l.b16 %v850
        %v1050 = vunpack.c.l.b16 %v851
        %v1051 = vunpack.c.l.b16 %v852
        %v1052 = vunpack.c.l.b16 %v853
        %v1053 = vunpack.c.l.b16 %v854
        %v1054 = vunpack.c.l.b16 %v855
        %v1055 = vunpack.c.l.b16 %v856
        %v1056 = vunpack.c.l.b16 %v857
        %v1057 = vunpack.c.l.b16 %v858
        %v1058 = vunpack.c.l.b16 %v859
        %v1059 = vunpack.c.l.b16 %v860
        %v1060 = vunpack.c.l.b16 %v861
        %v1061 = vunpack.c.l.b16 %v862
        %v1062 = vunpack.c.l.b16 %v863
        %v1063 = vunpack.c.l.b16 %v864
        %v1064 = vunpack.c.l.b16 %v865
        %v1065 = vunpack.c.l.b16 %v866
        %v1066 = vunpack.c.l.b16 %v867
        %v1067 = vunpack.c.l.b16 %v868
        %v1068 = vunpack.c.l.b16 %v869
        %v1069 = vunpack.c.l.b16 %v870
        %v1070 = vunpack.c.l.b16 %v871
        %v1071 = vunpack.c.l.b16 %v872
        %v1072 = vunpack.c.l.b16 %v873
        %v1073 = vunpack.c.l.b16 %v874
        %v1074 = vunpack.c.l.b16 %v875
        %v1075 = vunpack.c.l.b16 %v876
        %v1076 = vunpack.c.l.b16 %v877
        %v1077 = vunpack.c.l.b16 %v878
        %v1078 = vunpack.c.l.b16 %v879
        %v1079 = vunpack.c.l.b16 %v880
        %v1080 = vunpack.c.l.b16 %v881
        %v1081 = vunpack.c.l.b16 %v882
        %v1082 = vunpack.c.l.b16 %v883
        %v1083 = vunpack.c.l.b16 %v884
        %v1084 = vunpack.c.l.b16 %v885
        %v1085 = vunpack.c.l.b16 %v886
        %v1086 = vpack.c.b16 %v991, %v990
        %v1087 = vpack.c.b16 %v993, %v992
        %v1088 = vpack.c.b16 %v995, %v994
        %v1089 = vpack.c.b16 %v997, %v996
        %v1090 = vpack.c.b16 %v999, %v998
        %v1091 = vpack.c.b16 %v1001, %v1000
        %v1092 = vpack.c.b16 %v1003, %v1002
        %v1093 = vpack.c.b16 %v1005, %v1004
        %v1094 = vpack.c.b16 %v1007, %v1006
        %v1095 = vpack.c.b16 %v1009, %v1008
        %v1096 = vpack.c.b16 %v1011, %v1010
        %v1097 = vpack.c.b16 %v1013, %v1012
        %v1098 = vpack.c.b16 %v1015, %v1014
        %v1099 = vpack.c.b16 %v1017, %v1016
        %v1100 = vpack.c.b16 %v1019, %v1018
        %v1101 = vpack.c.b16 %v1021, %v1020
        %v1102 = vpack.c.b16 %v1023, %v1022
        %v1103 = vpack.c.b16 %v1025, %v1024
        %v1104 = vpack.c.b16 %v1027, %v1026
        %v1105 = vpack.c.b16 %v1029, %v1028
        %v1106 = vpack.c.b16 %v1031, %v1030
        %v1107 = vpack.c.b16 %v1033, %v1032
        %v1108 = vpack.c.b16 %v1035, %v1034
        %v1109 = vpack.c.b16 %v1037, %v1036
        %v1110 = vpack.c.b16 %v1039, %v1038
        %v1111 = vpack.c.b16 %v1041, %v1040
        %v1112 = vpack.c.b16 %v1043, %v1042
        %v1113 = vpack.c.b16 %v1045, %v1044
        %v1114 = vpack.c.b16 %v1047, %v1046
        %v1115 = vpack.c.b16 %v1049, %v1048
        %v1116 = vpack.c.b16 %v1051, %v1050
        %v1117 = vpack.c.b16 %v1053, %v1052
        %v1118 = vpack.c.b16 %v1055, %v1054
        %v1119 = vpack.c.b16 %v1057, %v1056
        %v1120 = vpack.c.b16 %v1059, %v1058
        %v1121 = vpack.c.b16 %v1061, %v1060
        %v1122 = vpack.c.b16 %v1063, %v1062
        %v1123 = vpack.c.b16 %v1065, %v1064
        %v1124 = vpack.c.b16 %v1067, %v1066
        %v1125 = vpack.c.b16 %v1069, %v1068
        %v1126 = vpack.c.b16 %v1071, %v1070
        %v1127 = vpack.c.b16 %v1073, %v1072
        %v1128 = vpack.c.b16 %v1075, %v1074
        %v1129 = vpack.c.b16 %v1077, %v1076
        %v1130 = vpack.c.b16 %v1079, %v1078
        %v1131 = vpack.c.b16 %v1081, %v1080
        %v1132 = vpack.c.b16 %v1083, %v1082
        %v1133 = vpack.c.b16 %v1085, %v1084
        %1182 = vmatprep.subr.bf16.mxu0 0
        %1183 = vmatpush1.bf16.msra.mxu0 %v1086
        %1184 = vmatprep.subr.bf16.mxu0 0
        %1185 = vmatpush1.bf16.msra.mxu0 %v1087
        %1186 = vmatprep.subr.bf16.mxu0 0
        %1187 = vmatpush1.bf16.msra.mxu0 %v1088
        %1188 = vmatprep.subr.bf16.mxu0 0
        %1189 = vmatpush1.bf16.msra.mxu0 %v1089
        %1190 = vmatprep.subr.bf16.mxu0 0
        %1191 = vmatpush1.bf16.msra.mxu0 %v1090
        %1192 = vmatprep.subr.bf16.mxu0 0
        %1193 = vmatpush1.bf16.msra.mxu0 %v1091
        %1194 = vmatprep.subr.bf16.mxu0 0
        %1195 = vmatpush1.bf16.msra.mxu0 %v1092
        %1196 = vmatprep.subr.bf16.mxu0 0
        %1197 = vmatpush1.bf16.msra.mxu0 %v1093
        %1198 = vmatprep.subr.bf16.mxu0 0
        %1199 = vmatpush1.bf16.msra.mxu0 %v1094
        %1200 = vmatprep.subr.bf16.mxu0 0
        %1201 = vmatpush1.bf16.msra.mxu0 %v1095
        %1202 = vmatprep.subr.bf16.mxu0 0
        %1203 = vmatpush1.bf16.msra.mxu0 %v1096
        %1204 = vmatprep.subr.bf16.mxu0 0
        %1205 = vmatpush1.bf16.msra.mxu0 %v1097
        %1206 = vmatprep.subr.bf16.mxu0 0
        %1207 = vmatpush1.bf16.msra.mxu0 %v1098
        %1208 = vmatprep.subr.bf16.mxu0 0
        %1209 = vmatpush1.bf16.msra.mxu0 %v1099
        %1210 = vmatprep.subr.bf16.mxu0 0
        %1211 = vmatpush1.bf16.msra.mxu0 %v1100
        %1212 = vmatprep.subr.bf16.mxu0 0
        %1213 = vmatpush1.bf16.msra.mxu0 %v1101
        %1214 = vmatprep.mubr.bf16.mxu0 %v786
        %1215 = vmatmul.mubr.bf16.gmra.mrb[0].mxu0 %v785
        %v1216 = vpop.f32.mrb[0].mxu0
        %v1217 = vadd.f32 %v892, %v1216
        %v1218 = vpop.f32.mrb[0].mxu0
        %v1219 = vpop.f32.mrb[0].mxu0
        %v1220 = vadd.f32 %v892, %v1219
        %v1221 = vpop.f32.mrb[0].mxu0
        %1222 = vdwg.mxu0
        %1223 = vmatprep.subr.bf16.mxu0 0
        %1224 = vmatpush1.bf16.msra.mxu0 %v1102
        %1225 = vmatprep.subr.bf16.mxu0 0
        %1226 = vmatpush1.bf16.msra.mxu0 %v1103
        %1227 = vmatprep.subr.bf16.mxu0 0
        %1228 = vmatpush1.bf16.msra.mxu0 %v1104
        %1229 = vmatprep.subr.bf16.mxu0 0
        %1230 = vmatpush1.bf16.msra.mxu0 %v1105
        %1231 = vmatprep.subr.bf16.mxu0 0
        %1232 = vmatpush1.bf16.msra.mxu0 %v1106
        %1233 = vmatprep.subr.bf16.mxu0 0
        %1234 = vmatpush1.bf16.msra.mxu0 %v1107
        %1235 = vmatprep.subr.bf16.mxu0 0
        %1236 = vmatpush1.bf16.msra.mxu0 %v1108
        %1237 = vmatprep.subr.bf16.mxu0 0
        %1238 = vmatpush1.bf16.msra.mxu0 %v1109
        %1239 = vmatprep.subr.bf16.mxu0 0
        %1240 = vmatpush1.bf16.msra.mxu0 %v1110
        %1241 = vmatprep.subr.bf16.mxu0 0
        %1242 = vmatpush1.bf16.msra.mxu0 %v1111
        %1243 = vmatprep.subr.bf16.mxu0 0
        %1244 = vmatpush1.bf16.msra.mxu0 %v1112
        %1245 = vmatprep.subr.bf16.mxu0 0
        %1246 = vmatpush1.bf16.msra.mxu0 %v1113
        %1247 = vmatprep.subr.bf16.mxu0 0
        %1248 = vmatpush1.bf16.msra.mxu0 %v1114
        %1249 = vmatprep.subr.bf16.mxu0 0
        %1250 = vmatpush1.bf16.msra.mxu0 %v1115
        %1251 = vmatprep.subr.bf16.mxu0 0
        %1252 = vmatpush1.bf16.msra.mxu0 %v1116
        %1253 = vmatprep.subr.bf16.mxu0 0
        %1254 = vmatpush1.bf16.msra.mxu0 %v1117
        %1255 = vmatprep.mubr.bf16.mxu0 %v788
        %1256 = vmatmul.mubr.bf16.gmra.mrb[0].mxu0 %v787
        %v1257 = vpop.f32.mrb[0].mxu0
        %v1258 = vadd.f32 %v1217, %v1257
        %v1259 = vpop.f32.mrb[0].mxu0
        %v1260 = vpop.f32.mrb[0].mxu0
        %v1261 = vadd.f32 %v1220, %v1260
        %v1262 = vpop.f32.mrb[0].mxu0
        %1263 = vdwg.mxu0
        %1264 = vmatprep.subr.bf16.mxu0 0
        %1265 = vmatpush1.bf16.msra.mxu0 %v1118
        %1266 = vmatprep.subr.bf16.mxu0 0
        %1267 = vmatpush1.bf16.msra.mxu0 %v1119
        %1268 = vmatprep.subr.bf16.mxu0 0
        %1269 = vmatpush1.bf16.msra.mxu0 %v1120
        %1270 = vmatprep.subr.bf16.mxu0 0
        %1271 = vmatpush1.bf16.msra.mxu0 %v1121
        %1272 = vmatprep.subr.bf16.mxu0 0
        %1273 = vmatpush1.bf16.msra.mxu0 %v1122
        %1274 = vmatprep.subr.bf16.mxu0 0
        %1275 = vmatpush1.bf16.msra.mxu0 %v1123
        %1276 = vmatprep.subr.bf16.mxu0 0
        %1277 = vmatpush1.bf16.msra.mxu0 %v1124
        %1278 = vmatprep.subr.bf16.mxu0 0
        %1279 = vmatpush1.bf16.msra.mxu0 %v1125
        %1280 = vmatprep.subr.bf16.mxu0 0
        %1281 = vmatpush1.bf16.msra.mxu0 %v1126
        %1282 = vmatprep.subr.bf16.mxu0 0
        %1283 = vmatpush1.bf16.msra.mxu0 %v1127
        %1284 = vmatprep.subr.bf16.mxu0 0
        %1285 = vmatpush1.bf16.msra.mxu0 %v1128
        %1286 = vmatprep.subr.bf16.mxu0 0
        %1287 = vmatpush1.bf16.msra.mxu0 %v1129
        %1288 = vmatprep.subr.bf16.mxu0 0
        %1289 = vmatpush1.bf16.msra.mxu0 %v1130
        %1290 = vmatprep.subr.bf16.mxu0 0
        %1291 = vmatpush1.bf16.msra.mxu0 %v1131
        %1292 = vmatprep.subr.bf16.mxu0 0
        %1293 = vmatpush1.bf16.msra.mxu0 %v1132
        %1294 = vmatprep.subr.bf16.mxu0 0
        %1295 = vmatpush1.bf16.msra.mxu0 %v1133
        %1296 = vmatprep.mubr.bf16.mxu0 %v790
        %1297 = vmatmul.mubr.bf16.gmra.mrb[0].mxu0 %v789
        %v1298 = vpop.f32.mrb[0].mxu0
        %v1299 = vadd.f32 %v1258, %v1298
        %v1300 = vpop.f32.mrb[0].mxu0
        %v1301 = vpop.f32.mrb[0].mxu0
        %v1302 = vadd.f32 %v1261, %v1301
        %v1303 = vpop.f32.mrb[0].mxu0
        %1304 = vdwg.mxu0
        %vm1305 = vcmp.gt.f32.partialorder %v1299, 0.0
        %vm1306 = vcmp.gt.f32.partialorder %v1302, 0.0
        %v1307 = vmul.f32 %v1299, 0.2
        %v1308 = vmul.f32 %v1302, 0.2
        %v1309 = vsel %vm1305, %v1299, %v1307
        %v1310 = vsel %vm1306, %v1302, %v1308
        %v1313 = vrot.slane %v1309, 7
        %v1314 = vrot.slane %v1310, 7
        %v1315 = vsel %vm759, %v1313, %v1314
        %v1318 = vsel %vm759, 0.0, %v1313
        %v1319 = vrot.slane %v1309, 1
        %v1320 = vrot.slane %v1310, 1
        %v1321 = vsel %vm772, %v1319, %v1320
        %v1324 = vsel %vm772, %v1320, 0.0
        %v1325 = vpack.c.bf16 %v1315, %v1318
        %v1326 = vpack.c.bf16 %v1310, %v1309
        %v1327 = vpack.c.bf16 %v1324, %v1321
        %v1328 = vld [vmem:[#allocation11] sm:$0xff]
        %v1329 = vld [vmem:[#allocation11 + $0x8] sm:$0xff]
        %v1330 = vld [vmem:[#allocation11 + $0x10] sm:$0xff]
        %v1331 = vld [vmem:[#allocation11 + $0x18] sm:$0xff]
        %v1332 = vld [vmem:[#allocation11 + $0x20] sm:$0xff]
        %v1333 = vld [vmem:[#allocation11 + $0x28] sm:$0xff]
        %v1334 = vld [vmem:[#allocation11 + $0x30] sm:$0xff]
        %v1335 = vld [vmem:[#allocation11 + $0x38] sm:$0xff]
        %v1336 = vld [vmem:[#allocation11 + $0x40] sm:$0xff]
        %v1337 = vld [vmem:[#allocation11 + $0x48] sm:$0xff]
        %v1338 = vld [vmem:[#allocation11 + $0x50] sm:$0xff]
        %v1339 = vld [vmem:[#allocation11 + $0x58] sm:$0xff]
        %v1340 = vld [vmem:[#allocation11 + $0x60] sm:$0xff]
        %v1341 = vld [vmem:[#allocation11 + $0x68] sm:$0xff]
        %v1342 = vld [vmem:[#allocation11 + $0x70] sm:$0xff]
        %v1343 = vld [vmem:[#allocation11 + $0x78] sm:$0xff]
        %v1344 = vld [vmem:[#allocation11 + $0x80] sm:$0xff]
        %v1345 = vld [vmem:[#allocation11 + $0x88] sm:$0xff]
        %v1346 = vld [vmem:[#allocation11 + $0x90] sm:$0xff]
        %v1347 = vld [vmem:[#allocation11 + $0x98] sm:$0xff]
        %v1348 = vld [vmem:[#allocation11 + $0xa0] sm:$0xff]
        %v1349 = vld [vmem:[#allocation11 + $0xa8] sm:$0xff]
        %v1350 = vld [vmem:[#allocation11 + $0xb0] sm:$0xff]
        %v1351 = vld [vmem:[#allocation11 + $0xb8] sm:$0xff]
        %v1352 = vld [vmem:[#allocation11 + $0xc0] sm:$0xff]
        %v1353 = vld [vmem:[#allocation11 + $0xc8] sm:$0xff]
        %v1354 = vld [vmem:[#allocation11 + $0xd0] sm:$0xff]
        %v1355 = vld [vmem:[#allocation11 + $0xd8] sm:$0xff]
        %v1356 = vld [vmem:[#allocation11 + $0xe0] sm:$0xff]
        %v1357 = vld [vmem:[#allocation11 + $0xe8] sm:$0xff]
        %v1358 = vld [vmem:[#allocation11 + $0xf0] sm:$0xff]
        %v1359 = vld [vmem:[#allocation11 + $0xf8] sm:$0xff]
        %v1360 = vld [vmem:[#allocation11 + $0x100] sm:$0xff]
        %v1361 = vld [vmem:[#allocation11 + $0x108] sm:$0xff]
        %v1362 = vld [vmem:[#allocation11 + $0x110] sm:$0xff]
        %v1363 = vld [vmem:[#allocation11 + $0x118] sm:$0xff]
        %v1364 = vld [vmem:[#allocation11 + $0x120] sm:$0xff]
        %v1365 = vld [vmem:[#allocation11 + $0x128] sm:$0xff]
        %v1366 = vld [vmem:[#allocation11 + $0x130] sm:$0xff]
        %v1367 = vld [vmem:[#allocation11 + $0x138] sm:$0xff]
        %v1368 = vld [vmem:[#allocation11 + $0x140] sm:$0xff]
        %v1369 = vld [vmem:[#allocation11 + $0x148] sm:$0xff]
        %v1370 = vld [vmem:[#allocation11 + $0x150] sm:$0xff]
        %v1371 = vld [vmem:[#allocation11 + $0x158] sm:$0xff]
        %v1372 = vld [vmem:[#allocation11 + $0x160] sm:$0xff]
        %v1373 = vld [vmem:[#allocation11 + $0x168] sm:$0xff]
        %v1374 = vld [vmem:[#allocation11 + $0x170] sm:$0xff]
        %v1375 = vld [vmem:[#allocation11 + $0x178] sm:$0xff]
        %v1376 = vld [vmem:[#allocation11 + $0x180] sm:$0xff]
        %v1377 = vld [vmem:[#allocation11 + $0x188] sm:$0xff]
        %v1378 = vld [vmem:[#allocation11 + $0x190] sm:$0xff]
        %v1379 = vld [vmem:[#allocation11 + $0x198] sm:$0xff]
        %v1380 = vld [vmem:[#allocation11 + $0x1a0] sm:$0xff]
        %v1381 = vld [vmem:[#allocation11 + $0x1a8] sm:$0xff]
        %v1382 = vld [vmem:[#allocation11 + $0x1b0] sm:$0xff]
        %v1383 = vld [vmem:[#allocation11 + $0x1b8] sm:$0xff]
        %v1384 = vld [vmem:[#allocation11 + $0x1c0] sm:$0xff]
        %v1385 = vld [vmem:[#allocation11 + $0x1c8] sm:$0xff]
        %v1386 = vld [vmem:[#allocation11 + $0x1d0] sm:$0xff]
        %v1387 = vld [vmem:[#allocation11 + $0x1d8] sm:$0xff]
        %v1388 = vld [vmem:[#allocation11 + $0x1e0] sm:$0xff]
        %v1389 = vld [vmem:[#allocation11 + $0x1e8] sm:$0xff]
        %v1390 = vld [vmem:[#allocation11 + $0x1f0] sm:$0xff]
        %v1391 = vld [vmem:[#allocation11 + $0x1f8] sm:$0xff]
        %v1392 = vld [vmem:[#allocation11 + $0x200] sm:$0xff]
        %v1393 = vld [vmem:[#allocation11 + $0x208] sm:$0xff]
        %v1394 = vld [vmem:[#allocation11 + $0x210] sm:$0xff]
        %v1395 = vld [vmem:[#allocation11 + $0x218] sm:$0xff]
        %v1396 = vld [vmem:[#allocation11 + $0x220] sm:$0xff]
        %v1397 = vld [vmem:[#allocation11 + $0x228] sm:$0xff]
        %v1398 = vld [vmem:[#allocation11 + $0x230] sm:$0xff]
        %v1399 = vld [vmem:[#allocation11 + $0x238] sm:$0xff]
        %v1400 = vld [vmem:[#allocation11 + $0x240] sm:$0xff]
        %v1401 = vld [vmem:[#allocation11 + $0x248] sm:$0xff]
        %v1402 = vld [vmem:[#allocation11 + $0x250] sm:$0xff]
        %v1403 = vld [vmem:[#allocation11 + $0x258] sm:$0xff]
        %v1404 = vld [vmem:[#allocation11 + $0x260] sm:$0xff]
        %v1405 = vld [vmem:[#allocation11 + $0x268] sm:$0xff]
        %v1406 = vld [vmem:[#allocation11 + $0x270] sm:$0xff]
        %v1407 = vld [vmem:[#allocation11 + $0x278] sm:$0xff]
        %v1408 = vld [vmem:[#allocation11 + $0x280] sm:$0xff]
        %v1409 = vld [vmem:[#allocation11 + $0x288] sm:$0xff]
        %v1410 = vld [vmem:[#allocation11 + $0x290] sm:$0xff]
        %v1411 = vld [vmem:[#allocation11 + $0x298] sm:$0xff]
        %v1412 = vld [vmem:[#allocation11 + $0x2a0] sm:$0xff]
        %v1413 = vld [vmem:[#allocation11 + $0x2a8] sm:$0xff]
        %v1414 = vld [vmem:[#allocation11 + $0x2b0] sm:$0xff]
        %v1415 = vld [vmem:[#allocation11 + $0x2b8] sm:$0xff]
        %v1416 = vld [vmem:[#allocation11 + $0x2c0] sm:$0xff]
        %v1417 = vld [vmem:[#allocation11 + $0x2c8] sm:$0xff]
        %v1418 = vld [vmem:[#allocation11 + $0x2d0] sm:$0xff]
        %v1419 = vld [vmem:[#allocation11 + $0x2d8] sm:$0xff]
        %v1420 = vld [vmem:[#allocation11 + $0x2e0] sm:$0xff]
        %v1421 = vld [vmem:[#allocation11 + $0x2e8] sm:$0xff]
        %v1422 = vld [vmem:[#allocation11 + $0x2f0] sm:$0xff]
        %v1423 = vld [vmem:[#allocation11 + $0x2f8] sm:$0xff]
        %v1424 = vld [vmem:[#allocation12] sm:$0xf]
        %v1426 = vlaneseq
        %v1427 = vshrl.u32 %v1426, 7
        %v1428 = vsub.s32 0, %v1427
        %v1429 = vrot.slane %v1424, %v1428
        %v1430 = vlaneseq
        %v1431 = vshrl.u32 %v1430, 7
        %v1432 = vsub.s32 1, %v1431
        %v1433 = vrot.slane %v1424, %v1432
        %v1434 = vlaneseq
        %v1435 = vshrl.u32 %v1434, 7
        %v1436 = vsub.s32 2, %v1435
        %v1437 = vrot.slane %v1424, %v1436
        %v1438 = vlaneseq
        %v1439 = vshrl.u32 %v1438, 7
        %v1440 = vsub.s32 3, %v1439
        %v1441 = vrot.slane %v1424, %v1440
        %v1542 = vunpack.c.l.b16 %v1328
        %v1543 = vunpack.c.h.b16 %v1328
        %v1544 = vunpack.c.l.b16 %v1329
        %v1545 = vunpack.c.h.b16 %v1329
        %v1546 = vunpack.c.l.b16 %v1330
        %v1547 = vunpack.c.h.b16 %v1330
        %v1548 = vunpack.c.l.b16 %v1331
        %v1549 = vunpack.c.h.b16 %v1331
        %v1550 = vunpack.c.l.b16 %v1332
        %v1551 = vunpack.c.h.b16 %v1332
        %v1552 = vunpack.c.l.b16 %v1333
        %v1553 = vunpack.c.h.b16 %v1333
        %v1554 = vunpack.c.l.b16 %v1334
        %v1555 = vunpack.c.h.b16 %v1334
        %v1556 = vunpack.c.l.b16 %v1335
        %v1557 = vunpack.c.h.b16 %v1335
        %v1558 = vunpack.c.l.b16 %v1336
        %v1559 = vunpack.c.h.b16 %v1336
        %v1560 = vunpack.c.l.b16 %v1337
        %v1561 = vunpack.c.h.b16 %v1337
        %v1562 = vunpack.c.l.b16 %v1338
        %v1563 = vunpack.c.h.b16 %v1338
        %v1564 = vunpack.c.l.b16 %v1339
        %v1565 = vunpack.c.h.b16 %v1339
        %v1566 = vunpack.c.l.b16 %v1340
        %v1567 = vunpack.c.h.b16 %v1340
        %v1568 = vunpack.c.l.b16 %v1341
        %v1569 = vunpack.c.h.b16 %v1341
        %v1570 = vunpack.c.l.b16 %v1342
        %v1571 = vunpack.c.h.b16 %v1342
        %v1572 = vunpack.c.l.b16 %v1343
        %v1573 = vunpack.c.h.b16 %v1343
        %v1574 = vunpack.c.l.b16 %v1344
        %v1575 = vunpack.c.h.b16 %v1344
        %v1576 = vunpack.c.l.b16 %v1345
        %v1577 = vunpack.c.h.b16 %v1345
        %v1578 = vunpack.c.l.b16 %v1346
        %v1579 = vunpack.c.h.b16 %v1346
        %v1580 = vunpack.c.l.b16 %v1347
        %v1581 = vunpack.c.h.b16 %v1347
        %v1582 = vunpack.c.l.b16 %v1348
        %v1583 = vunpack.c.h.b16 %v1348
        %v1584 = vunpack.c.l.b16 %v1349
        %v1585 = vunpack.c.h.b16 %v1349
        %v1586 = vunpack.c.l.b16 %v1350
        %v1587 = vunpack.c.h.b16 %v1350
        %v1588 = vunpack.c.l.b16 %v1351
        %v1589 = vunpack.c.h.b16 %v1351
        %v1590 = vunpack.c.l.b16 %v1352
        %v1591 = vunpack.c.h.b16 %v1352
        %v1592 = vunpack.c.l.b16 %v1353
        %v1593 = vunpack.c.h.b16 %v1353
        %v1594 = vunpack.c.l.b16 %v1354
        %v1595 = vunpack.c.h.b16 %v1354
        %v1596 = vunpack.c.l.b16 %v1355
        %v1597 = vunpack.c.h.b16 %v1355
        %v1598 = vunpack.c.l.b16 %v1356
        %v1599 = vunpack.c.h.b16 %v1356
        %v1600 = vunpack.c.l.b16 %v1357
        %v1601 = vunpack.c.h.b16 %v1357
        %v1602 = vunpack.c.l.b16 %v1358
        %v1603 = vunpack.c.h.b16 %v1358
        %v1604 = vunpack.c.l.b16 %v1359
        %v1605 = vunpack.c.h.b16 %v1359
        %v1606 = vunpack.c.l.b16 %v1360
        %v1607 = vunpack.c.h.b16 %v1360
        %v1608 = vunpack.c.l.b16 %v1361
        %v1609 = vunpack.c.h.b16 %v1361
        %v1610 = vunpack.c.l.b16 %v1362
        %v1611 = vunpack.c.h.b16 %v1362
        %v1612 = vunpack.c.l.b16 %v1363
        %v1613 = vunpack.c.h.b16 %v1363
        %v1614 = vunpack.c.l.b16 %v1364
        %v1615 = vunpack.c.h.b16 %v1364
        %v1616 = vunpack.c.l.b16 %v1365
        %v1617 = vunpack.c.h.b16 %v1365
        %v1618 = vunpack.c.l.b16 %v1366
        %v1619 = vunpack.c.h.b16 %v1366
        %v1620 = vunpack.c.l.b16 %v1367
        %v1621 = vunpack.c.h.b16 %v1367
        %v1622 = vunpack.c.l.b16 %v1368
        %v1623 = vunpack.c.h.b16 %v1368
        %v1624 = vunpack.c.l.b16 %v1369
        %v1625 = vunpack.c.h.b16 %v1369
        %v1626 = vunpack.c.l.b16 %v1370
        %v1627 = vunpack.c.h.b16 %v1370
        %v1628 = vunpack.c.l.b16 %v1371
        %v1629 = vunpack.c.h.b16 %v1371
        %v1630 = vunpack.c.l.b16 %v1372
        %v1631 = vunpack.c.h.b16 %v1372
        %v1632 = vunpack.c.l.b16 %v1373
        %v1633 = vunpack.c.h.b16 %v1373
        %v1634 = vunpack.c.l.b16 %v1374
        %v1635 = vunpack.c.h.b16 %v1374
        %v1636 = vunpack.c.l.b16 %v1375
        %v1637 = vunpack.c.h.b16 %v1375
        %v1638 = vunpack.c.l.b16 %v1376
        %v1639 = vunpack.c.h.b16 %v1376
        %v1640 = vunpack.c.l.b16 %v1377
        %v1641 = vunpack.c.h.b16 %v1377
        %v1642 = vunpack.c.l.b16 %v1378
        %v1643 = vunpack.c.h.b16 %v1378
        %v1644 = vunpack.c.l.b16 %v1379
        %v1645 = vunpack.c.h.b16 %v1379
        %v1646 = vunpack.c.l.b16 %v1380
        %v1647 = vunpack.c.h.b16 %v1380
        %v1648 = vunpack.c.l.b16 %v1381
        %v1649 = vunpack.c.h.b16 %v1381
        %v1650 = vunpack.c.l.b16 %v1382
        %v1651 = vunpack.c.h.b16 %v1382
        %v1652 = vunpack.c.l.b16 %v1383
        %v1653 = vunpack.c.h.b16 %v1383
        %v1654 = vunpack.c.l.b16 %v1384
        %v1655 = vunpack.c.h.b16 %v1384
        %v1656 = vunpack.c.l.b16 %v1385
        %v1657 = vunpack.c.h.b16 %v1385
        %v1658 = vunpack.c.l.b16 %v1386
        %v1659 = vunpack.c.h.b16 %v1386
        %v1660 = vunpack.c.l.b16 %v1387
        %v1661 = vunpack.c.h.b16 %v1387
        %v1662 = vunpack.c.l.b16 %v1388
        %v1663 = vunpack.c.h.b16 %v1388
        %v1664 = vunpack.c.l.b16 %v1389
        %v1665 = vunpack.c.h.b16 %v1389
        %v1666 = vunpack.c.l.b16 %v1390
        %v1667 = vunpack.c.h.b16 %v1390
        %v1668 = vunpack.c.l.b16 %v1391
        %v1669 = vunpack.c.h.b16 %v1391
        %v1670 = vunpack.c.l.b16 %v1392
        %v1671 = vunpack.c.h.b16 %v1392
        %v1672 = vunpack.c.l.b16 %v1393
        %v1673 = vunpack.c.h.b16 %v1393
        %v1674 = vunpack.c.l.b16 %v1394
        %v1675 = vunpack.c.h.b16 %v1394
        %v1676 = vunpack.c.l.b16 %v1395
        %v1677 = vunpack.c.h.b16 %v1395
        %v1678 = vunpack.c.l.b16 %v1396
        %v1679 = vunpack.c.h.b16 %v1396
        %v1680 = vunpack.c.l.b16 %v1397
        %v1681 = vunpack.c.h.b16 %v1397
        %v1682 = vunpack.c.l.b16 %v1398
        %v1683 = vunpack.c.h.b16 %v1398
        %v1684 = vunpack.c.l.b16 %v1399
        %v1685 = vunpack.c.h.b16 %v1399
        %v1686 = vunpack.c.l.b16 %v1400
        %v1687 = vunpack.c.h.b16 %v1400
        %v1688 = vunpack.c.l.b16 %v1401
        %v1689 = vunpack.c.h.b16 %v1401
        %v1690 = vunpack.c.l.b16 %v1402
        %v1691 = vunpack.c.h.b16 %v1402
        %v1692 = vunpack.c.l.b16 %v1403
        %v1693 = vunpack.c.h.b16 %v1403
        %v1694 = vunpack.c.l.b16 %v1404
        %v1695 = vunpack.c.h.b16 %v1404
        %v1696 = vunpack.c.l.b16 %v1405
        %v1697 = vunpack.c.h.b16 %v1405
        %v1698 = vunpack.c.l.b16 %v1406
        %v1699 = vunpack.c.h.b16 %v1406
        %v1700 = vunpack.c.l.b16 %v1407
        %v1701 = vunpack.c.h.b16 %v1407
        %v1702 = vunpack.c.l.b16 %v1408
        %v1703 = vunpack.c.h.b16 %v1408
        %v1704 = vunpack.c.l.b16 %v1409
        %v1705 = vunpack.c.h.b16 %v1409
        %v1706 = vunpack.c.l.b16 %v1410
        %v1707 = vunpack.c.h.b16 %v1410
        %v1708 = vunpack.c.l.b16 %v1411
        %v1709 = vunpack.c.h.b16 %v1411
        %v1710 = vunpack.c.l.b16 %v1412
        %v1711 = vunpack.c.h.b16 %v1412
        %v1712 = vunpack.c.l.b16 %v1413
        %v1713 = vunpack.c.h.b16 %v1413
        %v1714 = vunpack.c.l.b16 %v1414
        %v1715 = vunpack.c.h.b16 %v1414
        %v1716 = vunpack.c.l.b16 %v1415
        %v1717 = vunpack.c.h.b16 %v1415
        %v1718 = vunpack.c.l.b16 %v1416
        %v1719 = vunpack.c.h.b16 %v1416
        %v1720 = vunpack.c.l.b16 %v1417
        %v1721 = vunpack.c.h.b16 %v1417
        %v1722 = vunpack.c.l.b16 %v1418
        %v1723 = vunpack.c.h.b16 %v1418
        %v1724 = vunpack.c.l.b16 %v1419
        %v1725 = vunpack.c.h.b16 %v1419
        %v1726 = vunpack.c.l.b16 %v1420
        %v1727 = vunpack.c.h.b16 %v1420
        %v1728 = vunpack.c.l.b16 %v1421
        %v1729 = vunpack.c.h.b16 %v1421
        %v1730 = vunpack.c.l.b16 %v1422
        %v1731 = vunpack.c.h.b16 %v1422
        %v1732 = vunpack.c.l.b16 %v1423
        %v1733 = vunpack.c.h.b16 %v1423
        %v1734 = vpack.c.b16 %v1546, %v1542
        %v1735 = vpack.c.b16 %v1547, %v1543
        %v1736 = vpack.c.b16 %v1548, %v1544
        %v1737 = vpack.c.b16 %v1549, %v1545
        %v1738 = vpack.c.b16 %v1554, %v1550
        %v1739 = vpack.c.b16 %v1555, %v1551
        %v1740 = vpack.c.b16 %v1556, %v1552
        %v1741 = vpack.c.b16 %v1557, %v1553
        %v1742 = vpack.c.b16 %v1562, %v1558
        %v1743 = vpack.c.b16 %v1563, %v1559
        %v1744 = vpack.c.b16 %v1564, %v1560
        %v1745 = vpack.c.b16 %v1565, %v1561
        %v1746 = vpack.c.b16 %v1570, %v1566
        %v1747 = vpack.c.b16 %v1571, %v1567
        %v1748 = vpack.c.b16 %v1572, %v1568
        %v1749 = vpack.c.b16 %v1573, %v1569
        %v1750 = vpack.c.b16 %v1578, %v1574
        %v1751 = vpack.c.b16 %v1579, %v1575
        %v1752 = vpack.c.b16 %v1580, %v1576
        %v1753 = vpack.c.b16 %v1581, %v1577
        %v1754 = vpack.c.b16 %v1586, %v1582
        %v1755 = vpack.c.b16 %v1587, %v1583
        %v1756 = vpack.c.b16 %v1588, %v1584
        %v1757 = vpack.c.b16 %v1589, %v1585
        %v1758 = vpack.c.b16 %v1594, %v1590
        %v1759 = vpack.c.b16 %v1595, %v1591
        %v1760 = vpack.c.b16 %v1596, %v1592
        %v1761 = vpack.c.b16 %v1597, %v1593
        %v1762 = vpack.c.b16 %v1602, %v1598
        %v1763 = vpack.c.b16 %v1603, %v1599
        %v1764 = vpack.c.b16 %v1604, %v1600
        %v1765 = vpack.c.b16 %v1605, %v1601
        %v1766 = vpack.c.b16 %v1610, %v1606
        %v1767 = vpack.c.b16 %v1611, %v1607
        %v1768 = vpack.c.b16 %v1612, %v1608
        %v1769 = vpack.c.b16 %v1613, %v1609
        %v1770 = vpack.c.b16 %v1618, %v1614
        %v1771 = vpack.c.b16 %v1619, %v1615
        %v1772 = vpack.c.b16 %v1620, %v1616
        %v1773 = vpack.c.b16 %v1621, %v1617
        %v1774 = vpack.c.b16 %v1626, %v1622
        %v1775 = vpack.c.b16 %v1627, %v1623
        %v1776 = vpack.c.b16 %v1628, %v1624
        %v1777 = vpack.c.b16 %v1629, %v1625
        %v1778 = vpack.c.b16 %v1634, %v1630
        %v1779 = vpack.c.b16 %v1635, %v1631
        %v1780 = vpack.c.b16 %v1636, %v1632
        %v1781 = vpack.c.b16 %v1637, %v1633
        %v1782 = vpack.c.b16 %v1642, %v1638
        %v1783 = vpack.c.b16 %v1643, %v1639
        %v1784 = vpack.c.b16 %v1644, %v1640
        %v1785 = vpack.c.b16 %v1645, %v1641
        %v1786 = vpack.c.b16 %v1650, %v1646
        %v1787 = vpack.c.b16 %v1651, %v1647
        %v1788 = vpack.c.b16 %v1652, %v1648
        %v1789 = vpack.c.b16 %v1653, %v1649
        %v1790 = vpack.c.b16 %v1658, %v1654
        %v1791 = vpack.c.b16 %v1659, %v1655
        %v1792 = vpack.c.b16 %v1660, %v1656
        %v1793 = vpack.c.b16 %v1661, %v1657
        %v1794 = vpack.c.b16 %v1666, %v1662
        %v1795 = vpack.c.b16 %v1667, %v1663
        %v1796 = vpack.c.b16 %v1668, %v1664
        %v1797 = vpack.c.b16 %v1669, %v1665
        %v1798 = vpack.c.b16 %v1674, %v1670
        %v1799 = vpack.c.b16 %v1675, %v1671
        %v1800 = vpack.c.b16 %v1676, %v1672
        %v1801 = vpack.c.b16 %v1677, %v1673
        %v1802 = vpack.c.b16 %v1682, %v1678
        %v1803 = vpack.c.b16 %v1683, %v1679
        %v1804 = vpack.c.b16 %v1684, %v1680
        %v1805 = vpack.c.b16 %v1685, %v1681
        %v1806 = vpack.c.b16 %v1690, %v1686
        %v1807 = vpack.c.b16 %v1691, %v1687
        %v1808 = vpack.c.b16 %v1692, %v1688
        %v1809 = vpack.c.b16 %v1693, %v1689
        %v1810 = vpack.c.b16 %v1698, %v1694
        %v1811 = vpack.c.b16 %v1699, %v1695
        %v1812 = vpack.c.b16 %v1700, %v1696
        %v1813 = vpack.c.b16 %v1701, %v1697
        %v1814 = vpack.c.b16 %v1706, %v1702
        %v1815 = vpack.c.b16 %v1707, %v1703
        %v1816 = vpack.c.b16 %v1708, %v1704
        %v1817 = vpack.c.b16 %v1709, %v1705
        %v1818 = vpack.c.b16 %v1714, %v1710
        %v1819 = vpack.c.b16 %v1715, %v1711
        %v1820 = vpack.c.b16 %v1716, %v1712
        %v1821 = vpack.c.b16 %v1717, %v1713
        %v1822 = vpack.c.b16 %v1722, %v1718
        %v1823 = vpack.c.b16 %v1723, %v1719
        %v1824 = vpack.c.b16 %v1724, %v1720
        %v1825 = vpack.c.b16 %v1725, %v1721
        %v1826 = vpack.c.b16 %v1730, %v1726
        %v1827 = vpack.c.b16 %v1731, %v1727
        %v1828 = vpack.c.b16 %v1732, %v1728
        %v1829 = vpack.c.b16 %v1733, %v1729
        %1926 = vmatprep.subr.bf16.mxu0 %v1735
        %1927 = vmatpush1.bf16.msra.mxu0 %v1734
        %1928 = vmatprep.subr.bf16.mxu0 %v1739
        %1929 = vmatpush1.bf16.msra.mxu0 %v1738
        %1930 = vmatprep.subr.bf16.mxu0 %v1743
        %1931 = vmatpush1.bf16.msra.mxu0 %v1742
        %1932 = vmatprep.subr.bf16.mxu0 %v1747
        %1933 = vmatpush1.bf16.msra.mxu0 %v1746
        %1934 = vmatprep.subr.bf16.mxu0 %v1751
        %1935 = vmatpush1.bf16.msra.mxu0 %v1750
        %1936 = vmatprep.subr.bf16.mxu0 %v1755
        %1937 = vmatpush1.bf16.msra.mxu0 %v1754
        %1938 = vmatprep.subr.bf16.mxu0 %v1759
        %1939 = vmatpush1.bf16.msra.mxu0 %v1758
        %1940 = vmatprep.subr.bf16.mxu0 %v1763
        %1941 = vmatpush1.bf16.msra.mxu0 %v1762
        %1942 = vmatprep.subr.bf16.mxu0 %v1767
        %1943 = vmatpush1.bf16.msra.mxu0 %v1766
        %1944 = vmatprep.subr.bf16.mxu0 %v1771
        %1945 = vmatpush1.bf16.msra.mxu0 %v1770
        %1946 = vmatprep.subr.bf16.mxu0 %v1775
        %1947 = vmatpush1.bf16.msra.mxu0 %v1774
        %1948 = vmatprep.subr.bf16.mxu0 %v1779
        %1949 = vmatpush1.bf16.msra.mxu0 %v1778
        %1950 = vmatprep.subr.bf16.mxu0 %v1783
        %1951 = vmatpush1.bf16.msra.mxu0 %v1782
        %1952 = vmatprep.subr.bf16.mxu0 %v1787
        %1953 = vmatpush1.bf16.msra.mxu0 %v1786
        %1954 = vmatprep.subr.bf16.mxu0 %v1791
        %1955 = vmatpush1.bf16.msra.mxu0 %v1790
        %1956 = vmatprep.subr.bf16.mxu0 %v1795
        %1957 = vmatpush1.bf16.msra.mxu0 %v1794
        %1958 = vmatprep.mubr.bf16.mxu0 %v1326
        %1959 = vmatmul.mubr.bf16.gmra.mrb[0].mxu0 %v1325
        %v1960 = vpop.f32.mrb[0].mxu0
        %v1961 = vadd.f32 %v1429, %v1960
        %v1962 = vpop.f32.mrb[0].mxu0
        %v1963 = vadd.f32 %v1433, %v1962
        %v1964 = vpop.f32.mrb[0].mxu0
        %v1965 = vadd.f32 %v1429, %v1964
        %v1966 = vpop.f32.mrb[0].mxu0
        %v1967 = vadd.f32 %v1433, %v1966
        %1968 = vdwg.mxu0
        %1969 = vmatprep.subr.bf16.mxu0 %v1799
        %1970 = vmatpush1.bf16.msra.mxu0 %v1798
        %1971 = vmatprep.subr.bf16.mxu0 %v1803
        %1972 = vmatpush1.bf16.msra.mxu0 %v1802
        %1973 = vmatprep.subr.bf16.mxu0 %v1807
        %1974 = vmatpush1.bf16.msra.mxu0 %v1806
        %1975 = vmatprep.subr.bf16.mxu0 %v1811
        %1976 = vmatpush1.bf16.msra.mxu0 %v1810
        %1977 = vmatprep.subr.bf16.mxu0 %v1815
        %1978 = vmatpush1.bf16.msra.mxu0 %v1814
        %1979 = vmatprep.subr.bf16.mxu0 %v1819
        %1980 = vmatpush1.bf16.msra.mxu0 %v1818
        %1981 = vmatprep.subr.bf16.mxu0 %v1823
        %1982 = vmatpush1.bf16.msra.mxu0 %v1822
        %1983 = vmatprep.subr.bf16.mxu0 %v1827
        %1984 = vmatpush1.bf16.msra.mxu0 %v1826
        %1985 = vmatprep.subr.bf16.mxu0 0
        %1986 = vmatpush1.bf16.msra.mxu0 0
        %1987 = vmatprep.subr.bf16.mxu0 0
        %1988 = vmatpush1.bf16.msra.mxu0 0
        %1989 = vmatprep.subr.bf16.mxu0 0
        %1990 = vmatpush1.bf16.msra.mxu0 0
        %1991 = vmatprep.subr.bf16.mxu0 0
        %1992 = vmatpush1.bf16.msra.mxu0 0
        %1993 = vmatprep.subr.bf16.mxu0 0
        %1994 = vmatpush1.bf16.msra.mxu0 0
        %1995 = vmatprep.subr.bf16.mxu0 0
        %1996 = vmatpush1.bf16.msra.mxu0 0
        %1997 = vmatprep.subr.bf16.mxu0 0
        %1998 = vmatpush1.bf16.msra.mxu0 0
        %1999 = vmatprep.subr.bf16.mxu0 0
        %2000 = vmatpush1.bf16.msra.mxu0 0
        %2001 = vmatprep.mubr.bf16.mxu0 0
        %2002 = vmatmul.mubr.bf16.gmra.mrb[0].mxu0 %v1327
        %v2003 = vpop.f32.mrb[0].mxu0
        %v2004 = vadd.f32 %v1961, %v2003
        %v2005 = vpop.f32.mrb[0].mxu0
        %v2006 = vadd.f32 %v1963, %v2005
        %v2007 = vpop.f32.mrb[0].mxu0
        %v2008 = vadd.f32 %v1965, %v2007
        %v2009 = vpop.f32.mrb[0].mxu0
        %v2010 = vadd.f32 %v1967, %v2009
        %2011 = vdwg.mxu0
        %2012 = vmatprep.subr.bf16.mxu0 %v1737
        %2013 = vmatpush1.bf16.msra.mxu0 %v1736
        %2014 = vmatprep.subr.bf16.mxu0 %v1741
        %2015 = vmatpush1.bf16.msra.mxu0 %v1740
        %2016 = vmatprep.subr.bf16.mxu0 %v1745
        %2017 = vmatpush1.bf16.msra.mxu0 %v1744
        %2018 = vmatprep.subr.bf16.mxu0 %v1749
        %2019 = vmatpush1.bf16.msra.mxu0 %v1748
        %2020 = vmatprep.subr.bf16.mxu0 %v1753
        %2021 = vmatpush1.bf16.msra.mxu0 %v1752
        %2022 = vmatprep.subr.bf16.mxu0 %v1757
        %2023 = vmatpush1.bf16.msra.mxu0 %v1756
        %2024 = vmatprep.subr.bf16.mxu0 %v1761
        %2025 = vmatpush1.bf16.msra.mxu0 %v1760
        %2026 = vmatprep.subr.bf16.mxu0 %v1765
        %2027 = vmatpush1.bf16.msra.mxu0 %v1764
        %2028 = vmatprep.subr.bf16.mxu0 %v1769
        %2029 = vmatpush1.bf16.msra.mxu0 %v1768
        %2030 = vmatprep.subr.bf16.mxu0 %v1773
        %2031 = vmatpush1.bf16.msra.mxu0 %v1772
        %2032 = vmatprep.subr.bf16.mxu0 %v1777
        %2033 = vmatpush1.bf16.msra.mxu0 %v1776
        %2034 = vmatprep.subr.bf16.mxu0 %v1781
        %2035 = vmatpush1.bf16.msra.mxu0 %v1780
        %2036 = vmatprep.subr.bf16.mxu0 %v1785
        %2037 = vmatpush1.bf16.msra.mxu0 %v1784
        %2038 = vmatprep.subr.bf16.mxu0 %v1789
        %2039 = vmatpush1.bf16.msra.mxu0 %v1788
        %2040 = vmatprep.subr.bf16.mxu0 %v1793
        %2041 = vmatpush1.bf16.msra.mxu0 %v1792
        %2042 = vmatprep.subr.bf16.mxu0 %v1797
        %2043 = vmatpush1.bf16.msra.mxu0 %v1796
        %2044 = vmatprep.mubr.bf16.mxu0 %v1326
        %2045 = vmatmul.mubr.bf16.gmra.mrb[0].mxu0 %v1325
        %v2046 = vpop.f32.mrb[0].mxu0
        %v2047 = vadd.f32 %v1437, %v2046
        %v2048 = vpop.f32.mrb[0].mxu0
        %v2049 = vadd.f32 %v1441, %v2048
        %v2050 = vpop.f32.mrb[0].mxu0
        %v2051 = vadd.f32 %v1437, %v2050
        %v2052 = vpop.f32.mrb[0].mxu0
        %v2053 = vadd.f32 %v1441, %v2052
        %2054 = vdwg.mxu0
        %2055 = vmatprep.subr.bf16.mxu0 %v1801
        %2056 = vmatpush1.bf16.msra.mxu0 %v1800
        %2057 = vmatprep.subr.bf16.mxu0 %v1805
        %2058 = vmatpush1.bf16.msra.mxu0 %v1804
        %2059 = vmatprep.subr.bf16.mxu0 %v1809
        %2060 = vmatpush1.bf16.msra.mxu0 %v1808
        %2061 = vmatprep.subr.bf16.mxu0 %v1813
        %2062 = vmatpush1.bf16.msra.mxu0 %v1812
        %2063 = vmatprep.subr.bf16.mxu0 %v1817
        %2064 = vmatpush1.bf16.msra.mxu0 %v1816
        %2065 = vmatprep.subr.bf16.mxu0 %v1821
        %2066 = vmatpush1.bf16.msra.mxu0 %v1820
        %2067 = vmatprep.subr.bf16.mxu0 %v1825
        %2068 = vmatpush1.bf16.msra.mxu0 %v1824
        %2069 = vmatprep.subr.bf16.mxu0 %v1829
        %2070 = vmatpush1.bf16.msra.mxu0 %v1828
        %2071 = vmatprep.subr.bf16.mxu0 0
        %2072 = vmatpush1.bf16.msra.mxu0 0
        %2073 = vmatprep.subr.bf16.mxu0 0
        %2074 = vmatpush1.bf16.msra.mxu0 0
        %2075 = vmatprep.subr.bf16.mxu0 0
        %2076 = vmatpush1.bf16.msra.mxu0 0
        %2077 = vmatprep.subr.bf16.mxu0 0
        %2078 = vmatpush1.bf16.msra.mxu0 0
        %2079 = vmatprep.subr.bf16.mxu0 0
        %2080 = vmatpush1.bf16.msra.mxu0 0
        %2081 = vmatprep.subr.bf16.mxu0 0
        %2082 = vmatpush1.bf16.msra.mxu0 0
        %2083 = vmatprep.subr.bf16.mxu0 0
        %2084 = vmatpush1.bf16.msra.mxu0 0
        %2085 = vmatprep.subr.bf16.mxu0 0
        %2086 = vmatpush1.bf16.msra.mxu0 0
        %2087 = vmatprep.mubr.bf16.mxu0 0
        %2088 = vmatmul.mubr.bf16.gmra.mrb[0].mxu0 %v1327
        %v2089 = vpop.f32.mrb[0].mxu0
        %v2090 = vadd.f32 %v2047, %v2089
        %v2091 = vpop.f32.mrb[0].mxu0
        %v2092 = vadd.f32 %v2049, %v2091
        %v2093 = vpop.f32.mrb[0].mxu0
        %v2094 = vadd.f32 %v2051, %v2093
        %v2095 = vpop.f32.mrb[0].mxu0
        %v2096 = vadd.f32 %v2053, %v2095
        %2097 = vdwg.mxu0
        %vm2098 = vcmp.gt.f32.partialorder %v2004, 0.0
        %vm2099 = vcmp.gt.f32.partialorder %v2006, 0.0
        %vm2100 = vcmp.gt.f32.partialorder %v2090, 0.0
        %vm2101 = vcmp.gt.f32.partialorder %v2092, 0.0
        %vm2102 = vcmp.gt.f32.partialorder %v2008, 0.0
        %vm2103 = vcmp.gt.f32.partialorder %v2010, 0.0
        %vm2104 = vcmp.gt.f32.partialorder %v2094, 0.0
        %vm2105 = vcmp.gt.f32.partialorder %v2096, 0.0
        %v2106 = vmul.f32 %v2004, 0.2
        %v2107 = vmul.f32 %v2006, 0.2
        %v2108 = vmul.f32 %v2090, 0.2
        %v2109 = vmul.f32 %v2092, 0.2
        %v2110 = vmul.f32 %v2008, 0.2
        %v2111 = vmul.f32 %v2010, 0.2
        %v2112 = vmul.f32 %v2094, 0.2
        %v2113 = vmul.f32 %v2096, 0.2
        %v2114 = vsel %vm2098, %v2004, %v2106
        %v2115 = vsel %vm2099, %v2006, %v2107
        %v2116 = vsel %vm2100, %v2090, %v2108
        %v2117 = vsel %vm2101, %v2092, %v2109
        %v2118 = vsel %vm2102, %v2008, %v2110
        %v2119 = vsel %vm2103, %v2010, %v2111
        %v2120 = vsel %vm2104, %v2094, %v2112
        %v2121 = vsel %vm2105, %v2096, %v2113
        %v2122 = vadd.f32 %v751, %v753
        %v2123 = vrot.slane %v2122, 4
        %v2124 = vadd.f32 %v2122, %v2123
        %v2125 = vrot.slane %v2124, 2
        %v2126 = vadd.f32 %v2124, %v2125
        %v2127 = vrot.slane %v2126, 1
        %v2128 = vadd.f32 %v2126, %v2127
        %v2129 = vadd.f32 %v752, %v754
        %v2130 = vrot.slane %v2129, 4
        %v2131 = vadd.f32 %v2129, %v2130
        %v2132 = vrot.slane %v2131, 2
        %v2133 = vadd.f32 %v2131, %v2132
        %v2134 = vrot.slane %v2133, 1
        %v2135 = vadd.f32 %v2133, %v2134
        %v2136 = vrcp.pop 16.0
        %v2137 = vmul.f32 %v2128, %v2136
        %v2138 = vmul.f32 %v2135, %v2136
        %v2139 = vpack.c.bf16 %v2137, %v2137
        %v2140 = vpack.c.bf16 %v2138, %v2138
        %v2141 = vld [vmem:[#allocation14] sm:$0xff]
        %v2142 = vld [vmem:[#allocation14 + $0x8] sm:$0xff]
        %v2143 = vld [vmem:[#allocation14 + $0x10] sm:$0xff]
        %v2144 = vld [vmem:[#allocation14 + $0x18] sm:$0xff]
        %v2145 = vld [vmem:[#allocation14 + $0x20] sm:$0xff]
        %v2146 = vld [vmem:[#allocation14 + $0x28] sm:$0xff]
        %v2147 = vld [vmem:[#allocation14 + $0x30] sm:$0xff]
        %v2148 = vld [vmem:[#allocation14 + $0x38] sm:$0xff]
        %v2149 = vld [vmem:[#allocation14 + $0x40] sm:$0xff]
        %v2150 = vld [vmem:[#allocation14 + $0x48] sm:$0xff]
        %v2151 = vld [vmem:[#allocation14 + $0x50] sm:$0xff]
        %v2152 = vld [vmem:[#allocation14 + $0x58] sm:$0xff]
        %v2153 = vld [vmem:[#allocation14 + $0x60] sm:$0xff]
        %v2154 = vld [vmem:[#allocation14 + $0x68] sm:$0xff]
        %v2155 = vld [vmem:[#allocation14 + $0x70] sm:$0xff]
        %v2156 = vld [vmem:[#allocation14 + $0x78] sm:$0xff]
        %v2157 = vld [vmem:[#allocation14 + $0x80] sm:$0xff]
        %v2158 = vld [vmem:[#allocation14 + $0x88] sm:$0xff]
        %v2159 = vld [vmem:[#allocation14 + $0x90] sm:$0xff]
        %v2160 = vld [vmem:[#allocation14 + $0x98] sm:$0xff]
        %v2161 = vld [vmem:[#allocation14 + $0xa0] sm:$0xff]
        %v2162 = vld [vmem:[#allocation14 + $0xa8] sm:$0xff]
        %v2163 = vld [vmem:[#allocation14 + $0xb0] sm:$0xff]
        %v2164 = vld [vmem:[#allocation14 + $0xb8] sm:$0xff]
        %v2165 = vld [vmem:[#allocation14 + $0xc0] sm:$0xff]
        %v2166 = vld [vmem:[#allocation14 + $0xc8] sm:$0xff]
        %v2167 = vld [vmem:[#allocation14 + $0xd0] sm:$0xff]
        %v2168 = vld [vmem:[#allocation14 + $0xd8] sm:$0xff]
        %v2169 = vld [vmem:[#allocation14 + $0xe0] sm:$0xff]
        %v2170 = vld [vmem:[#allocation14 + $0xe8] sm:$0xff]
        %v2171 = vld [vmem:[#allocation14 + $0xf0] sm:$0xff]
        %v2172 = vld [vmem:[#allocation14 + $0xf8] sm:$0xff]
        %v2173 = vld [vmem:[#allocation15] sm:$0x3]
        %v2206 = vunpack.c.l.b16 %v2141
        %v2207 = vunpack.c.h.b16 %v2141
        %v2208 = vunpack.c.l.b16 %v2142
        %v2209 = vunpack.c.h.b16 %v2142
        %v2210 = vunpack.c.l.b16 %v2143
        %v2211 = vunpack.c.h.b16 %v2143
        %v2212 = vunpack.c.l.b16 %v2144
        %v2213 = vunpack.c.h.b16 %v2144
        %v2214 = vunpack.c.l.b16 %v2145
        %v2215 = vunpack.c.h.b16 %v2145
        %v2216 = vunpack.c.l.b16 %v2146
        %v2217 = vunpack.c.h.b16 %v2146
        %v2218 = vunpack.c.l.b16 %v2147
        %v2219 = vunpack.c.h.b16 %v2147
        %v2220 = vunpack.c.l.b16 %v2148
        %v2221 = vunpack.c.h.b16 %v2148
        %v2222 = vunpack.c.l.b16 %v2149
        %v2223 = vunpack.c.h.b16 %v2149
        %v2224 = vunpack.c.l.b16 %v2150
        %v2225 = vunpack.c.h.b16 %v2150
        %v2226 = vunpack.c.l.b16 %v2151
        %v2227 = vunpack.c.h.b16 %v2151
        %v2228 = vunpack.c.l.b16 %v2152
        %v2229 = vunpack.c.h.b16 %v2152
        %v2230 = vunpack.c.l.b16 %v2153
        %v2231 = vunpack.c.h.b16 %v2153
        %v2232 = vunpack.c.l.b16 %v2154
        %v2233 = vunpack.c.h.b16 %v2154
        %v2234 = vunpack.c.l.b16 %v2155
        %v2235 = vunpack.c.h.b16 %v2155
        %v2236 = vunpack.c.l.b16 %v2156
        %v2237 = vunpack.c.h.b16 %v2156
        %v2238 = vunpack.c.l.b16 %v2157
        %v2239 = vunpack.c.h.b16 %v2157
        %v2240 = vunpack.c.l.b16 %v2158
        %v2241 = vunpack.c.h.b16 %v2158
        %v2242 = vunpack.c.l.b16 %v2159
        %v2243 = vunpack.c.h.b16 %v2159
        %v2244 = vunpack.c.l.b16 %v2160
        %v2245 = vunpack.c.h.b16 %v2160
        %v2246 = vunpack.c.l.b16 %v2161
        %v2247 = vunpack.c.h.b16 %v2161
        %v2248 = vunpack.c.l.b16 %v2162
        %v2249 = vunpack.c.h.b16 %v2162
        %v2250 = vunpack.c.l.b16 %v2163
        %v2251 = vunpack.c.h.b16 %v2163
        %v2252 = vunpack.c.l.b16 %v2164
        %v2253 = vunpack.c.h.b16 %v2164
        %v2254 = vunpack.c.l.b16 %v2165
        %v2255 = vunpack.c.h.b16 %v2165
        %v2256 = vunpack.c.l.b16 %v2166
        %v2257 = vunpack.c.h.b16 %v2166
        %v2258 = vunpack.c.l.b16 %v2167
        %v2259 = vunpack.c.h.b16 %v2167
        %v2260 = vunpack.c.l.b16 %v2168
        %v2261 = vunpack.c.h.b16 %v2168
        %v2262 = vunpack.c.l.b16 %v2169
        %v2263 = vunpack.c.h.b16 %v2169
        %v2264 = vunpack.c.l.b16 %v2170
        %v2265 = vunpack.c.h.b16 %v2170
        %v2266 = vunpack.c.l.b16 %v2171
        %v2267 = vunpack.c.h.b16 %v2171
        %v2268 = vunpack.c.l.b16 %v2172
        %v2269 = vunpack.c.h.b16 %v2172
        %v2270 = vpack.c.b16 %v2208, %v2206
        %v2271 = vpack.c.b16 %v2209, %v2207
        %v2272 = vpack.c.b16 %v2212, %v2210
        %v2273 = vpack.c.b16 %v2213, %v2211
        %v2274 = vpack.c.b16 %v2216, %v2214
        %v2275 = vpack.c.b16 %v2217, %v2215
        %v2276 = vpack.c.b16 %v2220, %v2218
        %v2277 = vpack.c.b16 %v2221, %v2219
        %v2278 = vpack.c.b16 %v2224, %v2222
        %v2279 = vpack.c.b16 %v2225, %v2223
        %v2280 = vpack.c.b16 %v2228, %v2226
        %v2281 = vpack.c.b16 %v2229, %v2227
        %v2282 = vpack.c.b16 %v2232, %v2230
        %v2283 = vpack.c.b16 %v2233, %v2231
        %v2284 = vpack.c.b16 %v2236, %v2234
        %v2285 = vpack.c.b16 %v2237, %v2235
        %v2286 = vpack.c.b16 %v2240, %v2238
        %v2287 = vpack.c.b16 %v2241, %v2239
        %v2288 = vpack.c.b16 %v2244, %v2242
        %v2289 = vpack.c.b16 %v2245, %v2243
        %v2290 = vpack.c.b16 %v2248, %v2246
        %v2291 = vpack.c.b16 %v2249, %v2247
        %v2292 = vpack.c.b16 %v2252, %v2250
        %v2293 = vpack.c.b16 %v2253, %v2251
        %v2294 = vpack.c.b16 %v2256, %v2254
        %v2295 = vpack.c.b16 %v2257, %v2255
        %v2296 = vpack.c.b16 %v2260, %v2258
        %v2297 = vpack.c.b16 %v2261, %v2259
        %v2298 = vpack.c.b16 %v2264, %v2262
        %v2299 = vpack.c.b16 %v2265, %v2263
        %v2300 = vpack.c.b16 %v2268, %v2266
        %v2301 = vpack.c.b16 %v2269, %v2267
        %v2335 = vlaneseq
        %v2336 = vshrl.u32 %v2335, 7
        %v2337 = vsub.s32 0, %v2336
        %v2338 = vrot.slane %v2173, %v2337
        %v2339 = vlaneseq
        %v2340 = vshrl.u32 %v2339, 7
        %v2341 = vsub.s32 1, %v2340
        %v2342 = vrot.slane %v2173, %v2341
        %2345 = vmatprep.subr.bf16.mxu0 %v2271
        %2346 = vmatpush1.bf16.msra.mxu0 %v2270
        %2347 = vmatprep.subr.bf16.mxu0 %v2273
        %2348 = vmatpush1.bf16.msra.mxu0 %v2272
        %2349 = vmatprep.subr.bf16.mxu0 %v2275
        %2350 = vmatpush1.bf16.msra.mxu0 %v2274
        %2351 = vmatprep.subr.bf16.mxu0 %v2277
        %2352 = vmatpush1.bf16.msra.mxu0 %v2276
        %2353 = vmatprep.subr.bf16.mxu0 %v2279
        %2354 = vmatpush1.bf16.msra.mxu0 %v2278
        %2355 = vmatprep.subr.bf16.mxu0 %v2281
        %2356 = vmatpush1.bf16.msra.mxu0 %v2280
        %2357 = vmatprep.subr.bf16.mxu0 %v2283
        %2358 = vmatpush1.bf16.msra.mxu0 %v2282
        %2359 = vmatprep.subr.bf16.mxu0 %v2285
        %2360 = vmatpush1.bf16.msra.mxu0 %v2284
        %2361 = vmatprep.subr.bf16.mxu0 %v2287
        %2362 = vmatpush1.bf16.msra.mxu0 %v2286
        %2363 = vmatprep.subr.bf16.mxu0 %v2289
        %2364 = vmatpush1.bf16.msra.mxu0 %v2288
        %2365 = vmatprep.subr.bf16.mxu0 %v2291
        %2366 = vmatpush1.bf16.msra.mxu0 %v2290
        %2367 = vmatprep.subr.bf16.mxu0 %v2293
        %2368 = vmatpush1.bf16.msra.mxu0 %v2292
        %2369 = vmatprep.subr.bf16.mxu0 %v2295
        %2370 = vmatpush1.bf16.msra.mxu0 %v2294
        %2371 = vmatprep.subr.bf16.mxu0 %v2297
        %2372 = vmatpush1.bf16.msra.mxu0 %v2296
        %2373 = vmatprep.subr.bf16.mxu0 %v2299
        %2374 = vmatpush1.bf16.msra.mxu0 %v2298
        %2375 = vmatprep.subr.bf16.mxu0 %v2301
        %2376 = vmatpush1.bf16.msra.mxu0 %v2300
        %2377 = vmatprep.mubr.bf16.mxu0 %v2140
        %2378 = vmatmul.mubr.bf16.gmra.mrb[0].mxu0 %v2139
        %v2379 = vpop.f32.mrb[0].mxu0
        %v2380 = vadd.f32 %v2338, %v2379
        %v2381 = vpop.f32.mrb[0].mxu0
        %v2382 = vadd.f32 %v2342, %v2381
        %v2383 = vpop.f32.mrb[0].mxu0
        %v2384 = vpop.f32.mrb[0].mxu0
        %2385 = vdwg.mxu0
        %vm2386 = vcmp.gt.f32.partialorder %v2380, 0.0
        %vm2387 = vcmp.gt.f32.partialorder %v2382, 0.0
        %v2388 = vmul.f32 %v2380, 0.2
        %v2389 = vmul.f32 %v2382, 0.2
        %v2390 = vsel %vm2386, %v2380, %v2388
        %v2391 = vsel %vm2387, %v2382, %v2389
        %v2392 = vmul.f32 %v2390, %v2390
        %v2393 = vmul.f32 %v2391, %v2391
        %v2394 = vsel %vm759, %v2392, 0.0
        %v2395 = vsel %vm759, %v2393, 0.0
        %v2396 = vadd.f32 %v2394, %v2395
        %2397 = vadd.xlane.f32.xlu0 %v2396
        %v2398 = vpop.xlane.xlu0 %2397
        %v2399 = vrsqrt.pop %v2398
        %v2400 = vmul.f32 %v2390, %v2399
        %v2401 = vmul.f32 %v2391, %v2399
        %v2402 = vmul.f32 %v2116, %v2116
        %v2403 = vmul.f32 %v2117, %v2117
        %v2404 = vmul.f32 %v2120, %v2120
        %v2405 = vmul.f32 %v2121, %v2121
        %v2406 = vadd.f32 %v2402, %v2403
        %2407 = vadd.xlane.f32.xlu0 %v2406
        %v2408 = vpop.xlane.xlu0 %2407
        %v2409 = vadd.f32 %v2404, %v2405
        %2410 = vadd.xlane.f32.xlu0 %v2409
        %v2411 = vpop.xlane.xlu0 %2410
        %v2412 = vrsqrt.pop %v2408
        %v2413 = vrsqrt.pop %v2411
        %v2414 = vmul.f32 %v2116, %v2412
        %v2415 = vmul.f32 %v2117, %v2412
        %v2416 = vmul.f32 %v2120, %v2413
        %v2417 = vmul.f32 %v2121, %v2413
        %v2418 = vlaneseq
        %v2419 = vshrl.u32 %v2418, 7
        %v2420 = vsub.s32 0, %v2419
        %v2421 = vrot.slane %v2400, %v2420
        %v2422 = vlaneseq
        %v2423 = vshrl.u32 %v2422, 7
        %v2424 = vsub.s32 0, %v2423
        %v2425 = vrot.slane %v2401, %v2424
        %v2426 = vmul.f32 %v2421, %v2414
        %v2427 = vmul.f32 %v2425, %v2415
        %v2428 = vmul.f32 %v2421, %v2416
        %v2429 = vmul.f32 %v2425, %v2417
        %v2430 = vadd.f32 %v2426, %v2427
        %2431 = vadd.xlane.f32.xlu0 %v2430
        %v2432 = vpop.xlane.xlu0 %2431
        %v2433 = vadd.f32 %v2428, %v2429
        %2434 = vadd.xlane.f32.xlu0 %v2433
        %v2435 = vpop.xlane.xlu0 %2434
        %v2436 = vmul.f32 %v2116, %v2432
        %v2437 = vmul.f32 %v2117, %v2432
        %v2438 = vmul.f32 %v2120, %v2435
        %v2439 = vmul.f32 %v2121, %v2435
        %v2440 = vxor.u32 %v2436, 2147483648
        %v2441 = vxor.u32 %v2437, 2147483648
        %v2442 = vxor.u32 %v2438, 2147483648
        %v2443 = vxor.u32 %v2439, 2147483648
        %v2444 = vmul.f32 %v2440, 1.442695
        %v2445 = vpow.pop %v2444
        %v2446 = vmul.f32 %v2441, 1.442695
        %v2447 = vpow.pop %v2446
        %v2448 = vmul.f32 %v2442, 1.442695
        %v2449 = vpow.pop %v2448
        %v2450 = vmul.f32 %v2443, 1.442695
        %v2451 = vpow.pop %v2450
        %v2452 = vadd.f32 %v2445, 1.0
        %v2453 = vadd.f32 %v2447, 1.0
        %v2454 = vadd.f32 %v2449, 1.0
        %v2455 = vadd.f32 %v2451, 1.0
        %v2456 = vrcp.pop %v2452
        %v2457 = vmul.f32 1.0, %v2456
        %v2458 = vrcp.pop %v2453
        %v2459 = vmul.f32 1.0, %v2458
        %v2460 = vrcp.pop %v2454
        %v2461 = vmul.f32 1.0, %v2460
        %v2462 = vrcp.pop %v2455
        %v2463 = vmul.f32 1.0, %v2462
        %v2464 = vmul.f32 %v2457, %v751
        %v2465 = vmul.f32 %v2459, %v752
        %v2466 = vmul.f32 %v2461, %v753
        %v2467 = vmul.f32 %v2463, %v754
        %v2472 = vrot.slane %v2464, 7
        %v2473 = vrot.slane %v2465, 7
        %v2474 = vrot.slane %v2466, 7
        %v2475 = vsel %vm759, %v2472, %v2474
        %v2476 = vrot.slane %v2467, 7
        %v2477 = vsel %vm759, %v2473, %v2476
        %v2482 = vsel %vm759, 0.0, %v2472
        %v2483 = vsel %vm759, 0.0, %v2473
        %v2484 = vrot.slane %v2464, 1
        %v2485 = vrot.slane %v2466, 1
        %v2486 = vsel %vm772, %v2484, %v2485
        %v2487 = vrot.slane %v2465, 1
        %v2488 = vrot.slane %v2467, 1
        %v2489 = vsel %vm772, %v2487, %v2488
        %v2494 = vsel %vm772, %v2485, 0.0
        %v2495 = vsel %vm772, %v2488, 0.0
        %v2496 = vpack.c.bf16 %v2475, %v2482
        %v2497 = vpack.c.bf16 %v2477, %v2483
        %v2498 = vpack.c.bf16 %v2466, %v2464
        %v2499 = vpack.c.bf16 %v2467, %v2465
        %v2500 = vpack.c.bf16 %v2494, %v2486
        %v2501 = vpack.c.bf16 %v2495, %v2489
        %v2502 = vld [vmem:[#allocation17] sm:$0xf]
        %v2503 = vld [vmem:[#allocation17 + $0x4] sm:$0xf]
        %v2504 = vld [vmem:[#allocation17 + $0x8] sm:$0xf]
        %v2505 = vld [vmem:[#allocation17 + $0xc] sm:$0xf]
        %v2506 = vld [vmem:[#allocation17 + $0x10] sm:$0xf]
        %v2507 = vld [vmem:[#allocation17 + $0x14] sm:$0xf]
        %v2508 = vld [vmem:[#allocation17 + $0x18] sm:$0xf]
        %v2509 = vld [vmem:[#allocation17 + $0x1c] sm:$0xf]
        %v2510 = vld [vmem:[#allocation17 + $0x20] sm:$0xf]
        %v2511 = vld [vmem:[#allocation17 + $0x24] sm:$0xf]
        %v2512 = vld [vmem:[#allocation17 + $0x28] sm:$0xf]
        %v2513 = vld [vmem:[#allocation17 + $0x2c] sm:$0xf]
        %v2514 = vld [vmem:[#allocation17 + $0x30] sm:$0xf]
        %v2515 = vld [vmem:[#allocation17 + $0x34] sm:$0xf]
        %v2516 = vld [vmem:[#allocation17 + $0x38] sm:$0xf]
        %v2517 = vld [vmem:[#allocation17 + $0x3c] sm:$0xf]
        %v2518 = vld [vmem:[#allocation17 + $0x40] sm:$0xf]
        %v2519 = vld [vmem:[#allocation17 + $0x44] sm:$0xf]
        %v2520 = vld [vmem:[#allocation17 + $0x48] sm:$0xf]
        %v2521 = vld [vmem:[#allocation17 + $0x4c] sm:$0xf]
        %v2522 = vld [vmem:[#allocation17 + $0x50] sm:$0xf]
        %v2523 = vld [vmem:[#allocation17 + $0x54] sm:$0xf]
        %v2524 = vld [vmem:[#allocation17 + $0x58] sm:$0xf]
        %v2525 = vld [vmem:[#allocation17 + $0x5c] sm:$0xf]
        %v2526 = vld [vmem:[#allocation17 + $0x60] sm:$0xf]
        %v2527 = vld [vmem:[#allocation17 + $0x64] sm:$0xf]
        %v2528 = vld [vmem:[#allocation17 + $0x68] sm:$0xf]
        %v2529 = vld [vmem:[#allocation17 + $0x6c] sm:$0xf]
        %v2530 = vld [vmem:[#allocation17 + $0x70] sm:$0xf]
        %v2531 = vld [vmem:[#allocation17 + $0x74] sm:$0xf]
        %v2532 = vld [vmem:[#allocation17 + $0x78] sm:$0xf]
        %v2533 = vld [vmem:[#allocation17 + $0x7c] sm:$0xf]
        %v2534 = vld [vmem:[#allocation17 + $0x80] sm:$0xf]
        %v2535 = vld [vmem:[#allocation17 + $0x84] sm:$0xf]
        %v2536 = vld [vmem:[#allocation17 + $0x88] sm:$0xf]
        %v2537 = vld [vmem:[#allocation17 + $0x8c] sm:$0xf]
        %v2538 = vld [vmem:[#allocation17 + $0x90] sm:$0xf]
        %v2539 = vld [vmem:[#allocation17 + $0x94] sm:$0xf]
        %v2540 = vld [vmem:[#allocation17 + $0x98] sm:$0xf]
        %v2541 = vld [vmem:[#allocation17 + $0x9c] sm:$0xf]
        %v2542 = vld [vmem:[#allocation17 + $0xa0] sm:$0xf]
        %v2543 = vld [vmem:[#allocation17 + $0xa4] sm:$0xf]
        %v2544 = vld [vmem:[#allocation17 + $0xa8] sm:$0xf]
        %v2545 = vld [vmem:[#allocation17 + $0xac] sm:$0xf]
        %v2546 = vld [vmem:[#allocation17 + $0xb0] sm:$0xf]
        %v2547 = vld [vmem:[#allocation17 + $0xb4] sm:$0xf]
        %v2548 = vld [vmem:[#allocation17 + $0xb8] sm:$0xf]
        %v2549 = vld [vmem:[#allocation17 + $0xbc] sm:$0xf]
        %v2550 = vld [vmem:[#allocation17 + $0xc0] sm:$0xf]
        %v2551 = vld [vmem:[#allocation17 + $0xc4] sm:$0xf]
        %v2552 = vld [vmem:[#allocation17 + $0xc8] sm:$0xf]
        %v2553 = vld [vmem:[#allocation17 + $0xcc] sm:$0xf]
        %v2554 = vld [vmem:[#allocation17 + $0xd0] sm:$0xf]
        %v2555 = vld [vmem:[#allocation17 + $0xd4] sm:$0xf]
        %v2556 = vld [vmem:[#allocation17 + $0xd8] sm:$0xf]
        %v2557 = vld [vmem:[#allocation17 + $0xdc] sm:$0xf]
        %v2558 = vld [vmem:[#allocation17 + $0xe0] sm:$0xf]
        %v2559 = vld [vmem:[#allocation17 + $0xe4] sm:$0xf]
        %v2560 = vld [vmem:[#allocation17 + $0xe8] sm:$0xf]
        %v2561 = vld [vmem:[#allocation17 + $0xec] sm:$0xf]
        %v2562 = vld [vmem:[#allocation17 + $0xf0] sm:$0xf]
        %v2563 = vld [vmem:[#allocation17 + $0xf4] sm:$0xf]
        %v2564 = vld [vmem:[#allocation17 + $0xf8] sm:$0xf]
        %v2565 = vld [vmem:[#allocation17 + $0xfc] sm:$0xf]
        %v2566 = vld [vmem:[#allocation17 + $0x100] sm:$0xf]
        %v2567 = vld [vmem:[#allocation17 + $0x104] sm:$0xf]
        %v2568 = vld [vmem:[#allocation17 + $0x108] sm:$0xf]
        %v2569 = vld [vmem:[#allocation17 + $0x10c] sm:$0xf]
        %v2570 = vld [vmem:[#allocation17 + $0x110] sm:$0xf]
        %v2571 = vld [vmem:[#allocation17 + $0x114] sm:$0xf]
        %v2572 = vld [vmem:[#allocation17 + $0x118] sm:$0xf]
        %v2573 = vld [vmem:[#allocation17 + $0x11c] sm:$0xf]
        %v2574 = vld [vmem:[#allocation17 + $0x120] sm:$0xf]
        %v2575 = vld [vmem:[#allocation17 + $0x124] sm:$0xf]
        %v2576 = vld [vmem:[#allocation17 + $0x128] sm:$0xf]
        %v2577 = vld [vmem:[#allocation17 + $0x12c] sm:$0xf]
        %v2578 = vld [vmem:[#allocation17 + $0x130] sm:$0xf]
        %v2579 = vld [vmem:[#allocation17 + $0x134] sm:$0xf]
        %v2580 = vld [vmem:[#allocation17 + $0x138] sm:$0xf]
        %v2581 = vld [vmem:[#allocation17 + $0x13c] sm:$0xf]
        %v2582 = vld [vmem:[#allocation17 + $0x140] sm:$0xf]
        %v2583 = vld [vmem:[#allocation17 + $0x144] sm:$0xf]
        %v2584 = vld [vmem:[#allocation17 + $0x148] sm:$0xf]
        %v2585 = vld [vmem:[#allocation17 + $0x14c] sm:$0xf]
        %v2586 = vld [vmem:[#allocation17 + $0x150] sm:$0xf]
        %v2587 = vld [vmem:[#allocation17 + $0x154] sm:$0xf]
        %v2588 = vld [vmem:[#allocation17 + $0x158] sm:$0xf]
        %v2589 = vld [vmem:[#allocation17 + $0x15c] sm:$0xf]
        %v2590 = vld [vmem:[#allocation17 + $0x160] sm:$0xf]
        %v2591 = vld [vmem:[#allocation17 + $0x164] sm:$0xf]
        %v2592 = vld [vmem:[#allocation17 + $0x168] sm:$0xf]
        %v2593 = vld [vmem:[#allocation17 + $0x16c] sm:$0xf]
        %v2594 = vld [vmem:[#allocation17 + $0x170] sm:$0xf]
        %v2595 = vld [vmem:[#allocation17 + $0x174] sm:$0xf]
        %v2596 = vld [vmem:[#allocation17 + $0x178] sm:$0xf]
        %v2597 = vld [vmem:[#allocation17 + $0x17c] sm:$0xf]
        %v2598 = vld [vmem:[#allocation18] sm:$0x1]
        %v2600 = vlaneseq
        %v2601 = vshrl.u32 %v2600, 7
        %v2602 = vsub.s32 0, %v2601
        %v2603 = vrot.slane %v2598, %v2602
        %v2701 = vunpack.c.l.b16 %v2502
        %v2702 = vunpack.c.l.b16 %v2503
        %v2703 = vunpack.c.l.b16 %v2504
        %v2704 = vunpack.c.l.b16 %v2505
        %v2705 = vunpack.c.l.b16 %v2506
        %v2706 = vunpack.c.l.b16 %v2507
        %v2707 = vunpack.c.l.b16 %v2508
        %v2708 = vunpack.c.l.b16 %v2509
        %v2709 = vunpack.c.l.b16 %v2510
        %v2710 = vunpack.c.l.b16 %v2511
        %v2711 = vunpack.c.l.b16 %v2512
        %v2712 = vunpack.c.l.b16 %v2513
        %v2713 = vunpack.c.l.b16 %v2514
        %v2714 = vunpack.c.l.b16 %v2515
        %v2715 = vunpack.c.l.b16 %v2516
        %v2716 = vunpack.c.l.b16 %v2517
        %v2717 = vunpack.c.l.b16 %v2518
        %v2718 = vunpack.c.l.b16 %v2519
        %v2719 = vunpack.c.l.b16 %v2520
        %v2720 = vunpack.c.l.b16 %v2521
        %v2721 = vunpack.c.l.b16 %v2522
        %v2722 = vunpack.c.l.b16 %v2523
        %v2723 = vunpack.c.l.b16 %v2524
        %v2724 = vunpack.c.l.b16 %v2525
        %v2725 = vunpack.c.l.b16 %v2526
        %v2726 = vunpack.c.l.b16 %v2527
        %v2727 = vunpack.c.l.b16 %v2528
        %v2728 = vunpack.c.l.b16 %v2529
        %v2729 = vunpack.c.l.b16 %v2530
        %v2730 = vunpack.c.l.b16 %v2531
        %v2731 = vunpack.c.l.b16 %v2532
        %v2732 = vunpack.c.l.b16 %v2533
        %v2733 = vunpack.c.l.b16 %v2534
        %v2734 = vunpack.c.l.b16 %v2535
        %v2735 = vunpack.c.l.b16 %v2536
        %v2736 = vunpack.c.l.b16 %v2537
        %v2737 = vunpack.c.l.b16 %v2538
        %v2738 = vunpack.c.l.b16 %v2539
        %v2739 = vunpack.c.l.b16 %v2540
        %v2740 = vunpack.c.l.b16 %v2541
        %v2741 = vunpack.c.l.b16 %v2542
        %v2742 = vunpack.c.l.b16 %v2543
        %v2743 = vunpack.c.l.b16 %v2544
        %v2744 = vunpack.c.l.b16 %v2545
        %v2745 = vunpack.c.l.b16 %v2546
        %v2746 = vunpack.c.l.b16 %v2547
        %v2747 = vunpack.c.l.b16 %v2548
        %v2748 = vunpack.c.l.b16 %v2549
        %v2749 = vunpack.c.l.b16 %v2550
        %v2750 = vunpack.c.l.b16 %v2551
        %v2751 = vunpack.c.l.b16 %v2552
        %v2752 = vunpack.c.l.b16 %v2553
        %v2753 = vunpack.c.l.b16 %v2554
        %v2754 = vunpack.c.l.b16 %v2555
        %v2755 = vunpack.c.l.b16 %v2556
        %v2756 = vunpack.c.l.b16 %v2557
        %v2757 = vunpack.c.l.b16 %v2558
        %v2758 = vunpack.c.l.b16 %v2559
        %v2759 = vunpack.c.l.b16 %v2560
        %v2760 = vunpack.c.l.b16 %v2561
        %v2761 = vunpack.c.l.b16 %v2562
        %v2762 = vunpack.c.l.b16 %v2563
        %v2763 = vunpack.c.l.b16 %v2564
        %v2764 = vunpack.c.l.b16 %v2565
        %v2765 = vunpack.c.l.b16 %v2566
        %v2766 = vunpack.c.l.b16 %v2567
        %v2767 = vunpack.c.l.b16 %v2568
        %v2768 = vunpack.c.l.b16 %v2569
        %v2769 = vunpack.c.l.b16 %v2570
        %v2770 = vunpack.c.l.b16 %v2571
        %v2771 = vunpack.c.l.b16 %v2572
        %v2772 = vunpack.c.l.b16 %v2573
        %v2773 = vunpack.c.l.b16 %v2574
        %v2774 = vunpack.c.l.b16 %v2575
        %v2775 = vunpack.c.l.b16 %v2576
        %v2776 = vunpack.c.l.b16 %v2577
        %v2777 = vunpack.c.l.b16 %v2578
        %v2778 = vunpack.c.l.b16 %v2579
        %v2779 = vunpack.c.l.b16 %v2580
        %v2780 = vunpack.c.l.b16 %v2581
        %v2781 = vunpack.c.l.b16 %v2582
        %v2782 = vunpack.c.l.b16 %v2583
        %v2783 = vunpack.c.l.b16 %v2584
        %v2784 = vunpack.c.l.b16 %v2585
        %v2785 = vunpack.c.l.b16 %v2586
        %v2786 = vunpack.c.l.b16 %v2587
        %v2787 = vunpack.c.l.b16 %v2588
        %v2788 = vunpack.c.l.b16 %v2589
        %v2789 = vunpack.c.l.b16 %v2590
        %v2790 = vunpack.c.l.b16 %v2591
        %v2791 = vunpack.c.l.b16 %v2592
        %v2792 = vunpack.c.l.b16 %v2593
        %v2793 = vunpack.c.l.b16 %v2594
        %v2794 = vunpack.c.l.b16 %v2595
        %v2795 = vunpack.c.l.b16 %v2596
        %v2796 = vunpack.c.l.b16 %v2597
        %v2797 = vpack.c.b16 %v2702, %v2701
        %v2798 = vpack.c.b16 %v2704, %v2703
        %v2799 = vpack.c.b16 %v2706, %v2705
        %v2800 = vpack.c.b16 %v2708, %v2707
        %v2801 = vpack.c.b16 %v2710, %v2709
        %v2802 = vpack.c.b16 %v2712, %v2711
        %v2803 = vpack.c.b16 %v2714, %v2713
        %v2804 = vpack.c.b16 %v2716, %v2715
        %v2805 = vpack.c.b16 %v2718, %v2717
        %v2806 = vpack.c.b16 %v2720, %v2719
        %v2807 = vpack.c.b16 %v2722, %v2721
        %v2808 = vpack.c.b16 %v2724, %v2723
        %v2809 = vpack.c.b16 %v2726, %v2725
        %v2810 = vpack.c.b16 %v2728, %v2727
        %v2811 = vpack.c.b16 %v2730, %v2729
        %v2812 = vpack.c.b16 %v2732, %v2731
        %v2813 = vpack.c.b16 %v2734, %v2733
        %v2814 = vpack.c.b16 %v2736, %v2735
        %v2815 = vpack.c.b16 %v2738, %v2737
        %v2816 = vpack.c.b16 %v2740, %v2739
        %v2817 = vpack.c.b16 %v2742, %v2741
        %v2818 = vpack.c.b16 %v2744, %v2743
        %v2819 = vpack.c.b16 %v2746, %v2745
        %v2820 = vpack.c.b16 %v2748, %v2747
        %v2821 = vpack.c.b16 %v2750, %v2749
        %v2822 = vpack.c.b16 %v2752, %v2751
        %v2823 = vpack.c.b16 %v2754, %v2753
        %v2824 = vpack.c.b16 %v2756, %v2755
        %v2825 = vpack.c.b16 %v2758, %v2757
        %v2826 = vpack.c.b16 %v2760, %v2759
        %v2827 = vpack.c.b16 %v2762, %v2761
        %v2828 = vpack.c.b16 %v2764, %v2763
        %v2829 = vpack.c.b16 %v2766, %v2765
        %v2830 = vpack.c.b16 %v2768, %v2767
        %v2831 = vpack.c.b16 %v2770, %v2769
        %v2832 = vpack.c.b16 %v2772, %v2771
        %v2833 = vpack.c.b16 %v2774, %v2773
        %v2834 = vpack.c.b16 %v2776, %v2775
        %v2835 = vpack.c.b16 %v2778, %v2777
        %v2836 = vpack.c.b16 %v2780, %v2779
        %v2837 = vpack.c.b16 %v2782, %v2781
        %v2838 = vpack.c.b16 %v2784, %v2783
        %v2839 = vpack.c.b16 %v2786, %v2785
        %v2840 = vpack.c.b16 %v2788, %v2787
        %v2841 = vpack.c.b16 %v2790, %v2789
        %v2842 = vpack.c.b16 %v2792, %v2791
        %v2843 = vpack.c.b16 %v2794, %v2793
        %v2844 = vpack.c.b16 %v2796, %v2795
        %2893 = vmatprep.subr.bf16.mxu0 0
        %2894 = vmatpush1.bf16.msra.mxu0 %v2797
        %2895 = vmatprep.subr.bf16.mxu0 0
        %2896 = vmatpush1.bf16.msra.mxu0 %v2798
        %2897 = vmatprep.subr.bf16.mxu0 0
        %2898 = vmatpush1.bf16.msra.mxu0 %v2799
        %2899 = vmatprep.subr.bf16.mxu0 0
        %2900 = vmatpush1.bf16.msra.mxu0 %v2800
        %2901 = vmatprep.subr.bf16.mxu0 0
        %2902 = vmatpush1.bf16.msra.mxu0 %v2801
        %2903 = vmatprep.subr.bf16.mxu0 0
        %2904 = vmatpush1.bf16.msra.mxu0 %v2802
        %2905 = vmatprep.subr.bf16.mxu0 0
        %2906 = vmatpush1.bf16.msra.mxu0 %v2803
        %2907 = vmatprep.subr.bf16.mxu0 0
        %2908 = vmatpush1.bf16.msra.mxu0 %v2804
        %2909 = vmatprep.subr.bf16.mxu0 0
        %2910 = vmatpush1.bf16.msra.mxu0 %v2805
        %2911 = vmatprep.subr.bf16.mxu0 0
        %2912 = vmatpush1.bf16.msra.mxu0 %v2806
        %2913 = vmatprep.subr.bf16.mxu0 0
        %2914 = vmatpush1.bf16.msra.mxu0 %v2807
        %2915 = vmatprep.subr.bf16.mxu0 0
        %2916 = vmatpush1.bf16.msra.mxu0 %v2808
        %2917 = vmatprep.subr.bf16.mxu0 0
        %2918 = vmatpush1.bf16.msra.mxu0 %v2809
        %2919 = vmatprep.subr.bf16.mxu0 0
        %2920 = vmatpush1.bf16.msra.mxu0 %v2810
        %2921 = vmatprep.subr.bf16.mxu0 0
        %2922 = vmatpush1.bf16.msra.mxu0 %v2811
        %2923 = vmatprep.subr.bf16.mxu0 0
        %2924 = vmatpush1.bf16.msra.mxu0 %v2812
        %2925 = vmatprep.mubr.bf16.mxu0 %v2497
        %2926 = vmatmul.mubr.bf16.gmra.mrb[0].mxu0 %v2496
        %v2927 = vpop.f32.mrb[0].mxu0
        %v2928 = vadd.f32 %v2603, %v2927
        %v2929 = vpop.f32.mrb[0].mxu0
        %v2930 = vpop.f32.mrb[0].mxu0
        %v2931 = vadd.f32 %v2603, %v2930
        %v2932 = vpop.f32.mrb[0].mxu0
        %2933 = vdwg.mxu0
        %2934 = vmatprep.subr.bf16.mxu0 0
        %2935 = vmatpush1.bf16.msra.mxu0 %v2813
        %2936 = vmatprep.subr.bf16.mxu0 0
        %2937 = vmatpush1.bf16.msra.mxu0 %v2814
        %2938 = vmatprep.subr.bf16.mxu0 0
        %2939 = vmatpush1.bf16.msra.mxu0 %v2815
        %2940 = vmatprep.subr.bf16.mxu0 0
        %2941 = vmatpush1.bf16.msra.mxu0 %v2816
        %2942 = vmatprep.subr.bf16.mxu0 0
        %2943 = vmatpush1.bf16.msra.mxu0 %v2817
        %2944 = vmatprep.subr.bf16.mxu0 0
        %2945 = vmatpush1.bf16.msra.mxu0 %v2818
        %2946 = vmatprep.subr.bf16.mxu0 0
        %2947 = vmatpush1.bf16.msra.mxu0 %v2819
        %2948 = vmatprep.subr.bf16.mxu0 0
        %2949 = vmatpush1.bf16.msra.mxu0 %v2820
        %2950 = vmatprep.subr.bf16.mxu0 0
        %2951 = vmatpush1.bf16.msra.mxu0 %v2821
        %2952 = vmatprep.subr.bf16.mxu0 0
        %2953 = vmatpush1.bf16.msra.mxu0 %v2822
        %2954 = vmatprep.subr.bf16.mxu0 0
        %2955 = vmatpush1.bf16.msra.mxu0 %v2823
        %2956 = vmatprep.subr.bf16.mxu0 0
        %2957 = vmatpush1.bf16.msra.mxu0 %v2824
        %2958 = vmatprep.subr.bf16.mxu0 0
        %2959 = vmatpush1.bf16.msra.mxu0 %v2825
        %2960 = vmatprep.subr.bf16.mxu0 0
        %2961 = vmatpush1.bf16.msra.mxu0 %v2826
        %2962 = vmatprep.subr.bf16.mxu0 0
        %2963 = vmatpush1.bf16.msra.mxu0 %v2827
        %2964 = vmatprep.subr.bf16.mxu0 0
        %2965 = vmatpush1.bf16.msra.mxu0 %v2828
        %2966 = vmatprep.mubr.bf16.mxu0 %v2499
        %2967 = vmatmul.mubr.bf16.gmra.mrb[0].mxu0 %v2498
        %v2968 = vpop.f32.mrb[0].mxu0
        %v2969 = vadd.f32 %v2928, %v2968
        %v2970 = vpop.f32.mrb[0].mxu0
        %v2971 = vpop.f32.mrb[0].mxu0
        %v2972 = vadd.f32 %v2931, %v2971
        %v2973 = vpop.f32.mrb[0].mxu0
        %2974 = vdwg.mxu0
        %2975 = vmatprep.subr.bf16.mxu0 0
        %2976 = vmatpush1.bf16.msra.mxu0 %v2829
        %2977 = vmatprep.subr.bf16.mxu0 0
        %2978 = vmatpush1.bf16.msra.mxu0 %v2830
        %2979 = vmatprep.subr.bf16.mxu0 0
        %2980 = vmatpush1.bf16.msra.mxu0 %v2831
        %2981 = vmatprep.subr.bf16.mxu0 0
        %2982 = vmatpush1.bf16.msra.mxu0 %v2832
        %2983 = vmatprep.subr.bf16.mxu0 0
        %2984 = vmatpush1.bf16.msra.mxu0 %v2833
        %2985 = vmatprep.subr.bf16.mxu0 0
        %2986 = vmatpush1.bf16.msra.mxu0 %v2834
        %2987 = vmatprep.subr.bf16.mxu0 0
        %2988 = vmatpush1.bf16.msra.mxu0 %v2835
        %2989 = vmatprep.subr.bf16.mxu0 0
        %2990 = vmatpush1.bf16.msra.mxu0 %v2836
        %2991 = vmatprep.subr.bf16.mxu0 0
        %2992 = vmatpush1.bf16.msra.mxu0 %v2837
        %2993 = vmatprep.subr.bf16.mxu0 0
        %2994 = vmatpush1.bf16.msra.mxu0 %v2838
        %2995 = vmatprep.subr.bf16.mxu0 0
        %2996 = vmatpush1.bf16.msra.mxu0 %v2839
        %2997 = vmatprep.subr.bf16.mxu0 0
        %2998 = vmatpush1.bf16.msra.mxu0 %v2840
        %2999 = vmatprep.subr.bf16.mxu0 0
        %3000 = vmatpush1.bf16.msra.mxu0 %v2841
        %3001 = vmatprep.subr.bf16.mxu0 0
        %3002 = vmatpush1.bf16.msra.mxu0 %v2842
        %3003 = vmatprep.subr.bf16.mxu0 0
        %3004 = vmatpush1.bf16.msra.mxu0 %v2843
        %3005 = vmatprep.subr.bf16.mxu0 0
        %3006 = vmatpush1.bf16.msra.mxu0 %v2844
        %3007 = vmatprep.mubr.bf16.mxu0 %v2501
        %3008 = vmatmul.mubr.bf16.gmra.mrb[0].mxu0 %v2500
        %v3009 = vpop.f32.mrb[0].mxu0
        %v3010 = vadd.f32 %v2969, %v3009
        %v3011 = vpop.f32.mrb[0].mxu0
        %v3012 = vpop.f32.mrb[0].mxu0
        %v3013 = vadd.f32 %v2972, %v3012
        %v3014 = vpop.f32.mrb[0].mxu0
        %3015 = vdwg.mxu0
        %vm3016 = vcmp.gt.f32.partialorder %v3010, 0.0
        %vm3017 = vcmp.gt.f32.partialorder %v3013, 0.0
        %v3018 = vmul.f32 %v3010, 0.2
        %v3019 = vmul.f32 %v3013, 0.2
        %v3020 = vsel %vm3016, %v3010, %v3018
        %v3021 = vsel %vm3017, %v3013, %v3019
        %v3024 = vrot.slane %v3020, 7
        %v3025 = vrot.slane %v3021, 7
        %v3026 = vsel %vm759, %v3024, %v3025
        %v3029 = vsel %vm759, 0.0, %v3024
        %v3030 = vrot.slane %v3020, 1
        %v3031 = vrot.slane %v3021, 1
        %v3032 = vsel %vm772, %v3030, %v3031
        %v3035 = vsel %vm772, %v3031, 0.0
        %v3036 = vpack.c.bf16 %v3026, %v3029
        %v3037 = vpack.c.bf16 %v3021, %v3020
        %v3038 = vpack.c.bf16 %v3035, %v3032
        %v3039 = vld [vmem:[#allocation20] sm:$0xf]
        %v3040 = vld [vmem:[#allocation20 + $0x4] sm:$0xf]
        %v3041 = vld [vmem:[#allocation20 + $0x8] sm:$0xf]
        %v3042 = vld [vmem:[#allocation20 + $0xc] sm:$0xf]
        %v3043 = vld [vmem:[#allocation20 + $0x10] sm:$0xf]
        %v3044 = vld [vmem:[#allocation20 + $0x14] sm:$0xf]
        %v3045 = vld [vmem:[#allocation20 + $0x18] sm:$0xf]
        %v3046 = vld [vmem:[#allocation20 + $0x1c] sm:$0xf]
        %v3047 = vld [vmem:[#allocation20 + $0x20] sm:$0xf]
        %v3048 = vld [vmem:[#allocation20 + $0x24] sm:$0xf]
        %v3049 = vld [vmem:[#allocation20 + $0x28] sm:$0xf]
        %v3050 = vld [vmem:[#allocation20 + $0x2c] sm:$0xf]
        %v3051 = vld [vmem:[#allocation20 + $0x30] sm:$0xf]
        %v3052 = vld [vmem:[#allocation20 + $0x34] sm:$0xf]
        %v3053 = vld [vmem:[#allocation20 + $0x38] sm:$0xf]
        %v3054 = vld [vmem:[#allocation20 + $0x3c] sm:$0xf]
        %v3055 = vld [vmem:[#allocation20 + $0x40] sm:$0xf]
        %v3056 = vld [vmem:[#allocation20 + $0x44] sm:$0xf]
        %v3057 = vld [vmem:[#allocation20 + $0x48] sm:$0xf]
        %v3058 = vld [vmem:[#allocation20 + $0x4c] sm:$0xf]
        %v3059 = vld [vmem:[#allocation20 + $0x50] sm:$0xf]
        %v3060 = vld [vmem:[#allocation20 + $0x54] sm:$0xf]
        %v3061 = vld [vmem:[#allocation20 + $0x58] sm:$0xf]
        %v3062 = vld [vmem:[#allocation20 + $0x5c] sm:$0xf]
        %v3063 = vld [vmem:[#allocation20 + $0x60] sm:$0xf]
        %v3064 = vld [vmem:[#allocation20 + $0x64] sm:$0xf]
        %v3065 = vld [vmem:[#allocation20 + $0x68] sm:$0xf]
        %v3066 = vld [vmem:[#allocation20 + $0x6c] sm:$0xf]
        %v3067 = vld [vmem:[#allocation20 + $0x70] sm:$0xf]
        %v3068 = vld [vmem:[#allocation20 + $0x74] sm:$0xf]
        %v3069 = vld [vmem:[#allocation20 + $0x78] sm:$0xf]
        %v3070 = vld [vmem:[#allocation20 + $0x7c] sm:$0xf]
        %v3071 = vld [vmem:[#allocation20 + $0x80] sm:$0xf]
        %v3072 = vld [vmem:[#allocation20 + $0x84] sm:$0xf]
        %v3073 = vld [vmem:[#allocation20 + $0x88] sm:$0xf]
        %v3074 = vld [vmem:[#allocation20 + $0x8c] sm:$0xf]
        %v3075 = vld [vmem:[#allocation20 + $0x90] sm:$0xf]
        %v3076 = vld [vmem:[#allocation20 + $0x94] sm:$0xf]
        %v3077 = vld [vmem:[#allocation20 + $0x98] sm:$0xf]
        %v3078 = vld [vmem:[#allocation20 + $0x9c] sm:$0xf]
        %v3079 = vld [vmem:[#allocation20 + $0xa0] sm:$0xf]
        %v3080 = vld [vmem:[#allocation20 + $0xa4] sm:$0xf]
        %v3081 = vld [vmem:[#allocation20 + $0xa8] sm:$0xf]
        %v3082 = vld [vmem:[#allocation20 + $0xac] sm:$0xf]
        %v3083 = vld [vmem:[#allocation20 + $0xb0] sm:$0xf]
        %v3084 = vld [vmem:[#allocation20 + $0xb4] sm:$0xf]
        %v3085 = vld [vmem:[#allocation20 + $0xb8] sm:$0xf]
        %v3086 = vld [vmem:[#allocation20 + $0xbc] sm:$0xf]
        %v3087 = vld [vmem:[#allocation21] sm:$0x1]
        %v3089 = vlaneseq
        %v3090 = vshrl.u32 %v3089, 7
        %v3091 = vsub.s32 0, %v3090
        %v3092 = vrot.slane %v3087, %v3091
        %v3142 = vunpack.c.l.b16 %v3039
        %v3143 = vunpack.c.l.b16 %v3040
        %v3144 = vunpack.c.l.b16 %v3041
        %v3145 = vunpack.c.l.b16 %v3042
        %v3146 = vunpack.c.l.b16 %v3043
        %v3147 = vunpack.c.l.b16 %v3044
        %v3148 = vunpack.c.l.b16 %v3045
        %v3149 = vunpack.c.l.b16 %v3046
        %v3150 = vunpack.c.l.b16 %v3047
        %v3151 = vunpack.c.l.b16 %v3048
        %v3152 = vunpack.c.l.b16 %v3049
        %v3153 = vunpack.c.l.b16 %v3050
        %v3154 = vunpack.c.l.b16 %v3051
        %v3155 = vunpack.c.l.b16 %v3052
        %v3156 = vunpack.c.l.b16 %v3053
        %v3157 = vunpack.c.l.b16 %v3054
        %v3158 = vunpack.c.l.b16 %v3055
        %v3159 = vunpack.c.l.b16 %v3056
        %v3160 = vunpack.c.l.b16 %v3057
        %v3161 = vunpack.c.l.b16 %v3058
        %v3162 = vunpack.c.l.b16 %v3059
        %v3163 = vunpack.c.l.b16 %v3060
        %v3164 = vunpack.c.l.b16 %v3061
        %v3165 = vunpack.c.l.b16 %v3062
        %v3166 = vunpack.c.l.b16 %v3063
        %v3167 = vunpack.c.l.b16 %v3064
        %v3168 = vunpack.c.l.b16 %v3065
        %v3169 = vunpack.c.l.b16 %v3066
        %v3170 = vunpack.c.l.b16 %v3067
        %v3171 = vunpack.c.l.b16 %v3068
        %v3172 = vunpack.c.l.b16 %v3069
        %v3173 = vunpack.c.l.b16 %v3070
        %v3174 = vunpack.c.l.b16 %v3071
        %v3175 = vunpack.c.l.b16 %v3072
        %v3176 = vunpack.c.l.b16 %v3073
        %v3177 = vunpack.c.l.b16 %v3074
        %v3178 = vunpack.c.l.b16 %v3075
        %v3179 = vunpack.c.l.b16 %v3076
        %v3180 = vunpack.c.l.b16 %v3077
        %v3181 = vunpack.c.l.b16 %v3078
        %v3182 = vunpack.c.l.b16 %v3079
        %v3183 = vunpack.c.l.b16 %v3080
        %v3184 = vunpack.c.l.b16 %v3081
        %v3185 = vunpack.c.l.b16 %v3082
        %v3186 = vunpack.c.l.b16 %v3083
        %v3187 = vunpack.c.l.b16 %v3084
        %v3188 = vunpack.c.l.b16 %v3085
        %v3189 = vunpack.c.l.b16 %v3086
        %v3190 = vpack.c.b16 %v3143, %v3142
        %v3191 = vpack.c.b16 %v3145, %v3144
        %v3192 = vpack.c.b16 %v3147, %v3146
        %v3193 = vpack.c.b16 %v3149, %v3148
        %v3194 = vpack.c.b16 %v3151, %v3150
        %v3195 = vpack.c.b16 %v3153, %v3152
        %v3196 = vpack.c.b16 %v3155, %v3154
        %v3197 = vpack.c.b16 %v3157, %v3156
        %v3198 = vpack.c.b16 %v3159, %v3158
        %v3199 = vpack.c.b16 %v3161, %v3160
        %v3200 = vpack.c.b16 %v3163, %v3162
        %v3201 = vpack.c.b16 %v3165, %v3164
        %v3202 = vpack.c.b16 %v3167, %v3166
        %v3203 = vpack.c.b16 %v3169, %v3168
        %v3204 = vpack.c.b16 %v3171, %v3170
        %v3205 = vpack.c.b16 %v3173, %v3172
        %v3206 = vpack.c.b16 %v3175, %v3174
        %v3207 = vpack.c.b16 %v3177, %v3176
        %v3208 = vpack.c.b16 %v3179, %v3178
        %v3209 = vpack.c.b16 %v3181, %v3180
        %v3210 = vpack.c.b16 %v3183, %v3182
        %v3211 = vpack.c.b16 %v3185, %v3184
        %v3212 = vpack.c.b16 %v3187, %v3186
        %v3213 = vpack.c.b16 %v3189, %v3188
        %3238 = vmatprep.subr.bf16.mxu0 0
        %3239 = vmatpush1.bf16.msra.mxu0 %v3190
        %3240 = vmatprep.subr.bf16.mxu0 0
        %3241 = vmatpush1.bf16.msra.mxu0 %v3191
        %3242 = vmatprep.subr.bf16.mxu0 0
        %3243 = vmatpush1.bf16.msra.mxu0 %v3192
        %3244 = vmatprep.subr.bf16.mxu0 0
        %3245 = vmatpush1.bf16.msra.mxu0 %v3193
        %3246 = vmatprep.subr.bf16.mxu0 0
        %3247 = vmatpush1.bf16.msra.mxu0 %v3194
        %3248 = vmatprep.subr.bf16.mxu0 0
        %3249 = vmatpush1.bf16.msra.mxu0 %v3195
        %3250 = vmatprep.subr.bf16.mxu0 0
        %3251 = vmatpush1.bf16.msra.mxu0 %v3196
        %3252 = vmatprep.subr.bf16.mxu0 0
        %3253 = vmatpush1.bf16.msra.mxu0 %v3197
        %3254 = vmatprep.subr.bf16.mxu0 0
        %3255 = vmatpush1.bf16.msra.mxu0 %v3198
        %3256 = vmatprep.subr.bf16.mxu0 0
        %3257 = vmatpush1.bf16.msra.mxu0 %v3199
        %3258 = vmatprep.subr.bf16.mxu0 0
        %3259 = vmatpush1.bf16.msra.mxu0 %v3200
        %3260 = vmatprep.subr.bf16.mxu0 0
        %3261 = vmatpush1.bf16.msra.mxu0 %v3201
        %3262 = vmatprep.subr.bf16.mxu0 0
        %3263 = vmatpush1.bf16.msra.mxu0 %v3202
        %3264 = vmatprep.subr.bf16.mxu0 0
        %3265 = vmatpush1.bf16.msra.mxu0 %v3203
        %3266 = vmatprep.subr.bf16.mxu0 0
        %3267 = vmatpush1.bf16.msra.mxu0 %v3204
        %3268 = vmatprep.subr.bf16.mxu0 0
        %3269 = vmatpush1.bf16.msra.mxu0 %v3205
        %3270 = vmatprep.mubr.bf16.mxu0 %v3037
        %3271 = vmatmul.mubr.bf16.gmra.mrb[0].mxu0 %v3036
        %v3272 = vpop.f32.mrb[0].mxu0
        %v3273 = vadd.f32 %v3092, %v3272
        %v3274 = vpop.f32.mrb[0].mxu0
        %v3275 = vpop.f32.mrb[0].mxu0
        %v3276 = vadd.f32 %v3092, %v3275
        %v3277 = vpop.f32.mrb[0].mxu0
        %3278 = vdwg.mxu0
        %3279 = vmatprep.subr.bf16.mxu0 0
        %3280 = vmatpush1.bf16.msra.mxu0 %v3206
        %3281 = vmatprep.subr.bf16.mxu0 0
        %3282 = vmatpush1.bf16.msra.mxu0 %v3207
        %3283 = vmatprep.subr.bf16.mxu0 0
        %3284 = vmatpush1.bf16.msra.mxu0 %v3208
        %3285 = vmatprep.subr.bf16.mxu0 0
        %3286 = vmatpush1.bf16.msra.mxu0 %v3209
        %3287 = vmatprep.subr.bf16.mxu0 0
        %3288 = vmatpush1.bf16.msra.mxu0 %v3210
        %3289 = vmatprep.subr.bf16.mxu0 0
        %3290 = vmatpush1.bf16.msra.mxu0 %v3211
        %3291 = vmatprep.subr.bf16.mxu0 0
        %3292 = vmatpush1.bf16.msra.mxu0 %v3212
        %3293 = vmatprep.subr.bf16.mxu0 0
        %3294 = vmatpush1.bf16.msra.mxu0 %v3213
        %3295 = vmatprep.subr.bf16.mxu0 0
        %3296 = vmatpush1.bf16.msra.mxu0 0
        %3297 = vmatprep.subr.bf16.mxu0 0
        %3298 = vmatpush1.bf16.msra.mxu0 0
        %3299 = vmatprep.subr.bf16.mxu0 0
        %3300 = vmatpush1.bf16.msra.mxu0 0
        %3301 = vmatprep.subr.bf16.mxu0 0
        %3302 = vmatpush1.bf16.msra.mxu0 0
        %3303 = vmatprep.subr.bf16.mxu0 0
        %3304 = vmatpush1.bf16.msra.mxu0 0
        %3305 = vmatprep.subr.bf16.mxu0 0
        %3306 = vmatpush1.bf16.msra.mxu0 0
        %3307 = vmatprep.subr.bf16.mxu0 0
        %3308 = vmatpush1.bf16.msra.mxu0 0
        %3309 = vmatprep.subr.bf16.mxu0 0
        %3310 = vmatpush1.bf16.msra.mxu0 0
        %3311 = vmatprep.mubr.bf16.mxu0 0
        %3312 = vmatmul.mubr.bf16.gmra.mrb[0].mxu0 %v3038
        %v3313 = vpop.f32.mrb[0].mxu0
        %v3314 = vadd.f32 %v3273, %v3313
        %v3315 = vpop.f32.mrb[0].mxu0
        %v3316 = vpop.f32.mrb[0].mxu0
        %v3317 = vadd.f32 %v3276, %v3316
        %v3318 = vpop.f32.mrb[0].mxu0
        %3319 = vdwg.mxu0
        %vm3320 = vcmp.gt.f32.partialorder %v3314, 0.0
        %vm3321 = vcmp.gt.f32.partialorder %v3317, 0.0
        %v3322 = vmul.f32 %v3314, 0.2
        %v3323 = vmul.f32 %v3317, 0.2
        %v3324 = vsel %vm3320, %v3314, %v3322
        %v3325 = vsel %vm3321, %v3317, %v3323
        %v3326 = vld [vmem:[#allocation23] sm:$0x1]
        %v3327 = vld [vmem:[#allocation2] sm:$0x1]
        %3329 = vset.pattern.permute.xlu0 0
        %3330 = vperm.xlu0 %3329, %v3327
        %v3331 = vpop.permute.xlu0 %3330
        %v3333 = vlaneseq
        %v3334 = vshrl.u32 %v3333, 7
        %v3335 = vsub.s32 0, %v3334
        %v3336 = vrot.slane %v3331, %v3335
        %3337 = vmatprep.subr.mxu0 0.0
        %3338 = vmatpush1.xpose.msra.mxu0 %v3324
        %3339 = vmatprep.subr.mxu0 0.0
        %3340 = vmatpush1.xpose.msra.mxu0 %v3325
        %3341 = vmatprep.subr.mxu0 0.0
        %3342 = vmatpush1.xpose.msra.mxu0 0.0
        %3343 = vmatprep.subr.mxu0 0.0
        %3344 = vmatpush1.xpose.msra.mxu0 0.0
        %3345 = vmatprep.subr.mxu0 0.0
        %3346 = vmatpush1.xpose.msra.mxu0 0.0
        %3347 = vmatprep.subr.mxu0 0.0
        %3348 = vmatpush1.xpose.msra.mxu0 0.0
        %3349 = vmatprep.subr.mxu0 0.0
        %3350 = vmatpush1.xpose.msra.mxu0 0.0
        %3351 = vmatprep.subr.mxu0 0.0
        %3352 = vmatpush1.xpose.msra.mxu0 0.0
        %3353 = vmatprep.subr.mxu0 0.0
        %3354 = vmatpush1.xpose.msra.mxu0 0.0
        %3355 = vmatprep.subr.mxu0 0.0
        %3356 = vmatpush1.xpose.msra.mxu0 0.0
        %3357 = vmatprep.subr.mxu0 0.0
        %3358 = vmatpush1.xpose.msra.mxu0 0.0
        %3359 = vmatprep.subr.mxu0 0.0
        %3360 = vmatpush1.xpose.msra.mxu0 0.0
        %3361 = vmatprep.subr.mxu0 0.0
        %3362 = vmatpush1.xpose.msra.mxu0 0.0
        %3363 = vmatprep.subr.mxu0 0.0
        %3364 = vmatpush1.xpose.msra.mxu0 0.0
        %3365 = vmatprep.subr.mxu0 0.0
        %3366 = vmatpush1.xpose.msra.mxu0 0.0
        %3367 = vmatprep.subr.mxu0 0.0
        %3368 = vmatpush1.xpose.msra.mxu0 0.0
        %3369 = vmatprep.subr.mxu0 0.0
        %3370 = vmatpush1.xpose.msra.mxu0 0.0
        %3371 = vmatprep.subr.mxu0 0.0
        %3372 = vmatpush1.xpose.msra.mxu0 0.0
        %3373 = vmatprep.subr.mxu0 0.0
        %3374 = vmatpush1.xpose.msra.mxu0 0.0
        %3375 = vmatprep.subr.mxu0 0.0
        %3376 = vmatpush1.xpose.msra.mxu0 0.0
        %3377 = vmatprep.subr.mxu0 0.0
        %3378 = vmatpush1.xpose.msra.mxu0 0.0
        %3379 = vmatprep.subr.mxu0 0.0
        %3380 = vmatpush1.xpose.msra.mxu0 0.0
        %3381 = vmatprep.subr.mxu0 0.0
        %3382 = vmatpush1.xpose.msra.mxu0 0.0
        %3383 = vmatprep.subr.mxu0 0.0
        %3384 = vmatpush1.xpose.msra.mxu0 0.0
        %3385 = vmatprep.subr.mxu0 0.0
        %3386 = vmatpush1.xpose.msra.mxu0 0.0
        %3387 = vmatprep.subr.mxu0 0.0
        %3388 = vmatpush1.xpose.msra.mxu0 0.0
        %3389 = vmatprep.subr.mxu0 0.0
        %3390 = vmatpush1.xpose.msra.mxu0 0.0
        %3391 = vmatprep.subr.mxu0 0.0
        %3392 = vmatpush1.xpose.msra.mxu0 0.0
        %3393 = vmatprep.subr.mxu0 0.0
        %3394 = vmatpush1.xpose.msra.mxu0 0.0
        %3395 = vmatprep.subr.mxu0 0.0
        %3396 = vmatpush1.xpose.msra.mxu0 0.0
        %3397 = vmatprep.subr.mxu0 0.0
        %3398 = vmatpush1.xpose.msra.mxu0 0.0
        %3399 = vmatprep.subr.mxu0 0.0
        %3400 = vmatpush1.xpose.msra.mxu0 0.0
        %3401 = vmatprep.mubr.f32.mxu0 0.0
        %3402 = vmatmul.mubr.f32.gmra.mrb[0].mxu0 %v3326
        %v3403 = vpop.f32.mrb[0].mxu0
        %v3404 = vadd.f32 %v3336, %v3403
        %v3405 = vpop.f32.mrb[0].mxu0
        %3406 = vdwg.mxu0
        %v3407 = vxor.u32 %v3404, 2147483648
        %v3408 = vmul.f32 %v3407, 1.442695
        %v3409 = vpow.pop %v3408
        %v3410 = vadd.f32 %v3409, 1.0
        %v3411 = vrcp.pop %v3410
        %v3412 = vmul.f32 1.0, %v3411
        %vm3413 = vcmask 122880
        %3414 = vst.msk [vmem:[%s731] sm:$0x1] %vm3413, %v3412
        %3415 = vst [vmem:[%s738] sm:$0xff] %v2464
        %3416 = vst [vmem:[%s738 + $0x8] sm:$0xff] %v2465
        %3417 = vst [vmem:[%s738 + $0x10] sm:$0xff] %v2466
        %3418 = vst [vmem:[%s738 + $0x18] sm:$0xff] %v2467
        %3419 = vst [vmem:[%s745] sm:$0xff] %v2114
        %3420 = vst [vmem:[%s745 + $0x8] sm:$0xff] %v2115
        %3421 = vst [vmem:[%s745 + $0x10] sm:$0xff] %v2118
        %3422 = vst [vmem:[%s745 + $0x18] sm:$0xff] %v2119
        %s3423 = sand.u32 %s359, 1
        %s3424 = scalar_lea.sflag [#allocation5], %s3423
        %s3425 = sand.u32 %s359, 1
        %s3426 = scalar_lea.vmem [#allocation24], %s3425
        %s3427 = sand.u32 %s47, 1
        %s3428 = scalar_lea.sflag [#allocation26], %s3427
        %s3429 = sand.u32 %s385, 1
        %s3430 = smul.addr %s3429, 32
        %s3431 = scalar_lea.vmem [#allocation25], %s3430
        %s3432 = sand.u32 %s47, 1
        %s3433 = scalar_lea.sflag [#allocation26], %s3432
        %s3434 = sand.u32 %s411, 1
        %s3435 = smul.addr %s3434, 32
        %s3436 = scalar_lea.vmem [#allocation27], %s3435
        // Predicated region
        $region129: #{tpu_custom_call.1} parent=75 // pred_check
          %p3437 = pneg %p369
        $region130: #{tpu_custom_call.1} parent=75 // pred_check_branch
          %3439 = sbr.rel (%p3437) target = $region132
        $region131: #{tpu_custom_call.1} parent=75 // pred_region
          %s3441 = ssub.s32 16, 16
          %3442 = vsyncadd %s3424, %s3441
          %s3443 = smul.addr %s47, 16
          %s3444 = scalar_lea.hbm %s14, %s3443
          %s3446 = sshll.u32 %s3426, 4
          %s3447 = int_to_ptr.vmem [resolvable:$true] %s3446
          %3449 = dma.vmem_to_hbm [thread:$0]  %s3447, 16, %s3444, %s3424
        $region132: #{tpu_custom_call.1} parent=75 // pred_fallthru
          _
        // Predicated region
        $region133: #{tpu_custom_call.1} parent=75 // pred_check
          %p3450 = pneg %p395
        $region134: #{tpu_custom_call.1} parent=75 // pred_check_branch
          %3452 = sbr.rel (%p3450) target = $region136
        $region135: #{tpu_custom_call.1} parent=75 // pred_region
          %s3454 = ssub.s32 512, 512
          %3455 = vsyncadd %s3428, %s3454
          %s3456 = smul.addr %s47, 4
          %s3457 = smul.addr %s3456, 128
          %s3458 = scalar_lea.hbm %s15, %s3457
          %s3459 = sshll.u32 %s3431, 4
          %s3460 = int_to_ptr.vmem [resolvable:$true] %s3459
          %3465 = dma.vmem_to_hbm [thread:$0]  %s3460, 512, %s3458, %s3428, 256, 256, 16
        $region136: #{tpu_custom_call.1} parent=75 // pred_fallthru
          _
        // Predicated region
        $region137: #{tpu_custom_call.1} parent=75 // pred_check
          %p3466 = pneg %p421
        $region138: #{tpu_custom_call.1} parent=75 // pred_check_branch
          %3468 = sbr.rel (%p3466) target = $region140
        $region139: #{tpu_custom_call.1} parent=75 // pred_region
          %s3470 = ssub.s32 512, 512
          %3471 = vsyncadd %s3433, %s3470
          %s3472 = smul.addr %s47, 4
          %s3473 = smul.addr %s3472, 128
          %s3474 = scalar_lea.hbm %s16, %s3473
          %s3475 = sshll.u32 %s3436, 4
          %s3476 = int_to_ptr.vmem [resolvable:$true] %s3475
          %3481 = dma.vmem_to_hbm [thread:$0]  %s3476, 512, %s3474, %s3433, 256, 256, 16
        $region140: #{tpu_custom_call.1} parent=75 // pred_fallthru
          _
      $region76: #{tpu_custom_call.1} parent=5 // pred_fallthru
        _
      %p3482 = scmp.le.s32.totalorder 2, %s42
      // Predicated region
      $region141: #{tpu_custom_call.1} parent=5 // pred_check
        %p3483 = pneg %p3482
      $region142: #{tpu_custom_call.1} parent=5 // pred_check_branch
        %3485 = sbr.rel (%p3483) target = $region144
      $region143: #{tpu_custom_call.1} parent=5 // pred_region
        %s3486 = ssub.s32 %s42, 2
        // Predicated region
        $region145: #{tpu_custom_call.1} parent=143 // pred_check
          %p3487 = pneg %p375
        $region146: #{tpu_custom_call.1} parent=143 // pred_check_branch
          %3489 = sbr.rel (%p3487) target = $region148
        $region147: #{tpu_custom_call.1} parent=143 // pred_region
          %s3490 = sand.u32 %s360, 1
          %s3491 = scalar_lea.sflag [#allocation5], %s3490
          %s3492 = sand.u32 %s360, 1
          %s3493 = scalar_lea.vmem [#allocation24], %s3492
          %3494 = dma.done %s3491, 16
        $region148: #{tpu_custom_call.1} parent=143 // pred_fallthru
          _
        // Predicated region
        $region149: #{tpu_custom_call.1} parent=143 // pred_check
          %p3495 = pneg %p401
        $region150: #{tpu_custom_call.1} parent=143 // pred_check_branch
          %3497 = sbr.rel (%p3495) target = $region152
        $region151: #{tpu_custom_call.1} parent=143 // pred_region
          %s3498 = sand.u32 %s48, 1
          %s3499 = scalar_lea.sflag [#allocation26], %s3498
          %s3500 = sand.u32 %s386, 1
          %s3501 = smul.addr %s3500, 32
          %s3502 = scalar_lea.vmem [#allocation25], %s3501
          %3503 = dma.done %s3499, 512
        $region152: #{tpu_custom_call.1} parent=143 // pred_fallthru
          _
        // Predicated region
        $region153: #{tpu_custom_call.1} parent=143 // pred_check
          %p3504 = pneg %p427
        $region154: #{tpu_custom_call.1} parent=143 // pred_check_branch
          %3506 = sbr.rel (%p3504) target = $region156
        $region155: #{tpu_custom_call.1} parent=143 // pred_region
          %s3507 = sand.u32 %s48, 1
          %s3508 = scalar_lea.sflag [#allocation26], %s3507
          %s3509 = sand.u32 %s412, 1
          %s3510 = smul.addr %s3509, 32
          %s3511 = scalar_lea.vmem [#allocation27], %s3510
          %3512 = dma.done %s3508, 512
        $region156: #{tpu_custom_call.1} parent=143 // pred_fallthru
          _
      $region144: #{tpu_custom_call.1} parent=5 // pred_fallthru
        _
    $region6: #{tpu_custom_call.1} parent=1 // loop_footer
      %s46 = sadd.s32 1, %s42
    $region7: #{tpu_custom_call.1} parent=1 // loop_footer_branch
      %41 = sbr.rel target = $region3
    $region8: #{tpu_custom_call.1} parent=1 // loop_exit
      _
    %3513 = vsyncpa [#allocation4], 1
    %s3514 = scalar_lea.sflag [#allocation4], 1
    %3515 = vsyncpa %s3514, 1
    %3516 = vsyncpa [#allocation7], 1
    %s3517 = scalar_lea.sflag [#allocation7], 1
    %3518 = vsyncpa %s3517, 1
    %3519 = vsyncpa [#allocation10], 1
    %3520 = vsyncpa [#allocation13], 1
    %3521 = vsyncpa [#allocation16], 1
    %3522 = vsyncpa [#allocation19], 1
    %3523 = vsyncpa [#allocation22], 1
    %3524 = vsyncpa [#allocation5], 1
    %s3525 = scalar_lea.sflag [#allocation5], 1
    %3526 = vsyncpa %s3525, 1
    %3527 = vsyncpa [#allocation26], 1
    %s3528 = scalar_lea.sflag [#allocation26], 1
    %3529 = vsyncpa %s3528, 1

</llo_original>
